<compile_context>
chip_gen: v5e
topology: v5e:2x2
jax: 0.10.0
libtpu: 0.0.40
codegen_flags: <defaults>
</compile_context>

<pallas_src>
import math

import jax
import jax.numpy as jnp
from jax.experimental import pallas as pl
from jax.experimental.pallas import tpu as pltpu

# ---- model dimensions (small, consistent with the module's forward) ----
B = 2            # batch
S = 8            # sequence length == args.max_seq_len
H = 32           # transformer_config.hidden_size
NH = 4           # attention heads
DH = H // NH     # head dim
FF = 64          # FFN intermediate size
NL = 2           # encoder layers
NUM_LABELS = 3   # args.num_labels
VOCAB = 50

_LN_EPS = 1e-12
_SCALE = 1.0 / math.sqrt(DH)


def _ln(x, g, b):
    mu = jnp.mean(x, axis=-1, keepdims=True)
    var = jnp.mean((x - mu) ** 2, axis=-1, keepdims=True)
    return (x - mu) * jax.lax.rsqrt(var + _LN_EPS) * g + b


def _gelu(x):
    # TODO(synk): HF BERT default is the exact erf-GELU; tanh approximation used here.
    return 0.5 * x * (1.0 + jnp.tanh(0.7978845608028654 * (x + 0.044715 * x * x * x)))


# --------------------------- fused Pallas kernel ------------------------------

def fused_forward_kernel(
        emb_ref, maskb_ref, emb_g_ref, emb_b_ref,
        wqkv_ref, bqkv_ref, wo_ref, bo_ref, ln1_g_ref, ln1_b_ref,
        w1_ref, b1_ref, w2_ref, b2_ref, ln2_g_ref, ln2_b_ref,
        wh1_ref, bh1_ref, wh2_ref, bh2_ref,
        predict_ref, attn0_ref, attn1_ref,
        ctx_sc):
    """Entire TransformerBase forward in one kernel invocation."""
    attn_refs = [attn0_ref, attn1_ref]          # static: NL == 2

    # ---- embedding LayerNorm; keep activations flattened to [B*S, H] ----
    x = _ln(emb_ref[...], emb_g_ref[...], emb_b_ref[...]).reshape(B * S, H)
    mask_bias = maskb_ref[...]                  # [B, 1, S] additive bias over keys

    for l in range(NL):                         # static unroll over layers
        # ---- attention: single fused QKV matmul (wq|wk|wv merged to [H, 3H]) ----
        qkv = (jnp.dot(x, wqkv_ref[l], preferred_element_type=jnp.float32)
               + bqkv_ref[l])                   # [B*S, 3H]

        for h in range(NH):                     # static unroll over heads
            qh = qkv[:, 0 * H + h * DH:0 * H + (h + 1) * DH].reshape(B, S, DH)
            kh = qkv[:, 1 * H + h * DH:1 * H + (h + 1) * DH].reshape(B, S, DH)
            vh = qkv[:, 2 * H + h * DH:2 * H + (h + 1) * DH].reshape(B, S, DH)

            # QK^T without explicit transpose: contract last dims of both operands.
            s = jnp.einsum('bqd,bkd->bqk', qh, kh,
                           preferred_element_type=jnp.float32) * _SCALE
            s = s + mask_bias                   # broadcast over query positions
            s = s - jnp.max(s, axis=-1, keepdims=True)
            e = jnp.exp(s)
            p = e * pl.reciprocal(jnp.sum(e, axis=-1, keepdims=True), approx=True)
            attn_refs[l][:, h, :, :] = p        # softmax probs [B, S, S]

            ctx_h = jnp.einsum('bqk,bkd->bqd', p, vh,
                               preferred_element_type=jnp.float32)   # [B, S, DH]
            # lay heads contiguously so Wo is a single matmul
            ctx_sc[:, h * DH:(h + 1) * DH] = ctx_h.reshape(B * S, DH)

        attn_out = (jnp.dot(ctx_sc[...], wo_ref[l],
                            preferred_element_type=jnp.float32) + bo_ref[l])
        x = _ln(x + attn_out, ln1_g_ref[l], ln1_b_ref[l])

        # ---- feed-forward ----
        h1 = _gelu(jnp.dot(x, w1_ref[l], preferred_element_type=jnp.float32)
                   + b1_ref[l])
        h2 = jnp.dot(h1, w2_ref[l], preferred_element_type=jnp.float32) + b2_ref[l]
        x = _ln(x + h2, ln2_g_ref[l], ln2_b_ref[l])

    # ---- mean-pool over seq + classification head ----
    # TODO(synk): Dropout(p=0.1) is identity in eval mode; training-mode dropout omitted.
    pooled = jnp.mean(x.reshape(B, S, H), axis=1)                     # [B, H]
    hh = jnp.tanh(jnp.dot(pooled, wh1_ref[...],
                          preferred_element_type=jnp.float32) + bh1_ref[...])
    predict_ref[...] = (jnp.dot(hh, wh2_ref[...],
                                preferred_element_type=jnp.float32) + bh2_ref[...])


# --------------------------- pallas_call wrapper ------------------------------

def _full_spec(a):
    nd = a.ndim
    return pl.BlockSpec(a.shape, lambda i, _nd=nd: (0,) * _nd)


def transformer_forward_call(emb, mask_bias, p):
    args = (emb, mask_bias, p["emb_g"], p["emb_b"],
            p["wqkv"], p["bqkv"], p["wo"], p["bo"], p["ln1_g"], p["ln1_b"],
            p["w1"], p["b1"], p["w2"], p["b2"], p["ln2_g"], p["ln2_b"],
            p["wh1"], p["bh1"], p["wh2"], p["bh2"])
    out_shape = (jax.ShapeDtypeStruct((B, NUM_LABELS), jnp.float32),
                 jax.ShapeDtypeStruct((B, NH, S, S), jnp.float32),
                 jax.ShapeDtypeStruct((B, NH, S, S), jnp.float32))
    out_specs = (pl.BlockSpec((B, NUM_LABELS), lambda i: (0, 0)),
                 pl.BlockSpec((B, NH, S, S), lambda i: (0, 0, 0, 0)),
                 pl.BlockSpec((B, NH, S, S), lambda i: (0, 0, 0, 0)))
    return pl.pallas_call(
        fused_forward_kernel,
        out_shape=out_shape,
        grid=(1,),                                   # single step: no per-batch grid
        in_specs=[_full_spec(a) for a in args],
        out_specs=out_specs,
        scratch_shapes=[pltpu.VMEM((B * S, H), jnp.float32)],   # concatenated head ctx
        compiler_params=pltpu.CompilerParams(dimension_semantics=("arbitrary",)),
    )(*args)


# --------------------------- parameters & forward -----------------------------

def init_params(key):
    def dense(k, shape, scale=0.02):
        return scale * jax.random.normal(k, shape, dtype=jnp.float32)

    ks = iter(jax.random.split(key, 32))
    return {
        "word_emb": dense(next(ks), (VOCAB, H)),
        "pos_emb": dense(next(ks), (S, H)),
        "emb_g": jnp.ones((1, H), jnp.float32),
        "emb_b": jnp.zeros((1, H), jnp.float32),
        # per-layer weights stacked along a leading NL axis
        "wqkv": dense(next(ks), (NL, H, 3 * H)),
        "bqkv": jnp.zeros((NL, 1, 3 * H), jnp.float32),
        "wo": dense(next(ks), (NL, H, H)),
        "bo": jnp.zeros((NL, 1, H), jnp.float32),
        "ln1_g": jnp.ones((NL, 1, H), jnp.float32),
        "ln1_b": jnp.zeros((NL, 1, H), jnp.float32),
        "w1": dense(next(ks), (NL, H, FF)),
        "b1": jnp.zeros((NL, 1, FF), jnp.float32),
        "w2": dense(next(ks), (NL, FF, H)),
        "b2": jnp.zeros((NL, 1, H), jnp.float32),
        "ln2_g": jnp.ones((NL, 1, H), jnp.float32),
        "ln2_b": jnp.zeros((NL, 1, H), jnp.float32),
        # classification head: Linear(H, S) -> Tanh -> Linear(S, NUM_LABELS)
        "wh1": dense(next(ks), (H, S)),
        "bh1": jnp.zeros((1, S), jnp.float32),
        "wh2": dense(next(ks), (S, NUM_LABELS)),
        "bh2": jnp.zeros((1, NUM_LABELS), jnp.float32),
    }


@jax.jit
def transformer_base_forward(params, input_ids, attention_mask):
    # embedding gather + positional add stay in plain JAX (no clean Pallas gather here)
    emb = params["word_emb"][input_ids] + params["pos_emb"][None, :, :]
    mask_bias = ((1.0 - attention_mask.astype(jnp.float32)) * -1e9).reshape(B, 1, S)
    predict, attn0, attn1 = transformer_forward_call(emb, mask_bias, params)
    return predict, (attn0, attn1)


if __name__ == "__main__":
    key = jax.random.PRNGKey(0)
    k_ids, k_params = jax.random.split(key)

    input_ids = jax.random.randint(k_ids, (B, S), 0, VOCAB, dtype=jnp.int32)
    attention_mask = jnp.ones((B, S), dtype=jnp.int32).at[1, 6:].set(0)  # pad tail of sample 1

    params = init_params(k_params)
    predict, attentions = transformer_base_forward(params, input_ids, attention_mask)

    jax.block_until_ready(predict)
    jax.block_until_ready(attentions)

    assert predict.shape == (B, NUM_LABELS)
    assert len(attentions) == NL and attentions[0].shape == (B, NH, S, S)
    print("KERNEL_OK")
</pallas_src>

<mosaic_0001>
module attributes {stable_mosaic.version = 11 : i64} {
  func.func @fused_forward_kernel(%arg0: i32, %arg1: memref<2x8x32xf32, #tpu.memory_space<vmem>>, %arg2: memref<2x1x8xf32, #tpu.memory_space<vmem>>, %arg3: memref<1x32xf32, #tpu.memory_space<vmem>>, %arg4: memref<1x32xf32, #tpu.memory_space<vmem>>, %arg5: memref<2x32x96xf32, #tpu.memory_space<vmem>>, %arg6: memref<2x1x96xf32, #tpu.memory_space<vmem>>, %arg7: memref<2x32x32xf32, #tpu.memory_space<vmem>>, %arg8: memref<2x1x32xf32, #tpu.memory_space<vmem>>, %arg9: memref<2x1x32xf32, #tpu.memory_space<vmem>>, %arg10: memref<2x1x32xf32, #tpu.memory_space<vmem>>, %arg11: memref<2x32x64xf32, #tpu.memory_space<vmem>>, %arg12: memref<2x1x64xf32, #tpu.memory_space<vmem>>, %arg13: memref<2x64x32xf32, #tpu.memory_space<vmem>>, %arg14: memref<2x1x32xf32, #tpu.memory_space<vmem>>, %arg15: memref<2x1x32xf32, #tpu.memory_space<vmem>>, %arg16: memref<2x1x32xf32, #tpu.memory_space<vmem>>, %arg17: memref<32x8xf32, #tpu.memory_space<vmem>>, %arg18: memref<1x8xf32, #tpu.memory_space<vmem>>, %arg19: memref<8x3xf32, #tpu.memory_space<vmem>>, %arg20: memref<1x3xf32, #tpu.memory_space<vmem>>, %arg21: memref<2x3xf32, #tpu.memory_space<vmem>>, %arg22: memref<2x4x8x8xf32, #tpu.memory_space<vmem>>, %arg23: memref<2x4x8x8xf32, #tpu.memory_space<vmem>>, %arg24: memref<16x32xf32, #tpu.memory_space<vmem>>) attributes {dimension_semantics = [#tpu.dimension_semantics<arbitrary>], iteration_bounds = array<i64: 1>, scalar_prefetch = 0 : i64, scratch_operands = 1 : i64, tpu.core_type = #tpu.core_type<tc>, window_params = [{pipeline_mode = #tpu.pipeline_mode<synchronous>, transform_indices = @transform_0, window_bounds = array<i64: 2, 8, 32>}, {pipeline_mode = #tpu.pipeline_mode<synchronous>, transform_indices = @transform_1, window_bounds = array<i64: 2, 1, 8>}, {pipeline_mode = #tpu.pipeline_mode<synchronous>, transform_indices = @transform_2, window_bounds = array<i64: 1, 32>}, {pipeline_mode = #tpu.pipeline_mode<synchronous>, transform_indices = @transform_3, window_bounds = array<i64: 1, 32>}, {pipeline_mode = #tpu.pipeline_mode<synchronous>, transform_indices = @transform_4, window_bounds = array<i64: 2, 32, 96>}, {pipeline_mode = #tpu.pipeline_mode<synchronous>, transform_indices = @transform_5, window_bounds = array<i64: 2, 1, 96>}, {pipeline_mode = #tpu.pipeline_mode<synchronous>, transform_indices = @transform_6, window_bounds = array<i64: 2, 32, 32>}, {pipeline_mode = #tpu.pipeline_mode<synchronous>, transform_indices = @transform_7, window_bounds = array<i64: 2, 1, 32>}, {pipeline_mode = #tpu.pipeline_mode<synchronous>, transform_indices = @transform_8, window_bounds = array<i64: 2, 1, 32>}, {pipeline_mode = #tpu.pipeline_mode<synchronous>, transform_indices = @transform_9, window_bounds = array<i64: 2, 1, 32>}, {pipeline_mode = #tpu.pipeline_mode<synchronous>, transform_indices = @transform_10, window_bounds = array<i64: 2, 32, 64>}, {pipeline_mode = #tpu.pipeline_mode<synchronous>, transform_indices = @transform_11, window_bounds = array<i64: 2, 1, 64>}, {pipeline_mode = #tpu.pipeline_mode<synchronous>, transform_indices = @transform_12, window_bounds = array<i64: 2, 64, 32>}, {pipeline_mode = #tpu.pipeline_mode<synchronous>, transform_indices = @transform_13, window_bounds = array<i64: 2, 1, 32>}, {pipeline_mode = #tpu.pipeline_mode<synchronous>, transform_indices = @transform_14, window_bounds = array<i64: 2, 1, 32>}, {pipeline_mode = #tpu.pipeline_mode<synchronous>, transform_indices = @transform_15, window_bounds = array<i64: 2, 1, 32>}, {pipeline_mode = #tpu.pipeline_mode<synchronous>, transform_indices = @transform_16, window_bounds = array<i64: 32, 8>}, {pipeline_mode = #tpu.pipeline_mode<synchronous>, transform_indices = @transform_17, window_bounds = array<i64: 1, 8>}, {pipeline_mode = #tpu.pipeline_mode<synchronous>, transform_indices = @transform_18, window_bounds = array<i64: 8, 3>}, {pipeline_mode = #tpu.pipeline_mode<synchronous>, transform_indices = @transform_19, window_bounds = array<i64: 1, 3>}, {pipeline_mode = #tpu.pipeline_mode<synchronous>, transform_indices = @transform_20, window_bounds = array<i64: 2, 3>}, {pipeline_mode = #tpu.pipeline_mode<synchronous>, transform_indices = @transform_21, window_bounds = array<i64: 2, 4, 8, 8>}, {pipeline_mode = #tpu.pipeline_mode<synchronous>, transform_indices = @transform_22, window_bounds = array<i64: 2, 4, 8, 8>}]} {
    %c0 = arith.constant 0 : index
    %c0_0 = arith.constant 0 : index
    %c0_1 = arith.constant 0 : index
    %0 = vector.load %arg1[%c0, %c0_0, %c0_1] : memref<2x8x32xf32, #tpu.memory_space<vmem>>, vector<2x8x32xf32>
    %c0_2 = arith.constant 0 : index
    %c0_3 = arith.constant 0 : index
    %1 = vector.load %arg3[%c0_2, %c0_3] : memref<1x32xf32, #tpu.memory_space<vmem>>, vector<1x32xf32>
    %c0_4 = arith.constant 0 : index
    %c0_5 = arith.constant 0 : index
    %2 = vector.load %arg4[%c0_4, %c0_5] : memref<1x32xf32, #tpu.memory_space<vmem>>, vector<1x32xf32>
    %cst = arith.constant dense<0.000000e+00> : vector<2x8xf32>
    %3 = vector.multi_reduction <add>, %0, %cst [2] : vector<2x8x32xf32> to vector<2x8xf32>
    %4 = vector.shape_cast %3 : vector<2x8xf32> to vector<2x8x1xf32>
    %cst_6 = arith.constant 3.200000e+01 : f32
    %5 = vector.broadcast %cst_6 : f32 to vector<2x8x1xf32>
    %6 = arith.divf %4, %5 : vector<2x8x1xf32>
    %7 = vector.broadcast %6 : vector<2x8x1xf32> to vector<2x8x32xf32>
    %8 = arith.subf %0, %7 : vector<2x8x32xf32>
    %9 = arith.mulf %8, %8 : vector<2x8x32xf32>
    %cst_7 = arith.constant dense<0.000000e+00> : vector<2x8xf32>
    %10 = vector.multi_reduction <add>, %9, %cst_7 [2] : vector<2x8x32xf32> to vector<2x8xf32>
    %11 = vector.shape_cast %10 : vector<2x8xf32> to vector<2x8x1xf32>
    %cst_8 = arith.constant 3.200000e+01 : f32
    %12 = vector.broadcast %cst_8 : f32 to vector<2x8x1xf32>
    %13 = arith.divf %11, %12 : vector<2x8x1xf32>
    %14 = vector.broadcast %6 : vector<2x8x1xf32> to vector<2x8x32xf32>
    %15 = arith.subf %0, %14 : vector<2x8x32xf32>
    %cst_9 = arith.constant 9.99999996E-13 : f32
    %16 = vector.broadcast %cst_9 : f32 to vector<2x8x1xf32>
    %17 = arith.addf %13, %16 : vector<2x8x1xf32>
    %18 = math.rsqrt %17 : vector<2x8x1xf32>
    %19 = vector.broadcast %18 : vector<2x8x1xf32> to vector<2x8x32xf32>
    %20 = arith.mulf %15, %19 : vector<2x8x32xf32>
    %21 = vector.shape_cast %1 : vector<1x32xf32> to vector<1x1x32xf32>
    %22 = vector.broadcast %21 : vector<1x1x32xf32> to vector<2x8x32xf32>
    %23 = arith.mulf %20, %22 : vector<2x8x32xf32>
    %24 = vector.shape_cast %2 : vector<1x32xf32> to vector<1x1x32xf32>
    %25 = vector.broadcast %24 : vector<1x1x32xf32> to vector<2x8x32xf32>
    %26 = arith.addf %23, %25 : vector<2x8x32xf32>
    %27 = vector.shape_cast %26 : vector<2x8x32xf32> to vector<16x32xf32>
    %c0_10 = arith.constant 0 : index
    %c0_11 = arith.constant 0 : index
    %c0_12 = arith.constant 0 : index
    %28 = vector.load %arg2[%c0_10, %c0_11, %c0_12] : memref<2x1x8xf32, #tpu.memory_space<vmem>>, vector<2x1x8xf32>
    %c0_13 = arith.constant 0 : index
    %c0_14 = arith.constant 0 : index
    %c0_15 = arith.constant 0 : index
    %29 = vector.load %arg5[%c0_13, %c0_14, %c0_15] : memref<2x32x96xf32, #tpu.memory_space<vmem>>, vector<1x32x96xf32>
    %30 = vector.shape_cast %29 : vector<1x32x96xf32> to vector<32x96xf32>
    %cst_16 = arith.constant dense<0.000000e+00> : vector<16x96xf32>
    %31 = tpu.matmul %27, %30, %cst_16 {dimension_numbers = #tpu.dot_dimension_numbers<[1], [0], [0], [1], [0, 0, 1, 1], [], []>} : vector<16x32xf32>, vector<32x96xf32>, vector<16x96xf32> -> vector<16x96xf32>
    %c0_17 = arith.constant 0 : index
    %c0_18 = arith.constant 0 : index
    %c0_19 = arith.constant 0 : index
    %32 = vector.load %arg6[%c0_17, %c0_18, %c0_19] : memref<2x1x96xf32, #tpu.memory_space<vmem>>, vector<1x1x96xf32>
    %33 = vector.shape_cast %32 : vector<1x1x96xf32> to vector<1x96xf32>
    %34 = vector.broadcast %33 : vector<1x96xf32> to vector<16x96xf32>
    %35 = arith.addf %31, %34 : vector<16x96xf32>
    %36 = vector.extract_strided_slice %35 {offsets = [0, 0], sizes = [16, 8], strides = [1, 1]} : vector<16x96xf32> to vector<16x8xf32>
    %37 = vector.shape_cast %36 : vector<16x8xf32> to vector<2x8x8xf32>
    %38 = vector.extract_strided_slice %35 {offsets = [0, 32], sizes = [16, 8], strides = [1, 1]} : vector<16x96xf32> to vector<16x8xf32>
    %39 = vector.shape_cast %38 : vector<16x8xf32> to vector<2x8x8xf32>
    %40 = vector.extract_strided_slice %35 {offsets = [0, 64], sizes = [16, 8], strides = [1, 1]} : vector<16x96xf32> to vector<16x8xf32>
    %41 = vector.shape_cast %40 : vector<16x8xf32> to vector<2x8x8xf32>
    "tpu.trace_start"() <{level = 10 : i32, message = "bqd,bkd->bqk"}> : () -> ()
    %cst_20 = arith.constant dense<0.000000e+00> : vector<2x8x8xf32>
    %42 = tpu.matmul %37, %39, %cst_20 {dimension_numbers = #tpu.dot_dimension_numbers<[2], [2], [1], [1], [0, 0, 0, 1, 1, 1], [0], [0]>} : vector<2x8x8xf32>, vector<2x8x8xf32>, vector<2x8x8xf32> -> vector<2x8x8xf32>
    "tpu.trace_stop"() : () -> ()
    %cst_21 = arith.constant 0.353553385 : f32
    %43 = vector.broadcast %cst_21 : f32 to vector<2x8x8xf32>
    %44 = arith.mulf %42, %43 : vector<2x8x8xf32>
    %45 = vector.broadcast %28 : vector<2x1x8xf32> to vector<2x8x8xf32>
    %46 = arith.addf %44, %45 : vector<2x8x8xf32>
    %cst_22 = arith.constant dense<0xFF800000> : vector<2x8xf32>
    %47 = vector.multi_reduction <maximumf>, %46, %cst_22 [2] : vector<2x8x8xf32> to vector<2x8xf32>
    %48 = vector.shape_cast %47 : vector<2x8xf32> to vector<2x8x1xf32>
    %49 = vector.broadcast %48 : vector<2x8x1xf32> to vector<2x8x8xf32>
    %50 = arith.subf %46, %49 : vector<2x8x8xf32>
    %51 = math.exp %50 : vector<2x8x8xf32>
    %cst_23 = arith.constant dense<0.000000e+00> : vector<2x8xf32>
    %52 = vector.multi_reduction <add>, %51, %cst_23 [2] : vector<2x8x8xf32> to vector<2x8xf32>
    %53 = vector.shape_cast %52 : vector<2x8xf32> to vector<2x8x1xf32>
    %54 = tpu.reciprocal %53 {approx = true} : vector<2x8x1xf32> -> vector<2x8x1xf32>
    %55 = vector.broadcast %54 : vector<2x8x1xf32> to vector<2x8x8xf32>
    %56 = arith.mulf %51, %55 : vector<2x8x8xf32>
    %c0_24 = arith.constant 0 : index
    %c0_25 = arith.constant 0 : index
    %c0_26 = arith.constant 0 : index
    %c0_27 = arith.constant 0 : index
    %57 = vector.load %arg22[%c0_24, %c0_25, %c0_26, %c0_27] : memref<2x4x8x8xf32, #tpu.memory_space<vmem>>, vector<2x1x8x8xf32>
    %58 = vector.shape_cast %57 : vector<2x1x8x8xf32> to vector<2x8x8xf32>
    %59 = vector.shape_cast %56 : vector<2x8x8xf32> to vector<2x1x8x8xf32>
    tpu.vector_store %arg22[%c0_24, %c0_25, %c0_26, %c0_27], %59 {strides = array<i32>} : memref<2x4x8x8xf32, #tpu.memory_space<vmem>>, vector<2x1x8x8xf32>,
    "tpu.trace_start"() <{level = 10 : i32, message = "bqk,bkd->bqd"}> : () -> ()
    %cst_28 = arith.constant dense<0.000000e+00> : vector<2x8x8xf32>
    %60 = tpu.matmul %56, %41, %cst_28 {dimension_numbers = #tpu.dot_dimension_numbers<[2], [1], [1], [2], [0, 0, 0, 1, 1, 2], [0], [0]>} : vector<2x8x8xf32>, vector<2x8x8xf32>, vector<2x8x8xf32> -> vector<2x8x8xf32>
    "tpu.trace_stop"() : () -> ()
    %61 = vector.shape_cast %60 : vector<2x8x8xf32> to vector<16x8xf32>
    %c0_29 = arith.constant 0 : index
    %c0_30 = arith.constant 0 : index
    %62 = vector.load %arg24[%c0_29, %c0_30] : memref<16x32xf32, #tpu.memory_space<vmem>>, vector<16x8xf32>
    tpu.vector_store %arg24[%c0_29, %c0_30], %61 {strides = array<i32>} : memref<16x32xf32, #tpu.memory_space<vmem>>, vector<16x8xf32>,
    %63 = vector.extract_strided_slice %35 {offsets = [0, 8], sizes = [16, 8], strides = [1, 1]} : vector<16x96xf32> to vector<16x8xf32>
    %64 = vector.shape_cast %63 : vector<16x8xf32> to vector<2x8x8xf32>
    %65 = vector.extract_strided_slice %35 {offsets = [0, 40], sizes = [16, 8], strides = [1, 1]} : vector<16x96xf32> to vector<16x8xf32>
    %66 = vector.shape_cast %65 : vector<16x8xf32> to vector<2x8x8xf32>
    %67 = vector.extract_strided_slice %35 {offsets = [0, 72], sizes = [16, 8], strides = [1, 1]} : vector<16x96xf32> to vector<16x8xf32>
    %68 = vector.shape_cast %67 : vector<16x8xf32> to vector<2x8x8xf32>
    "tpu.trace_start"() <{level = 10 : i32, message = "bqd,bkd->bqk"}> : () -> ()
    %cst_31 = arith.constant dense<0.000000e+00> : vector<2x8x8xf32>
    %69 = tpu.matmul %64, %66, %cst_31 {dimension_numbers = #tpu.dot_dimension_numbers<[2], [2], [1], [1], [0, 0, 0, 1, 1, 1], [0], [0]>} : vector<2x8x8xf32>, vector<2x8x8xf32>, vector<2x8x8xf32> -> vector<2x8x8xf32>
    "tpu.trace_stop"() : () -> ()
    %cst_32 = arith.constant 0.353553385 : f32
    %70 = vector.broadcast %cst_32 : f32 to vector<2x8x8xf32>
    %71 = arith.mulf %69, %70 : vector<2x8x8xf32>
    %72 = vector.broadcast %28 : vector<2x1x8xf32> to vector<2x8x8xf32>
    %73 = arith.addf %71, %72 : vector<2x8x8xf32>
    %cst_33 = arith.constant dense<0xFF800000> : vector<2x8xf32>
    %74 = vector.multi_reduction <maximumf>, %73, %cst_33 [2] : vector<2x8x8xf32> to vector<2x8xf32>
    %75 = vector.shape_cast %74 : vector<2x8xf32> to vector<2x8x1xf32>
    %76 = vector.broadcast %75 : vector<2x8x1xf32> to vector<2x8x8xf32>
    %77 = arith.subf %73, %76 : vector<2x8x8xf32>
    %78 = math.exp %77 : vector<2x8x8xf32>
    %cst_34 = arith.constant dense<0.000000e+00> : vector<2x8xf32>
    %79 = vector.multi_reduction <add>, %78, %cst_34 [2] : vector<2x8x8xf32> to vector<2x8xf32>
    %80 = vector.shape_cast %79 : vector<2x8xf32> to vector<2x8x1xf32>
    %81 = tpu.reciprocal %80 {approx = true} : vector<2x8x1xf32> -> vector<2x8x1xf32>
    %82 = vector.broadcast %81 : vector<2x8x1xf32> to vector<2x8x8xf32>
    %83 = arith.mulf %78, %82 : vector<2x8x8xf32>
    %c0_35 = arith.constant 0 : index
    %c1 = arith.constant 1 : index
    %c0_36 = arith.constant 0 : index
    %c0_37 = arith.constant 0 : index
    %84 = vector.load %arg22[%c0_35, %c1, %c0_36, %c0_37] : memref<2x4x8x8xf32, #tpu.memory_space<vmem>>, vector<2x1x8x8xf32>
    %85 = vector.shape_cast %84 : vector<2x1x8x8xf32> to vector<2x8x8xf32>
    %86 = vector.shape_cast %83 : vector<2x8x8xf32> to vector<2x1x8x8xf32>
    tpu.vector_store %arg22[%c0_35, %c1, %c0_36, %c0_37], %86 {strides = array<i32>} : memref<2x4x8x8xf32, #tpu.memory_space<vmem>>, vector<2x1x8x8xf32>,
    "tpu.trace_start"() <{level = 10 : i32, message = "bqk,bkd->bqd"}> : () -> ()
    %cst_38 = arith.constant dense<0.000000e+00> : vector<2x8x8xf32>
    %87 = tpu.matmul %83, %68, %cst_38 {dimension_numbers = #tpu.dot_dimension_numbers<[2], [1], [1], [2], [0, 0, 0, 1, 1, 2], [0], [0]>} : vector<2x8x8xf32>, vector<2x8x8xf32>, vector<2x8x8xf32> -> vector<2x8x8xf32>
    "tpu.trace_stop"() : () -> ()
    %88 = vector.shape_cast %87 : vector<2x8x8xf32> to vector<16x8xf32>
    %c0_39 = arith.constant 0 : index
    %c8 = arith.constant 8 : index
    %89 = vector.load %arg24[%c0_39, %c8] : memref<16x32xf32, #tpu.memory_space<vmem>>, vector<16x8xf32>
    tpu.vector_store %arg24[%c0_39, %c8], %88 {strides = array<i32>} : memref<16x32xf32, #tpu.memory_space<vmem>>, vector<16x8xf32>,
    %90 = vector.extract_strided_slice %35 {offsets = [0, 16], sizes = [16, 8], strides = [1, 1]} : vector<16x96xf32> to vector<16x8xf32>
    %91 = vector.shape_cast %90 : vector<16x8xf32> to vector<2x8x8xf32>
    %92 = vector.extract_strided_slice %35 {offsets = [0, 48], sizes = [16, 8], strides = [1, 1]} : vector<16x96xf32> to vector<16x8xf32>
    %93 = vector.shape_cast %92 : vector<16x8xf32> to vector<2x8x8xf32>
    %94 = vector.extract_strided_slice %35 {offsets = [0, 80], sizes = [16, 8], strides = [1, 1]} : vector<16x96xf32> to vector<16x8xf32>
    %95 = vector.shape_cast %94 : vector<16x8xf32> to vector<2x8x8xf32>
    "tpu.trace_start"() <{level = 10 : i32, message = "bqd,bkd->bqk"}> : () -> ()
    %cst_40 = arith.constant dense<0.000000e+00> : vector<2x8x8xf32>
    %96 = tpu.matmul %91, %93, %cst_40 {dimension_numbers = #tpu.dot_dimension_numbers<[2], [2], [1], [1], [0, 0, 0, 1, 1, 1], [0], [0]>} : vector<2x8x8xf32>, vector<2x8x8xf32>, vector<2x8x8xf32> -> vector<2x8x8xf32>
    "tpu.trace_stop"() : () -> ()
    %cst_41 = arith.constant 0.353553385 : f32
    %97 = vector.broadcast %cst_41 : f32 to vector<2x8x8xf32>
    %98 = arith.mulf %96, %97 : vector<2x8x8xf32>
    %99 = vector.broadcast %28 : vector<2x1x8xf32> to vector<2x8x8xf32>
    %100 = arith.addf %98, %99 : vector<2x8x8xf32>
    %cst_42 = arith.constant dense<0xFF800000> : vector<2x8xf32>
    %101 = vector.multi_reduction <maximumf>, %100, %cst_42 [2] : vector<2x8x8xf32> to vector<2x8xf32>
    %102 = vector.shape_cast %101 : vector<2x8xf32> to vector<2x8x1xf32>
    %103 = vector.broadcast %102 : vector<2x8x1xf32> to vector<2x8x8xf32>
    %104 = arith.subf %100, %103 : vector<2x8x8xf32>
    %105 = math.exp %104 : vector<2x8x8xf32>
    %cst_43 = arith.constant dense<0.000000e+00> : vector<2x8xf32>
    %106 = vector.multi_reduction <add>, %105, %cst_43 [2] : vector<2x8x8xf32> to vector<2x8xf32>
    %107 = vector.shape_cast %106 : vector<2x8xf32> to vector<2x8x1xf32>
    %108 = tpu.reciprocal %107 {approx = true} : vector<2x8x1xf32> -> vector<2x8x1xf32>
    %109 = vector.broadcast %108 : vector<2x8x1xf32> to vector<2x8x8xf32>
    %110 = arith.mulf %105, %109 : vector<2x8x8xf32>
    %c0_44 = arith.constant 0 : index
    %c2 = arith.constant 2 : index
    %c0_45 = arith.constant 0 : index
    %c0_46 = arith.constant 0 : index
    %111 = vector.load %arg22[%c0_44, %c2, %c0_45, %c0_46] : memref<2x4x8x8xf32, #tpu.memory_space<vmem>>, vector<2x1x8x8xf32>
    %112 = vector.shape_cast %111 : vector<2x1x8x8xf32> to vector<2x8x8xf32>
    %113 = vector.shape_cast %110 : vector<2x8x8xf32> to vector<2x1x8x8xf32>
    tpu.vector_store %arg22[%c0_44, %c2, %c0_45, %c0_46], %113 {strides = array<i32>} : memref<2x4x8x8xf32, #tpu.memory_space<vmem>>, vector<2x1x8x8xf32>,
    "tpu.trace_start"() <{level = 10 : i32, message = "bqk,bkd->bqd"}> : () -> ()
    %cst_47 = arith.constant dense<0.000000e+00> : vector<2x8x8xf32>
    %114 = tpu.matmul %110, %95, %cst_47 {dimension_numbers = #tpu.dot_dimension_numbers<[2], [1], [1], [2], [0, 0, 0, 1, 1, 2], [0], [0]>} : vector<2x8x8xf32>, vector<2x8x8xf32>, vector<2x8x8xf32> -> vector<2x8x8xf32>
    "tpu.trace_stop"() : () -> ()
    %115 = vector.shape_cast %114 : vector<2x8x8xf32> to vector<16x8xf32>
    %c0_48 = arith.constant 0 : index
    %c16 = arith.constant 16 : index
    %116 = vector.load %arg24[%c0_48, %c16] : memref<16x32xf32, #tpu.memory_space<vmem>>, vector<16x8xf32>
    tpu.vector_store %arg24[%c0_48, %c16], %115 {strides = array<i32>} : memref<16x32xf32, #tpu.memory_space<vmem>>, vector<16x8xf32>,
    %117 = vector.extract_strided_slice %35 {offsets = [0, 24], sizes = [16, 8], strides = [1, 1]} : vector<16x96xf32> to vector<16x8xf32>
    %118 = vector.shape_cast %117 : vector<16x8xf32> to vector<2x8x8xf32>
    %119 = vector.extract_strided_slice %35 {offsets = [0, 56], sizes = [16, 8], strides = [1, 1]} : vector<16x96xf32> to vector<16x8xf32>
    %120 = vector.shape_cast %119 : vector<16x8xf32> to vector<2x8x8xf32>
    %121 = vector.extract_strided_slice %35 {offsets = [0, 88], sizes = [16, 8], strides = [1, 1]} : vector<16x96xf32> to vector<16x8xf32>
    %122 = vector.shape_cast %121 : vector<16x8xf32> to vector<2x8x8xf32>
    "tpu.trace_start"() <{level = 10 : i32, message = "bqd,bkd->bqk"}> : () -> ()
    %cst_49 = arith.constant dense<0.000000e+00> : vector<2x8x8xf32>
    %123 = tpu.matmul %118, %120, %cst_49 {dimension_numbers = #tpu.dot_dimension_numbers<[2], [2], [1], [1], [0, 0, 0, 1, 1, 1], [0], [0]>} : vector<2x8x8xf32>, vector<2x8x8xf32>, vector<2x8x8xf32> -> vector<2x8x8xf32>
    "tpu.trace_stop"() : () -> ()
    %cst_50 = arith.constant 0.353553385 : f32
    %124 = vector.broadcast %cst_50 : f32 to vector<2x8x8xf32>
    %125 = arith.mulf %123, %124 : vector<2x8x8xf32>
    %126 = vector.broadcast %28 : vector<2x1x8xf32> to vector<2x8x8xf32>
    %127 = arith.addf %125, %126 : vector<2x8x8xf32>
    %cst_51 = arith.constant dense<0xFF800000> : vector<2x8xf32>
    %128 = vector.multi_reduction <maximumf>, %127, %cst_51 [2] : vector<2x8x8xf32> to vector<2x8xf32>
    %129 = vector.shape_cast %128 : vector<2x8xf32> to vector<2x8x1xf32>
    %130 = vector.broadcast %129 : vector<2x8x1xf32> to vector<2x8x8xf32>
    %131 = arith.subf %127, %130 : vector<2x8x8xf32>
    %132 = math.exp %131 : vector<2x8x8xf32>
    %cst_52 = arith.constant dense<0.000000e+00> : vector<2x8xf32>
    %133 = vector.multi_reduction <add>, %132, %cst_52 [2] : vector<2x8x8xf32> to vector<2x8xf32>
    %134 = vector.shape_cast %133 : vector<2x8xf32> to vector<2x8x1xf32>
    %135 = tpu.reciprocal %134 {approx = true} : vector<2x8x1xf32> -> vector<2x8x1xf32>
    %136 = vector.broadcast %135 : vector<2x8x1xf32> to vector<2x8x8xf32>
    %137 = arith.mulf %132, %136 : vector<2x8x8xf32>
    %c0_53 = arith.constant 0 : index
    %c3 = arith.constant 3 : index
    %c0_54 = arith.constant 0 : index
    %c0_55 = arith.constant 0 : index
    %138 = vector.load %arg22[%c0_53, %c3, %c0_54, %c0_55] : memref<2x4x8x8xf32, #tpu.memory_space<vmem>>, vector<2x1x8x8xf32>
    %139 = vector.shape_cast %138 : vector<2x1x8x8xf32> to vector<2x8x8xf32>
    %140 = vector.shape_cast %137 : vector<2x8x8xf32> to vector<2x1x8x8xf32>
    tpu.vector_store %arg22[%c0_53, %c3, %c0_54, %c0_55], %140 {strides = array<i32>} : memref<2x4x8x8xf32, #tpu.memory_space<vmem>>, vector<2x1x8x8xf32>,
    "tpu.trace_start"() <{level = 10 : i32, message = "bqk,bkd->bqd"}> : () -> ()
    %cst_56 = arith.constant dense<0.000000e+00> : vector<2x8x8xf32>
    %141 = tpu.matmul %137, %122, %cst_56 {dimension_numbers = #tpu.dot_dimension_numbers<[2], [1], [1], [2], [0, 0, 0, 1, 1, 2], [0], [0]>} : vector<2x8x8xf32>, vector<2x8x8xf32>, vector<2x8x8xf32> -> vector<2x8x8xf32>
    "tpu.trace_stop"() : () -> ()
    %142 = vector.shape_cast %141 : vector<2x8x8xf32> to vector<16x8xf32>
    %c0_57 = arith.constant 0 : index
    %c24 = arith.constant 24 : index
    %143 = vector.load %arg24[%c0_57, %c24] : memref<16x32xf32, #tpu.memory_space<vmem>>, vector<16x8xf32>
    tpu.vector_store %arg24[%c0_57, %c24], %142 {strides = array<i32>} : memref<16x32xf32, #tpu.memory_space<vmem>>, vector<16x8xf32>,
    %c0_58 = arith.constant 0 : index
    %c0_59 = arith.constant 0 : index
    %144 = vector.load %arg24[%c0_58, %c0_59] : memref<16x32xf32, #tpu.memory_space<vmem>>, vector<16x32xf32>
    %c0_60 = arith.constant 0 : index
    %c0_61 = arith.constant 0 : index
    %c0_62 = arith.constant 0 : index
    %145 = vector.load %arg7[%c0_60, %c0_61, %c0_62] : memref<2x32x32xf32, #tpu.memory_space<vmem>>, vector<1x32x32xf32>
    %146 = vector.shape_cast %145 : vector<1x32x32xf32> to vector<32x32xf32>
    %cst_63 = arith.constant dense<0.000000e+00> : vector<16x32xf32>
    %147 = tpu.matmul %144, %146, %cst_63 {dimension_numbers = #tpu.dot_dimension_numbers<[1], [0], [0], [1], [0, 0, 1, 1], [], []>} : vector<16x32xf32>, vector<32x32xf32>, vector<16x32xf32> -> vector<16x32xf32>
    %c0_64 = arith.constant 0 : index
    %c0_65 = arith.constant 0 : index
    %c0_66 = arith.constant 0 : index
    %148 = vector.load %arg8[%c0_64, %c0_65, %c0_66] : memref<2x1x32xf32, #tpu.memory_space<vmem>>, vector<1x1x32xf32>
    %149 = vector.shape_cast %148 : vector<1x1x32xf32> to vector<1x32xf32>
    %150 = vector.broadcast %149 : vector<1x32xf32> to vector<16x32xf32>
    %151 = arith.addf %147, %150 : vector<16x32xf32>
    %152 = arith.addf %27, %151 : vector<16x32xf32>
    %c0_67 = arith.constant 0 : index
    %c0_68 = arith.constant 0 : index
    %c0_69 = arith.constant 0 : index
    %153 = vector.load %arg9[%c0_67, %c0_68, %c0_69] : memref<2x1x32xf32, #tpu.memory_space<vmem>>, vector<1x1x32xf32>
    %154 = vector.shape_cast %153 : vector<1x1x32xf32> to vector<1x32xf32>
    %c0_70 = arith.constant 0 : index
    %c0_71 = arith.constant 0 : index
    %c0_72 = arith.constant 0 : index
    %155 = vector.load %arg10[%c0_70, %c0_71, %c0_72] : memref<2x1x32xf32, #tpu.memory_space<vmem>>, vector<1x1x32xf32>
    %156 = vector.shape_cast %155 : vector<1x1x32xf32> to vector<1x32xf32>
    %cst_73 = arith.constant dense<0.000000e+00> : vector<16xf32>
    %157 = vector.multi_reduction <add>, %152, %cst_73 [1] : vector<16x32xf32> to vector<16xf32>
    %158 = vector.shape_cast %157 : vector<16xf32> to vector<16x1xf32>
    %cst_74 = arith.constant 3.200000e+01 : f32
    %159 = vector.broadcast %cst_74 : f32 to vector<16x1xf32>
    %160 = arith.divf %158, %159 : vector<16x1xf32>
    %161 = vector.broadcast %160 : vector<16x1xf32> to vector<16x32xf32>
    %162 = arith.subf %152, %161 : vector<16x32xf32>
    %163 = arith.mulf %162, %162 : vector<16x32xf32>
    %cst_75 = arith.constant dense<0.000000e+00> : vector<16xf32>
    %164 = vector.multi_reduction <add>, %163, %cst_75 [1] : vector<16x32xf32> to vector<16xf32>
    %165 = vector.shape_cast %164 : vector<16xf32> to vector<16x1xf32>
    %cst_76 = arith.constant 3.200000e+01 : f32
    %166 = vector.broadcast %cst_76 : f32 to vector<16x1xf32>
    %167 = arith.divf %165, %166 : vector<16x1xf32>
    %168 = vector.broadcast %160 : vector<16x1xf32> to vector<16x32xf32>
    %169 = arith.subf %152, %168 : vector<16x32xf32>
    %cst_77 = arith.constant 9.99999996E-13 : f32
    %170 = vector.broadcast %cst_77 : f32 to vector<16x1xf32>
    %171 = arith.addf %167, %170 : vector<16x1xf32>
    %172 = math.rsqrt %171 : vector<16x1xf32>
    %173 = vector.broadcast %172 : vector<16x1xf32> to vector<16x32xf32>
    %174 = arith.mulf %169, %173 : vector<16x32xf32>
    %175 = vector.broadcast %154 : vector<1x32xf32> to vector<16x32xf32>
    %176 = arith.mulf %174, %175 : vector<16x32xf32>
    %177 = vector.broadcast %156 : vector<1x32xf32> to vector<16x32xf32>
    %178 = arith.addf %176, %177 : vector<16x32xf32>
    %c0_78 = arith.constant 0 : index
    %c0_79 = arith.constant 0 : index
    %c0_80 = arith.constant 0 : index
    %179 = vector.load %arg11[%c0_78, %c0_79, %c0_80] : memref<2x32x64xf32, #tpu.memory_space<vmem>>, vector<1x32x64xf32>
    %180 = vector.shape_cast %179 : vector<1x32x64xf32> to vector<32x64xf32>
    %cst_81 = arith.constant dense<0.000000e+00> : vector<16x64xf32>
    %181 = tpu.matmul %178, %180, %cst_81 {dimension_numbers = #tpu.dot_dimension_numbers<[1], [0], [0], [1], [0, 0, 1, 1], [], []>} : vector<16x32xf32>, vector<32x64xf32>, vector<16x64xf32> -> vector<16x64xf32>
    %c0_82 = arith.constant 0 : index
    %c0_83 = arith.constant 0 : index
    %c0_84 = arith.constant 0 : index
    %182 = vector.load %arg12[%c0_82, %c0_83, %c0_84] : memref<2x1x64xf32, #tpu.memory_space<vmem>>, vector<1x1x64xf32>
    %183 = vector.shape_cast %182 : vector<1x1x64xf32> to vector<1x64xf32>
    %184 = vector.broadcast %183 : vector<1x64xf32> to vector<16x64xf32>
    %185 = arith.addf %181, %184 : vector<16x64xf32>
    %cst_85 = arith.constant 5.000000e-01 : f32
    %186 = vector.broadcast %cst_85 : f32 to vector<16x64xf32>
    %187 = arith.mulf %186, %185 : vector<16x64xf32>
    %cst_86 = arith.constant 4.471500e-02 : f32
    %188 = vector.broadcast %cst_86 : f32 to vector<16x64xf32>
    %189 = arith.mulf %188, %185 : vector<16x64xf32>
    %190 = arith.mulf %189, %185 : vector<16x64xf32>
    %191 = arith.mulf %190, %185 : vector<16x64xf32>
    %192 = arith.addf %185, %191 : vector<16x64xf32>
    %cst_87 = arith.constant 0.797884583 : f32
    %193 = vector.broadcast %cst_87 : f32 to vector<16x64xf32>
    %194 = arith.mulf %193, %192 : vector<16x64xf32>
    %195 = math.tanh %194 : vector<16x64xf32>
    %cst_88 = arith.constant 1.000000e+00 : f32
    %196 = vector.broadcast %cst_88 : f32 to vector<16x64xf32>
    %197 = arith.addf %196, %195 : vector<16x64xf32>
    %198 = arith.mulf %187, %197 : vector<16x64xf32>
    %c0_89 = arith.constant 0 : index
    %c0_90 = arith.constant 0 : index
    %c0_91 = arith.constant 0 : index
    %199 = vector.load %arg13[%c0_89, %c0_90, %c0_91] : memref<2x64x32xf32, #tpu.memory_space<vmem>>, vector<1x64x32xf32>
    %200 = vector.shape_cast %199 : vector<1x64x32xf32> to vector<64x32xf32>
    %cst_92 = arith.constant dense<0.000000e+00> : vector<16x32xf32>
    %201 = tpu.matmul %198, %200, %cst_92 {dimension_numbers = #tpu.dot_dimension_numbers<[1], [0], [0], [1], [0, 0, 1, 1], [], []>} : vector<16x64xf32>, vector<64x32xf32>, vector<16x32xf32> -> vector<16x32xf32>
    %c0_93 = arith.constant 0 : index
    %c0_94 = arith.constant 0 : index
    %c0_95 = arith.constant 0 : index
    %202 = vector.load %arg14[%c0_93, %c0_94, %c0_95] : memref<2x1x32xf32, #tpu.memory_space<vmem>>, vector<1x1x32xf32>
    %203 = vector.shape_cast %202 : vector<1x1x32xf32> to vector<1x32xf32>
    %204 = vector.broadcast %203 : vector<1x32xf32> to vector<16x32xf32>
    %205 = arith.addf %201, %204 : vector<16x32xf32>
    %206 = arith.addf %178, %205 : vector<16x32xf32>
    %c0_96 = arith.constant 0 : index
    %c0_97 = arith.constant 0 : index
    %c0_98 = arith.constant 0 : index
    %207 = vector.load %arg15[%c0_96, %c0_97, %c0_98] : memref<2x1x32xf32, #tpu.memory_space<vmem>>, vector<1x1x32xf32>
    %208 = vector.shape_cast %207 : vector<1x1x32xf32> to vector<1x32xf32>
    %c0_99 = arith.constant 0 : index
    %c0_100 = arith.constant 0 : index
    %c0_101 = arith.constant 0 : index
    %209 = vector.load %arg16[%c0_99, %c0_100, %c0_101] : memref<2x1x32xf32, #tpu.memory_space<vmem>>, vector<1x1x32xf32>
    %210 = vector.shape_cast %209 : vector<1x1x32xf32> to vector<1x32xf32>
    %cst_102 = arith.constant dense<0.000000e+00> : vector<16xf32>
    %211 = vector.multi_reduction <add>, %206, %cst_102 [1] : vector<16x32xf32> to vector<16xf32>
    %212 = vector.shape_cast %211 : vector<16xf32> to vector<16x1xf32>
    %cst_103 = arith.constant 3.200000e+01 : f32
    %213 = vector.broadcast %cst_103 : f32 to vector<16x1xf32>
    %214 = arith.divf %212, %213 : vector<16x1xf32>
    %215 = vector.broadcast %214 : vector<16x1xf32> to vector<16x32xf32>
    %216 = arith.subf %206, %215 : vector<16x32xf32>
    %217 = arith.mulf %216, %216 : vector<16x32xf32>
    %cst_104 = arith.constant dense<0.000000e+00> : vector<16xf32>
    %218 = vector.multi_reduction <add>, %217, %cst_104 [1] : vector<16x32xf32> to vector<16xf32>
    %219 = vector.shape_cast %218 : vector<16xf32> to vector<16x1xf32>
    %cst_105 = arith.constant 3.200000e+01 : f32
    %220 = vector.broadcast %cst_105 : f32 to vector<16x1xf32>
    %221 = arith.divf %219, %220 : vector<16x1xf32>
    %222 = vector.broadcast %214 : vector<16x1xf32> to vector<16x32xf32>
    %223 = arith.subf %206, %222 : vector<16x32xf32>
    %cst_106 = arith.constant 9.99999996E-13 : f32
    %224 = vector.broadcast %cst_106 : f32 to vector<16x1xf32>
    %225 = arith.addf %221, %224 : vector<16x1xf32>
    %226 = math.rsqrt %225 : vector<16x1xf32>
    %227 = vector.broadcast %226 : vector<16x1xf32> to vector<16x32xf32>
    %228 = arith.mulf %223, %227 : vector<16x32xf32>
    %229 = vector.broadcast %208 : vector<1x32xf32> to vector<16x32xf32>
    %230 = arith.mulf %228, %229 : vector<16x32xf32>
    %231 = vector.broadcast %210 : vector<1x32xf32> to vector<16x32xf32>
    %232 = arith.addf %230, %231 : vector<16x32xf32>
    %c1_107 = arith.constant 1 : index
    %c0_108 = arith.constant 0 : index
    %c0_109 = arith.constant 0 : index
    %233 = vector.load %arg5[%c1_107, %c0_108, %c0_109] : memref<2x32x96xf32, #tpu.memory_space<vmem>>, vector<1x32x96xf32>
    %234 = vector.shape_cast %233 : vector<1x32x96xf32> to vector<32x96xf32>
    %cst_110 = arith.constant dense<0.000000e+00> : vector<16x96xf32>
    %235 = tpu.matmul %232, %234, %cst_110 {dimension_numbers = #tpu.dot_dimension_numbers<[1], [0], [0], [1], [0, 0, 1, 1], [], []>} : vector<16x32xf32>, vector<32x96xf32>, vector<16x96xf32> -> vector<16x96xf32>
    %c1_111 = arith.constant 1 : index
    %c0_112 = arith.constant 0 : index
    %c0_113 = arith.constant 0 : index
    %236 = vector.load %arg6[%c1_111, %c0_112, %c0_113] : memref<2x1x96xf32, #tpu.memory_space<vmem>>, vector<1x1x96xf32>
    %237 = vector.shape_cast %236 : vector<1x1x96xf32> to vector<1x96xf32>
    %238 = vector.broadcast %237 : vector<1x96xf32> to vector<16x96xf32>
    %239 = arith.addf %235, %238 : vector<16x96xf32>
    %240 = vector.extract_strided_slice %239 {offsets = [0, 0], sizes = [16, 8], strides = [1, 1]} : vector<16x96xf32> to vector<16x8xf32>
    %241 = vector.shape_cast %240 : vector<16x8xf32> to vector<2x8x8xf32>
    %242 = vector.extract_strided_slice %239 {offsets = [0, 32], sizes = [16, 8], strides = [1, 1]} : vector<16x96xf32> to vector<16x8xf32>
    %243 = vector.shape_cast %242 : vector<16x8xf32> to vector<2x8x8xf32>
    %244 = vector.extract_strided_slice %239 {offsets = [0, 64], sizes = [16, 8], strides = [1, 1]} : vector<16x96xf32> to vector<16x8xf32>
    %245 = vector.shape_cast %244 : vector<16x8xf32> to vector<2x8x8xf32>
    "tpu.trace_start"() <{level = 10 : i32, message = "bqd,bkd->bqk"}> : () -> ()
    %cst_114 = arith.constant dense<0.000000e+00> : vector<2x8x8xf32>
    %246 = tpu.matmul %241, %243, %cst_114 {dimension_numbers = #tpu.dot_dimension_numbers<[2], [2], [1], [1], [0, 0, 0, 1, 1, 1], [0], [0]>} : vector<2x8x8xf32>, vector<2x8x8xf32>, vector<2x8x8xf32> -> vector<2x8x8xf32>
    "tpu.trace_stop"() : () -> ()
    %cst_115 = arith.constant 0.353553385 : f32
    %247 = vector.broadcast %cst_115 : f32 to vector<2x8x8xf32>
    %248 = arith.mulf %246, %247 : vector<2x8x8xf32>
    %249 = vector.broadcast %28 : vector<2x1x8xf32> to vector<2x8x8xf32>
    %250 = arith.addf %248, %249 : vector<2x8x8xf32>
    %cst_116 = arith.constant dense<0xFF800000> : vector<2x8xf32>
    %251 = vector.multi_reduction <maximumf>, %250, %cst_116 [2] : vector<2x8x8xf32> to vector<2x8xf32>
    %252 = vector.shape_cast %251 : vector<2x8xf32> to vector<2x8x1xf32>
    %253 = vector.broadcast %252 : vector<2x8x1xf32> to vector<2x8x8xf32>
    %254 = arith.subf %250, %253 : vector<2x8x8xf32>
    %255 = math.exp %254 : vector<2x8x8xf32>
    %cst_117 = arith.constant dense<0.000000e+00> : vector<2x8xf32>
    %256 = vector.multi_reduction <add>, %255, %cst_117 [2] : vector<2x8x8xf32> to vector<2x8xf32>
    %257 = vector.shape_cast %256 : vector<2x8xf32> to vector<2x8x1xf32>
    %258 = tpu.reciprocal %257 {approx = true} : vector<2x8x1xf32> -> vector<2x8x1xf32>
    %259 = vector.broadcast %258 : vector<2x8x1xf32> to vector<2x8x8xf32>
    %260 = arith.mulf %255, %259 : vector<2x8x8xf32>
    %c0_118 = arith.constant 0 : index
    %c0_119 = arith.constant 0 : index
    %c0_120 = arith.constant 0 : index
    %c0_121 = arith.constant 0 : index
    %261 = vector.load %arg23[%c0_118, %c0_119, %c0_120, %c0_121] : memref<2x4x8x8xf32, #tpu.memory_space<vmem>>, vector<2x1x8x8xf32>
    %262 = vector.shape_cast %261 : vector<2x1x8x8xf32> to vector<2x8x8xf32>
    %263 = vector.shape_cast %260 : vector<2x8x8xf32> to vector<2x1x8x8xf32>
    tpu.vector_store %arg23[%c0_118, %c0_119, %c0_120, %c0_121], %263 {strides = array<i32>} : memref<2x4x8x8xf32, #tpu.memory_space<vmem>>, vector<2x1x8x8xf32>,
    "tpu.trace_start"() <{level = 10 : i32, message = "bqk,bkd->bqd"}> : () -> ()
    %cst_122 = arith.constant dense<0.000000e+00> : vector<2x8x8xf32>
    %264 = tpu.matmul %260, %245, %cst_122 {dimension_numbers = #tpu.dot_dimension_numbers<[2], [1], [1], [2], [0, 0, 0, 1, 1, 2], [0], [0]>} : vector<2x8x8xf32>, vector<2x8x8xf32>, vector<2x8x8xf32> -> vector<2x8x8xf32>
    "tpu.trace_stop"() : () -> ()
    %265 = vector.shape_cast %264 : vector<2x8x8xf32> to vector<16x8xf32>
    %c0_123 = arith.constant 0 : index
    %c0_124 = arith.constant 0 : index
    %266 = vector.load %arg24[%c0_123, %c0_124] : memref<16x32xf32, #tpu.memory_space<vmem>>, vector<16x8xf32>
    tpu.vector_store %arg24[%c0_123, %c0_124], %265 {strides = array<i32>} : memref<16x32xf32, #tpu.memory_space<vmem>>, vector<16x8xf32>,
    %267 = vector.extract_strided_slice %239 {offsets = [0, 8], sizes = [16, 8], strides = [1, 1]} : vector<16x96xf32> to vector<16x8xf32>
    %268 = vector.shape_cast %267 : vector<16x8xf32> to vector<2x8x8xf32>
    %269 = vector.extract_strided_slice %239 {offsets = [0, 40], sizes = [16, 8], strides = [1, 1]} : vector<16x96xf32> to vector<16x8xf32>
    %270 = vector.shape_cast %269 : vector<16x8xf32> to vector<2x8x8xf32>
    %271 = vector.extract_strided_slice %239 {offsets = [0, 72], sizes = [16, 8], strides = [1, 1]} : vector<16x96xf32> to vector<16x8xf32>
    %272 = vector.shape_cast %271 : vector<16x8xf32> to vector<2x8x8xf32>
    "tpu.trace_start"() <{level = 10 : i32, message = "bqd,bkd->bqk"}> : () -> ()
    %cst_125 = arith.constant dense<0.000000e+00> : vector<2x8x8xf32>
    %273 = tpu.matmul %268, %270, %cst_125 {dimension_numbers = #tpu.dot_dimension_numbers<[2], [2], [1], [1], [0, 0, 0, 1, 1, 1], [0], [0]>} : vector<2x8x8xf32>, vector<2x8x8xf32>, vector<2x8x8xf32> -> vector<2x8x8xf32>
    "tpu.trace_stop"() : () -> ()
    %cst_126 = arith.constant 0.353553385 : f32
    %274 = vector.broadcast %cst_126 : f32 to vector<2x8x8xf32>
    %275 = arith.mulf %273, %274 : vector<2x8x8xf32>
    %276 = vector.broadcast %28 : vector<2x1x8xf32> to vector<2x8x8xf32>
    %277 = arith.addf %275, %276 : vector<2x8x8xf32>
    %cst_127 = arith.constant dense<0xFF800000> : vector<2x8xf32>
    %278 = vector.multi_reduction <maximumf>, %277, %cst_127 [2] : vector<2x8x8xf32> to vector<2x8xf32>
    %279 = vector.shape_cast %278 : vector<2x8xf32> to vector<2x8x1xf32>
    %280 = vector.broadcast %279 : vector<2x8x1xf32> to vector<2x8x8xf32>
    %281 = arith.subf %277, %280 : vector<2x8x8xf32>
    %282 = math.exp %281 : vector<2x8x8xf32>
    %cst_128 = arith.constant dense<0.000000e+00> : vector<2x8xf32>
    %283 = vector.multi_reduction <add>, %282, %cst_128 [2] : vector<2x8x8xf32> to vector<2x8xf32>
    %284 = vector.shape_cast %283 : vector<2x8xf32> to vector<2x8x1xf32>
    %285 = tpu.reciprocal %284 {approx = true} : vector<2x8x1xf32> -> vector<2x8x1xf32>
    %286 = vector.broadcast %285 : vector<2x8x1xf32> to vector<2x8x8xf32>
    %287 = arith.mulf %282, %286 : vector<2x8x8xf32>
    %c0_129 = arith.constant 0 : index
    %c1_130 = arith.constant 1 : index
    %c0_131 = arith.constant 0 : index
    %c0_132 = arith.constant 0 : index
    %288 = vector.load %arg23[%c0_129, %c1_130, %c0_131, %c0_132] : memref<2x4x8x8xf32, #tpu.memory_space<vmem>>, vector<2x1x8x8xf32>
    %289 = vector.shape_cast %288 : vector<2x1x8x8xf32> to vector<2x8x8xf32>
    %290 = vector.shape_cast %287 : vector<2x8x8xf32> to vector<2x1x8x8xf32>
    tpu.vector_store %arg23[%c0_129, %c1_130, %c0_131, %c0_132], %290 {strides = array<i32>} : memref<2x4x8x8xf32, #tpu.memory_space<vmem>>, vector<2x1x8x8xf32>,
    "tpu.trace_start"() <{level = 10 : i32, message = "bqk,bkd->bqd"}> : () -> ()
    %cst_133 = arith.constant dense<0.000000e+00> : vector<2x8x8xf32>
    %291 = tpu.matmul %287, %272, %cst_133 {dimension_numbers = #tpu.dot_dimension_numbers<[2], [1], [1], [2], [0, 0, 0, 1, 1, 2], [0], [0]>} : vector<2x8x8xf32>, vector<2x8x8xf32>, vector<2x8x8xf32> -> vector<2x8x8xf32>
    "tpu.trace_stop"() : () -> ()
    %292 = vector.shape_cast %291 : vector<2x8x8xf32> to vector<16x8xf32>
    %c0_134 = arith.constant 0 : index
    %c8_135 = arith.constant 8 : index
    %293 = vector.load %arg24[%c0_134, %c8_135] : memref<16x32xf32, #tpu.memory_space<vmem>>, vector<16x8xf32>
    tpu.vector_store %arg24[%c0_134, %c8_135], %292 {strides = array<i32>} : memref<16x32xf32, #tpu.memory_space<vmem>>, vector<16x8xf32>,
    %294 = vector.extract_strided_slice %239 {offsets = [0, 16], sizes = [16, 8], strides = [1, 1]} : vector<16x96xf32> to vector<16x8xf32>
    %295 = vector.shape_cast %294 : vector<16x8xf32> to vector<2x8x8xf32>
    %296 = vector.extract_strided_slice %239 {offsets = [0, 48], sizes = [16, 8], strides = [1, 1]} : vector<16x96xf32> to vector<16x8xf32>
    %297 = vector.shape_cast %296 : vector<16x8xf32> to vector<2x8x8xf32>
    %298 = vector.extract_strided_slice %239 {offsets = [0, 80], sizes = [16, 8], strides = [1, 1]} : vector<16x96xf32> to vector<16x8xf32>
    %299 = vector.shape_cast %298 : vector<16x8xf32> to vector<2x8x8xf32>
    "tpu.trace_start"() <{level = 10 : i32, message = "bqd,bkd->bqk"}> : () -> ()
    %cst_136 = arith.constant dense<0.000000e+00> : vector<2x8x8xf32>
    %300 = tpu.matmul %295, %297, %cst_136 {dimension_numbers = #tpu.dot_dimension_numbers<[2], [2], [1], [1], [0, 0, 0, 1, 1, 1], [0], [0]>} : vector<2x8x8xf32>, vector<2x8x8xf32>, vector<2x8x8xf32> -> vector<2x8x8xf32>
    "tpu.trace_stop"() : () -> ()
    %cst_137 = arith.constant 0.353553385 : f32
    %301 = vector.broadcast %cst_137 : f32 to vector<2x8x8xf32>
    %302 = arith.mulf %300, %301 : vector<2x8x8xf32>
    %303 = vector.broadcast %28 : vector<2x1x8xf32> to vector<2x8x8xf32>
    %304 = arith.addf %302, %303 : vector<2x8x8xf32>
    %cst_138 = arith.constant dense<0xFF800000> : vector<2x8xf32>
    %305 = vector.multi_reduction <maximumf>, %304, %cst_138 [2] : vector<2x8x8xf32> to vector<2x8xf32>
    %306 = vector.shape_cast %305 : vector<2x8xf32> to vector<2x8x1xf32>
    %307 = vector.broadcast %306 : vector<2x8x1xf32> to vector<2x8x8xf32>
    %308 = arith.subf %304, %307 : vector<2x8x8xf32>
    %309 = math.exp %308 : vector<2x8x8xf32>
    %cst_139 = arith.constant dense<0.000000e+00> : vector<2x8xf32>
    %310 = vector.multi_reduction <add>, %309, %cst_139 [2] : vector<2x8x8xf32> to vector<2x8xf32>
    %311 = vector.shape_cast %310 : vector<2x8xf32> to vector<2x8x1xf32>
    %312 = tpu.reciprocal %311 {approx = true} : vector<2x8x1xf32> -> vector<2x8x1xf32>
    %313 = vector.broadcast %312 : vector<2x8x1xf32> to vector<2x8x8xf32>
    %314 = arith.mulf %309, %313 : vector<2x8x8xf32>
    %c0_140 = arith.constant 0 : index
    %c2_141 = arith.constant 2 : index
    %c0_142 = arith.constant 0 : index
    %c0_143 = arith.constant 0 : index
    %315 = vector.load %arg23[%c0_140, %c2_141, %c0_142, %c0_143] : memref<2x4x8x8xf32, #tpu.memory_space<vmem>>, vector<2x1x8x8xf32>
    %316 = vector.shape_cast %315 : vector<2x1x8x8xf32> to vector<2x8x8xf32>
    %317 = vector.shape_cast %314 : vector<2x8x8xf32> to vector<2x1x8x8xf32>
    tpu.vector_store %arg23[%c0_140, %c2_141, %c0_142, %c0_143], %317 {strides = array<i32>} : memref<2x4x8x8xf32, #tpu.memory_space<vmem>>, vector<2x1x8x8xf32>,
    "tpu.trace_start"() <{level = 10 : i32, message = "bqk,bkd->bqd"}> : () -> ()
    %cst_144 = arith.constant dense<0.000000e+00> : vector<2x8x8xf32>
    %318 = tpu.matmul %314, %299, %cst_144 {dimension_numbers = #tpu.dot_dimension_numbers<[2], [1], [1], [2], [0, 0, 0, 1, 1, 2], [0], [0]>} : vector<2x8x8xf32>, vector<2x8x8xf32>, vector<2x8x8xf32> -> vector<2x8x8xf32>
    "tpu.trace_stop"() : () -> ()
    %319 = vector.shape_cast %318 : vector<2x8x8xf32> to vector<16x8xf32>
    %c0_145 = arith.constant 0 : index
    %c16_146 = arith.constant 16 : index
    %320 = vector.load %arg24[%c0_145, %c16_146] : memref<16x32xf32, #tpu.memory_space<vmem>>, vector<16x8xf32>
    tpu.vector_store %arg24[%c0_145, %c16_146], %319 {strides = array<i32>} : memref<16x32xf32, #tpu.memory_space<vmem>>, vector<16x8xf32>,
    %321 = vector.extract_strided_slice %239 {offsets = [0, 24], sizes = [16, 8], strides = [1, 1]} : vector<16x96xf32> to vector<16x8xf32>
    %322 = vector.shape_cast %321 : vector<16x8xf32> to vector<2x8x8xf32>
    %323 = vector.extract_strided_slice %239 {offsets = [0, 56], sizes = [16, 8], strides = [1, 1]} : vector<16x96xf32> to vector<16x8xf32>
    %324 = vector.shape_cast %323 : vector<16x8xf32> to vector<2x8x8xf32>
    %325 = vector.extract_strided_slice %239 {offsets = [0, 88], sizes = [16, 8], strides = [1, 1]} : vector<16x96xf32> to vector<16x8xf32>
    %326 = vector.shape_cast %325 : vector<16x8xf32> to vector<2x8x8xf32>
    "tpu.trace_start"() <{level = 10 : i32, message = "bqd,bkd->bqk"}> : () -> ()
    %cst_147 = arith.constant dense<0.000000e+00> : vector<2x8x8xf32>
    %327 = tpu.matmul %322, %324, %cst_147 {dimension_numbers = #tpu.dot_dimension_numbers<[2], [2], [1], [1], [0, 0, 0, 1, 1, 1], [0], [0]>} : vector<2x8x8xf32>, vector<2x8x8xf32>, vector<2x8x8xf32> -> vector<2x8x8xf32>
    "tpu.trace_stop"() : () -> ()
    %cst_148 = arith.constant 0.353553385 : f32
    %328 = vector.broadcast %cst_148 : f32 to vector<2x8x8xf32>
    %329 = arith.mulf %327, %328 : vector<2x8x8xf32>
    %330 = vector.broadcast %28 : vector<2x1x8xf32> to vector<2x8x8xf32>
    %331 = arith.addf %329, %330 : vector<2x8x8xf32>
    %cst_149 = arith.constant dense<0xFF800000> : vector<2x8xf32>
    %332 = vector.multi_reduction <maximumf>, %331, %cst_149 [2] : vector<2x8x8xf32> to vector<2x8xf32>
    %333 = vector.shape_cast %332 : vector<2x8xf32> to vector<2x8x1xf32>
    %334 = vector.broadcast %333 : vector<2x8x1xf32> to vector<2x8x8xf32>
    %335 = arith.subf %331, %334 : vector<2x8x8xf32>
    %336 = math.exp %335 : vector<2x8x8xf32>
    %cst_150 = arith.constant dense<0.000000e+00> : vector<2x8xf32>
    %337 = vector.multi_reduction <add>, %336, %cst_150 [2] : vector<2x8x8xf32> to vector<2x8xf32>
    %338 = vector.shape_cast %337 : vector<2x8xf32> to vector<2x8x1xf32>
    %339 = tpu.reciprocal %338 {approx = true} : vector<2x8x1xf32> -> vector<2x8x1xf32>
    %340 = vector.broadcast %339 : vector<2x8x1xf32> to vector<2x8x8xf32>
    %341 = arith.mulf %336, %340 : vector<2x8x8xf32>
    %c0_151 = arith.constant 0 : index
    %c3_152 = arith.constant 3 : index
    %c0_153 = arith.constant 0 : index
    %c0_154 = arith.constant 0 : index
    %342 = vector.load %arg23[%c0_151, %c3_152, %c0_153, %c0_154] : memref<2x4x8x8xf32, #tpu.memory_space<vmem>>, vector<2x1x8x8xf32>
    %343 = vector.shape_cast %342 : vector<2x1x8x8xf32> to vector<2x8x8xf32>
    %344 = vector.shape_cast %341 : vector<2x8x8xf32> to vector<2x1x8x8xf32>
    tpu.vector_store %arg23[%c0_151, %c3_152, %c0_153, %c0_154], %344 {strides = array<i32>} : memref<2x4x8x8xf32, #tpu.memory_space<vmem>>, vector<2x1x8x8xf32>,
    "tpu.trace_start"() <{level = 10 : i32, message = "bqk,bkd->bqd"}> : () -> ()
    %cst_155 = arith.constant dense<0.000000e+00> : vector<2x8x8xf32>
    %345 = tpu.matmul %341, %326, %cst_155 {dimension_numbers = #tpu.dot_dimension_numbers<[2], [1], [1], [2], [0, 0, 0, 1, 1, 2], [0], [0]>} : vector<2x8x8xf32>, vector<2x8x8xf32>, vector<2x8x8xf32> -> vector<2x8x8xf32>
    "tpu.trace_stop"() : () -> ()
    %346 = vector.shape_cast %345 : vector<2x8x8xf32> to vector<16x8xf32>
    %c0_156 = arith.constant 0 : index
    %c24_157 = arith.constant 24 : index
    %347 = vector.load %arg24[%c0_156, %c24_157] : memref<16x32xf32, #tpu.memory_space<vmem>>, vector<16x8xf32>
    tpu.vector_store %arg24[%c0_156, %c24_157], %346 {strides = array<i32>} : memref<16x32xf32, #tpu.memory_space<vmem>>, vector<16x8xf32>,
    %c0_158 = arith.constant 0 : index
    %c0_159 = arith.constant 0 : index
    %348 = vector.load %arg24[%c0_158, %c0_159] : memref<16x32xf32, #tpu.memory_space<vmem>>, vector<16x32xf32>
    %c1_160 = arith.constant 1 : index
    %c0_161 = arith.constant 0 : index
    %c0_162 = arith.constant 0 : index
    %349 = vector.load %arg7[%c1_160, %c0_161, %c0_162] : memref<2x32x32xf32, #tpu.memory_space<vmem>>, vector<1x32x32xf32>
    %350 = vector.shape_cast %349 : vector<1x32x32xf32> to vector<32x32xf32>
    %cst_163 = arith.constant dense<0.000000e+00> : vector<16x32xf32>
    %351 = tpu.matmul %348, %350, %cst_163 {dimension_numbers = #tpu.dot_dimension_numbers<[1], [0], [0], [1], [0, 0, 1, 1], [], []>} : vector<16x32xf32>, vector<32x32xf32>, vector<16x32xf32> -> vector<16x32xf32>
    %c1_164 = arith.constant 1 : index
    %c0_165 = arith.constant 0 : index
    %c0_166 = arith.constant 0 : index
    %352 = vector.load %arg8[%c1_164, %c0_165, %c0_166] : memref<2x1x32xf32, #tpu.memory_space<vmem>>, vector<1x1x32xf32>
    %353 = vector.shape_cast %352 : vector<1x1x32xf32> to vector<1x32xf32>
    %354 = vector.broadcast %353 : vector<1x32xf32> to vector<16x32xf32>
    %355 = arith.addf %351, %354 : vector<16x32xf32>
    %356 = arith.addf %232, %355 : vector<16x32xf32>
    %c1_167 = arith.constant 1 : index
    %c0_168 = arith.constant 0 : index
    %c0_169 = arith.constant 0 : index
    %357 = vector.load %arg9[%c1_167, %c0_168, %c0_169] : memref<2x1x32xf32, #tpu.memory_space<vmem>>, vector<1x1x32xf32>
    %358 = vector.shape_cast %357 : vector<1x1x32xf32> to vector<1x32xf32>
    %c1_170 = arith.constant 1 : index
    %c0_171 = arith.constant 0 : index
    %c0_172 = arith.constant 0 : index
    %359 = vector.load %arg10[%c1_170, %c0_171, %c0_172] : memref<2x1x32xf32, #tpu.memory_space<vmem>>, vector<1x1x32xf32>
    %360 = vector.shape_cast %359 : vector<1x1x32xf32> to vector<1x32xf32>
    %cst_173 = arith.constant dense<0.000000e+00> : vector<16xf32>
    %361 = vector.multi_reduction <add>, %356, %cst_173 [1] : vector<16x32xf32> to vector<16xf32>
    %362 = vector.shape_cast %361 : vector<16xf32> to vector<16x1xf32>
    %cst_174 = arith.constant 3.200000e+01 : f32
    %363 = vector.broadcast %cst_174 : f32 to vector<16x1xf32>
    %364 = arith.divf %362, %363 : vector<16x1xf32>
    %365 = vector.broadcast %364 : vector<16x1xf32> to vector<16x32xf32>
    %366 = arith.subf %356, %365 : vector<16x32xf32>
    %367 = arith.mulf %366, %366 : vector<16x32xf32>
    %cst_175 = arith.constant dense<0.000000e+00> : vector<16xf32>
    %368 = vector.multi_reduction <add>, %367, %cst_175 [1] : vector<16x32xf32> to vector<16xf32>
    %369 = vector.shape_cast %368 : vector<16xf32> to vector<16x1xf32>
    %cst_176 = arith.constant 3.200000e+01 : f32
    %370 = vector.broadcast %cst_176 : f32 to vector<16x1xf32>
    %371 = arith.divf %369, %370 : vector<16x1xf32>
    %372 = vector.broadcast %364 : vector<16x1xf32> to vector<16x32xf32>
    %373 = arith.subf %356, %372 : vector<16x32xf32>
    %cst_177 = arith.constant 9.99999996E-13 : f32
    %374 = vector.broadcast %cst_177 : f32 to vector<16x1xf32>
    %375 = arith.addf %371, %374 : vector<16x1xf32>
    %376 = math.rsqrt %375 : vector<16x1xf32>
    %377 = vector.broadcast %376 : vector<16x1xf32> to vector<16x32xf32>
    %378 = arith.mulf %373, %377 : vector<16x32xf32>
    %379 = vector.broadcast %358 : vector<1x32xf32> to vector<16x32xf32>
    %380 = arith.mulf %378, %379 : vector<16x32xf32>
    %381 = vector.broadcast %360 : vector<1x32xf32> to vector<16x32xf32>
    %382 = arith.addf %380, %381 : vector<16x32xf32>
    %c1_178 = arith.constant 1 : index
    %c0_179 = arith.constant 0 : index
    %c0_180 = arith.constant 0 : index
    %383 = vector.load %arg11[%c1_178, %c0_179, %c0_180] : memref<2x32x64xf32, #tpu.memory_space<vmem>>, vector<1x32x64xf32>
    %384 = vector.shape_cast %383 : vector<1x32x64xf32> to vector<32x64xf32>
    %cst_181 = arith.constant dense<0.000000e+00> : vector<16x64xf32>
    %385 = tpu.matmul %382, %384, %cst_181 {dimension_numbers = #tpu.dot_dimension_numbers<[1], [0], [0], [1], [0, 0, 1, 1], [], []>} : vector<16x32xf32>, vector<32x64xf32>, vector<16x64xf32> -> vector<16x64xf32>
    %c1_182 = arith.constant 1 : index
    %c0_183 = arith.constant 0 : index
    %c0_184 = arith.constant 0 : index
    %386 = vector.load %arg12[%c1_182, %c0_183, %c0_184] : memref<2x1x64xf32, #tpu.memory_space<vmem>>, vector<1x1x64xf32>
    %387 = vector.shape_cast %386 : vector<1x1x64xf32> to vector<1x64xf32>
    %388 = vector.broadcast %387 : vector<1x64xf32> to vector<16x64xf32>
    %389 = arith.addf %385, %388 : vector<16x64xf32>
    %cst_185 = arith.constant 5.000000e-01 : f32
    %390 = vector.broadcast %cst_185 : f32 to vector<16x64xf32>
    %391 = arith.mulf %390, %389 : vector<16x64xf32>
    %cst_186 = arith.constant 4.471500e-02 : f32
    %392 = vector.broadcast %cst_186 : f32 to vector<16x64xf32>
    %393 = arith.mulf %392, %389 : vector<16x64xf32>
    %394 = arith.mulf %393, %389 : vector<16x64xf32>
    %395 = arith.mulf %394, %389 : vector<16x64xf32>
    %396 = arith.addf %389, %395 : vector<16x64xf32>
    %cst_187 = arith.constant 0.797884583 : f32
    %397 = vector.broadcast %cst_187 : f32 to vector<16x64xf32>
    %398 = arith.mulf %397, %396 : vector<16x64xf32>
    %399 = math.tanh %398 : vector<16x64xf32>
    %cst_188 = arith.constant 1.000000e+00 : f32
    %400 = vector.broadcast %cst_188 : f32 to vector<16x64xf32>
    %401 = arith.addf %400, %399 : vector<16x64xf32>
    %402 = arith.mulf %391, %401 : vector<16x64xf32>
    %c1_189 = arith.constant 1 : index
    %c0_190 = arith.constant 0 : index
    %c0_191 = arith.constant 0 : index
    %403 = vector.load %arg13[%c1_189, %c0_190, %c0_191] : memref<2x64x32xf32, #tpu.memory_space<vmem>>, vector<1x64x32xf32>
    %404 = vector.shape_cast %403 : vector<1x64x32xf32> to vector<64x32xf32>
    %cst_192 = arith.constant dense<0.000000e+00> : vector<16x32xf32>
    %405 = tpu.matmul %402, %404, %cst_192 {dimension_numbers = #tpu.dot_dimension_numbers<[1], [0], [0], [1], [0, 0, 1, 1], [], []>} : vector<16x64xf32>, vector<64x32xf32>, vector<16x32xf32> -> vector<16x32xf32>
    %c1_193 = arith.constant 1 : index
    %c0_194 = arith.constant 0 : index
    %c0_195 = arith.constant 0 : index
    %406 = vector.load %arg14[%c1_193, %c0_194, %c0_195] : memref<2x1x32xf32, #tpu.memory_space<vmem>>, vector<1x1x32xf32>
    %407 = vector.shape_cast %406 : vector<1x1x32xf32> to vector<1x32xf32>
    %408 = vector.broadcast %407 : vector<1x32xf32> to vector<16x32xf32>
    %409 = arith.addf %405, %408 : vector<16x32xf32>
    %410 = arith.addf %382, %409 : vector<16x32xf32>
    %c1_196 = arith.constant 1 : index
    %c0_197 = arith.constant 0 : index
    %c0_198 = arith.constant 0 : index
    %411 = vector.load %arg15[%c1_196, %c0_197, %c0_198] : memref<2x1x32xf32, #tpu.memory_space<vmem>>, vector<1x1x32xf32>
    %412 = vector.shape_cast %411 : vector<1x1x32xf32> to vector<1x32xf32>
    %c1_199 = arith.constant 1 : index
    %c0_200 = arith.constant 0 : index
    %c0_201 = arith.constant 0 : index
    %413 = vector.load %arg16[%c1_199, %c0_200, %c0_201] : memref<2x1x32xf32, #tpu.memory_space<vmem>>, vector<1x1x32xf32>
    %414 = vector.shape_cast %413 : vector<1x1x32xf32> to vector<1x32xf32>
    %cst_202 = arith.constant dense<0.000000e+00> : vector<16xf32>
    %415 = vector.multi_reduction <add>, %410, %cst_202 [1] : vector<16x32xf32> to vector<16xf32>
    %416 = vector.shape_cast %415 : vector<16xf32> to vector<16x1xf32>
    %cst_203 = arith.constant 3.200000e+01 : f32
    %417 = vector.broadcast %cst_203 : f32 to vector<16x1xf32>
    %418 = arith.divf %416, %417 : vector<16x1xf32>
    %419 = vector.broadcast %418 : vector<16x1xf32> to vector<16x32xf32>
    %420 = arith.subf %410, %419 : vector<16x32xf32>
    %421 = arith.mulf %420, %420 : vector<16x32xf32>
    %cst_204 = arith.constant dense<0.000000e+00> : vector<16xf32>
    %422 = vector.multi_reduction <add>, %421, %cst_204 [1] : vector<16x32xf32> to vector<16xf32>
    %423 = vector.shape_cast %422 : vector<16xf32> to vector<16x1xf32>
    %cst_205 = arith.constant 3.200000e+01 : f32
    %424 = vector.broadcast %cst_205 : f32 to vector<16x1xf32>
    %425 = arith.divf %423, %424 : vector<16x1xf32>
    %426 = vector.broadcast %418 : vector<16x1xf32> to vector<16x32xf32>
    %427 = arith.subf %410, %426 : vector<16x32xf32>
    %cst_206 = arith.constant 9.99999996E-13 : f32
    %428 = vector.broadcast %cst_206 : f32 to vector<16x1xf32>
    %429 = arith.addf %425, %428 : vector<16x1xf32>
    %430 = math.rsqrt %429 : vector<16x1xf32>
    %431 = vector.broadcast %430 : vector<16x1xf32> to vector<16x32xf32>
    %432 = arith.mulf %427, %431 : vector<16x32xf32>
    %433 = vector.broadcast %412 : vector<1x32xf32> to vector<16x32xf32>
    %434 = arith.mulf %432, %433 : vector<16x32xf32>
    %435 = vector.broadcast %414 : vector<1x32xf32> to vector<16x32xf32>
    %436 = arith.addf %434, %435 : vector<16x32xf32>
    %437 = vector.shape_cast %436 : vector<16x32xf32> to vector<2x8x32xf32>
    %cst_207 = arith.constant dense<0.000000e+00> : vector<2x32xf32>
    %438 = vector.multi_reduction <add>, %437, %cst_207 [1] : vector<2x8x32xf32> to vector<2x32xf32>
    %cst_208 = arith.constant 8.000000e+00 : f32
    %439 = vector.broadcast %cst_208 : f32 to vector<2x32xf32>
    %440 = arith.divf %438, %439 : vector<2x32xf32>
    %c0_209 = arith.constant 0 : index
    %c0_210 = arith.constant 0 : index
    %441 = vector.load %arg17[%c0_209, %c0_210] : memref<32x8xf32, #tpu.memory_space<vmem>>, vector<32x8xf32>
    %cst_211 = arith.constant dense<0.000000e+00> : vector<2x8xf32>
    %442 = tpu.matmul %440, %441, %cst_211 {dimension_numbers = #tpu.dot_dimension_numbers<[1], [0], [0], [1], [0, 0, 1, 1], [], []>} : vector<2x32xf32>, vector<32x8xf32>, vector<2x8xf32> -> vector<2x8xf32>
    %c0_212 = arith.constant 0 : index
    %c0_213 = arith.constant 0 : index
    %443 = vector.load %arg18[%c0_212, %c0_213] : memref<1x8xf32, #tpu.memory_space<vmem>>, vector<1x8xf32>
    %444 = vector.broadcast %443 : vector<1x8xf32> to vector<2x8xf32>
    %445 = arith.addf %442, %444 : vector<2x8xf32>
    %446 = math.tanh %445 : vector<2x8xf32>
    %c0_214 = arith.constant 0 : index
    %c0_215 = arith.constant 0 : index
    %447 = vector.load %arg19[%c0_214, %c0_215] : memref<8x3xf32, #tpu.memory_space<vmem>>, vector<8x3xf32>
    %cst_216 = arith.constant dense<0.000000e+00> : vector<2x3xf32>
    %448 = tpu.matmul %446, %447, %cst_216 {dimension_numbers = #tpu.dot_dimension_numbers<[1], [0], [0], [1], [0, 0, 1, 1], [], []>} : vector<2x8xf32>, vector<8x3xf32>, vector<2x3xf32> -> vector<2x3xf32>
    %c0_217 = arith.constant 0 : index
    %c0_218 = arith.constant 0 : index
    %449 = vector.load %arg20[%c0_217, %c0_218] : memref<1x3xf32, #tpu.memory_space<vmem>>, vector<1x3xf32>
    %450 = vector.broadcast %449 : vector<1x3xf32> to vector<2x3xf32>
    %451 = arith.addf %448, %450 : vector<2x3xf32>
    %c0_219 = arith.constant 0 : index
    %c0_220 = arith.constant 0 : index
    %452 = vector.load %arg21[%c0_219, %c0_220] : memref<2x3xf32, #tpu.memory_space<vmem>>, vector<2x3xf32>
    tpu.vector_store %arg21[%c0_219, %c0_220], %451 {strides = array<i32>} : memref<2x3xf32, #tpu.memory_space<vmem>>, vector<2x3xf32>,
    return
  }
  func.func @transform_0(%arg0: i32) -> (i32, i32, i32) {
    %c0_i32 = arith.constant 0 : i32
    %c0_i32_0 = arith.constant 0 : i32
    %c0_i32_1 = arith.constant 0 : i32
    %c0_i32_2 = arith.constant 0 : i32
    return %c0_i32, %c0_i32_0, %c0_i32_1 : i32, i32, i32
  }
  func.func @transform_1(%arg0: i32) -> (i32, i32, i32) {
    %c0_i32 = arith.constant 0 : i32
    %c0_i32_0 = arith.constant 0 : i32
    %c0_i32_1 = arith.constant 0 : i32
    %c0_i32_2 = arith.constant 0 : i32
    return %c0_i32, %c0_i32_0, %c0_i32_1 : i32, i32, i32
  }
  func.func @transform_2(%arg0: i32) -> (i32, i32) {
    %c0_i32 = arith.constant 0 : i32
    %c0_i32_0 = arith.constant 0 : i32
    %c0_i32_1 = arith.constant 0 : i32
    return %c0_i32, %c0_i32_0 : i32, i32
  }
  func.func @transform_3(%arg0: i32) -> (i32, i32) {
    %c0_i32 = arith.constant 0 : i32
    %c0_i32_0 = arith.constant 0 : i32
    %c0_i32_1 = arith.constant 0 : i32
    return %c0_i32, %c0_i32_0 : i32, i32
  }
  func.func @transform_4(%arg0: i32) -> (i32, i32, i32) {
    %c0_i32 = arith.constant 0 : i32
    %c0_i32_0 = arith.constant 0 : i32
    %c0_i32_1 = arith.constant 0 : i32
    %c0_i32_2 = arith.constant 0 : i32
    return %c0_i32, %c0_i32_0, %c0_i32_1 : i32, i32, i32
  }
  func.func @transform_5(%arg0: i32) -> (i32, i32, i32) {
    %c0_i32 = arith.constant 0 : i32
    %c0_i32_0 = arith.constant 0 : i32
    %c0_i32_1 = arith.constant 0 : i32
    %c0_i32_2 = arith.constant 0 : i32
    return %c0_i32, %c0_i32_0, %c0_i32_1 : i32, i32, i32
  }
  func.func @transform_6(%arg0: i32) -> (i32, i32, i32) {
    %c0_i32 = arith.constant 0 : i32
    %c0_i32_0 = arith.constant 0 : i32
    %c0_i32_1 = arith.constant 0 : i32
    %c0_i32_2 = arith.constant 0 : i32
    return %c0_i32, %c0_i32_0, %c0_i32_1 : i32, i32, i32
  }
  func.func @transform_7(%arg0: i32) -> (i32, i32, i32) {
    %c0_i32 = arith.constant 0 : i32
    %c0_i32_0 = arith.constant 0 : i32
    %c0_i32_1 = arith.constant 0 : i32
    %c0_i32_2 = arith.constant 0 : i32
    return %c0_i32, %c0_i32_0, %c0_i32_1 : i32, i32, i32
  }
  func.func @transform_8(%arg0: i32) -> (i32, i32, i32) {
    %c0_i32 = arith.constant 0 : i32
    %c0_i32_0 = arith.constant 0 : i32
    %c0_i32_1 = arith.constant 0 : i32
    %c0_i32_2 = arith.constant 0 : i32
    return %c0_i32, %c0_i32_0, %c0_i32_1 : i32, i32, i32
  }
  func.func @transform_9(%arg0: i32) -> (i32, i32, i32) {
    %c0_i32 = arith.constant 0 : i32
    %c0_i32_0 = arith.constant 0 : i32
    %c0_i32_1 = arith.constant 0 : i32
    %c0_i32_2 = arith.constant 0 : i32
    return %c0_i32, %c0_i32_0, %c0_i32_1 : i32, i32, i32
  }
  func.func @transform_10(%arg0: i32) -> (i32, i32, i32) {
    %c0_i32 = arith.constant 0 : i32
    %c0_i32_0 = arith.constant 0 : i32
    %c0_i32_1 = arith.constant 0 : i32
    %c0_i32_2 = arith.constant 0 : i32
    return %c0_i32, %c0_i32_0, %c0_i32_1 : i32, i32, i32
  }
  func.func @transform_11(%arg0: i32) -> (i32, i32, i32) {
    %c0_i32 = arith.constant 0 : i32
    %c0_i32_0 = arith.constant 0 : i32
    %c0_i32_1 = arith.constant 0 : i32
    %c0_i32_2 = arith.constant 0 : i32
    return %c0_i32, %c0_i32_0, %c0_i32_1 : i32, i32, i32
  }
  func.func @transform_12(%arg0: i32) -> (i32, i32, i32) {
    %c0_i32 = arith.constant 0 : i32
    %c0_i32_0 = arith.constant 0 : i32
    %c0_i32_1 = arith.constant 0 : i32
    %c0_i32_2 = arith.constant 0 : i32
    return %c0_i32, %c0_i32_0, %c0_i32_1 : i32, i32, i32
  }
  func.func @transform_13(%arg0: i32) -> (i32, i32, i32) {
    %c0_i32 = arith.constant 0 : i32
    %c0_i32_0 = arith.constant 0 : i32
    %c0_i32_1 = arith.constant 0 : i32
    %c0_i32_2 = arith.constant 0 : i32
    return %c0_i32, %c0_i32_0, %c0_i32_1 : i32, i32, i32
  }
  func.func @transform_14(%arg0: i32) -> (i32, i32, i32) {
    %c0_i32 = arith.constant 0 : i32
    %c0_i32_0 = arith.constant 0 : i32
    %c0_i32_1 = arith.constant 0 : i32
    %c0_i32_2 = arith.constant 0 : i32
    return %c0_i32, %c0_i32_0, %c0_i32_1 : i32, i32, i32
  }
  func.func @transform_15(%arg0: i32) -> (i32, i32, i32) {
    %c0_i32 = arith.constant 0 : i32
    %c0_i32_0 = arith.constant 0 : i32
    %c0_i32_1 = arith.constant 0 : i32
    %c0_i32_2 = arith.constant 0 : i32
    return %c0_i32, %c0_i32_0, %c0_i32_1 : i32, i32, i32
  }
  func.func @transform_16(%arg0: i32) -> (i32, i32) {
    %c0_i32 = arith.constant 0 : i32
    %c0_i32_0 = arith.constant 0 : i32
    %c0_i32_1 = arith.constant 0 : i32
    return %c0_i32, %c0_i32_0 : i32, i32
  }
  func.func @transform_17(%arg0: i32) -> (i32, i32) {
    %c0_i32 = arith.constant 0 : i32
    %c0_i32_0 = arith.constant 0 : i32
    %c0_i32_1 = arith.constant 0 : i32
    return %c0_i32, %c0_i32_0 : i32, i32
  }
  func.func @transform_18(%arg0: i32) -> (i32, i32) {
    %c0_i32 = arith.constant 0 : i32
    %c0_i32_0 = arith.constant 0 : i32
    %c0_i32_1 = arith.constant 0 : i32
    return %c0_i32, %c0_i32_0 : i32, i32
  }
  func.func @transform_19(%arg0: i32) -> (i32, i32) {
    %c0_i32 = arith.constant 0 : i32
    %c0_i32_0 = arith.constant 0 : i32
    %c0_i32_1 = arith.constant 0 : i32
    return %c0_i32, %c0_i32_0 : i32, i32
  }
  func.func @transform_20(%arg0: i32) -> (i32, i32) {
    %c0_i32 = arith.constant 0 : i32
    %c0_i32_0 = arith.constant 0 : i32
    %c0_i32_1 = arith.constant 0 : i32
    return %c0_i32, %c0_i32_0 : i32, i32
  }
  func.func @transform_21(%arg0: i32) -> (i32, i32, i32, i32) {
    %c0_i32 = arith.constant 0 : i32
    %c0_i32_0 = arith.constant 0 : i32
    %c0_i32_1 = arith.constant 0 : i32
    %c0_i32_2 = arith.constant 0 : i32
    %c0_i32_3 = arith.constant 0 : i32
    return %c0_i32, %c0_i32_0, %c0_i32_1, %c0_i32_2 : i32, i32, i32, i32
  }
  func.func @transform_22(%arg0: i32) -> (i32, i32, i32, i32) {
    %c0_i32 = arith.constant 0 : i32
    %c0_i32_0 = arith.constant 0 : i32
    %c0_i32_1 = arith.constant 0 : i32
    %c0_i32_2 = arith.constant 0 : i32
    %c0_i32_3 = arith.constant 0 : i32
    return %c0_i32, %c0_i32_0, %c0_i32_1, %c0_i32_2 : i32, i32, i32, i32
  }
}

</mosaic_0001>

<llo_original>
// kernel: transformer_base_forward.1
$region0: #{transformer_base_forward.1}
  #allocation0 [shape = 'u32[]', space=smem, size = 0x4, offset = 0x4, fixed_abs, tag = 'smem constant byte address 0x4 - core index']
  #allocation1 [shape = 'u32[72,128]{1,0:T(1,128)}', space=vmem, size = 0x9000, scoped, tag = 'internal scratch']
  #allocation2 [shape = 'f32[16,32]{1,0:T(8,128)}', space=vmem, size = 0x2000, scoped, tag = 'scratch operand']
  %s0 = inlined_call_operand.vmem [shape: f32[2,8,32], index: 0, kind: input, shape index: {}]
  %s1 = inlined_call_operand.vmem [shape: f32[2,1,8], index: 1, kind: input, shape index: {}]
  %s2 = inlined_call_operand.vmem [shape: f32[1,32], index: 2, kind: input, shape index: {}]
  %s3 = inlined_call_operand.vmem [shape: f32[1,32], index: 3, kind: input, shape index: {}]
  %s4 = inlined_call_operand.vmem [shape: f32[2,32,96], index: 4, kind: input, shape index: {}]
  %s5 = inlined_call_operand.vmem [shape: f32[2,1,96], index: 5, kind: input, shape index: {}]
  %s6 = inlined_call_operand.vmem [shape: f32[2,32,32], index: 6, kind: input, shape index: {}]
  %s7 = inlined_call_operand.vmem [shape: f32[2,1,32], index: 7, kind: input, shape index: {}]
  %s8 = inlined_call_operand.vmem [shape: f32[2,1,32], index: 8, kind: input, shape index: {}]
  %s9 = inlined_call_operand.vmem [shape: f32[2,1,32], index: 9, kind: input, shape index: {}]
  %s10 = inlined_call_operand.vmem [shape: f32[2,32,64], index: 10, kind: input, shape index: {}]
  %s11 = inlined_call_operand.vmem [shape: f32[2,1,64], index: 11, kind: input, shape index: {}]
  %s12 = inlined_call_operand.vmem [shape: f32[2,64,32], index: 12, kind: input, shape index: {}]
  %s13 = inlined_call_operand.vmem [shape: f32[2,1,32], index: 13, kind: input, shape index: {}]
  %s14 = inlined_call_operand.vmem [shape: f32[2,1,32], index: 14, kind: input, shape index: {}]
  %s15 = inlined_call_operand.vmem [shape: f32[2,1,32], index: 15, kind: input, shape index: {}]
  %s16 = inlined_call_operand.vmem [shape: f32[32,8], index: 16, kind: input, shape index: {}]
  %s17 = inlined_call_operand.vmem [shape: f32[1,8], index: 17, kind: input, shape index: {}]
  %s18 = inlined_call_operand.vmem [shape: f32[8,3], index: 18, kind: input, shape index: {}]
  %s19 = inlined_call_operand.vmem [shape: f32[1,3], index: 19, kind: input, shape index: {}]
  %s20 = inlined_call_operand.hbm [shape: f32[2,3], index: 20, kind: output, shape index: {0}]
  %s21 = inlined_call_operand.hbm [shape: f32[2,4,8,8], index: 21, kind: output, shape index: {1}]
  %s22 = inlined_call_operand.hbm [shape: f32[2,4,8,8], index: 22, kind: output, shape index: {2}]
  %23 = xla_tuple %s20, %s21, %s22
  %s24 = sld [smem:[#allocation0]]
  $region106: #{transformer_base_forward.1} parent=0
    _
  %s26 = ssub.s32 1, %s24
  %s27 = scalar_select 0, %s26, %s24
  $region1: #{transformer_base_forward.1} parent=0
    #allocation3 [shape = 'u8[1024]{0}', space=vmem, size = 0x400, scoped, tag = 'output window, operand 0, single buffered']
    #allocation4 [shape = 's32[1]{0}', space=sflag, size = 0x4, scoped, tag = 'scoped memory for transformer_base_forward.1']
    #allocation5 [shape = 'u8[32768]{0}', space=vmem, size = 0x8000, scoped, tag = 'output window, operand 1, single buffered']
    #allocation6 [shape = 's32[1]{0}', space=sflag, size = 0x4, scoped, tag = 'scoped memory for transformer_base_forward.1']
    #allocation7 [shape = 'u8[32768]{0}', space=vmem, size = 0x8000, scoped, tag = 'output window, operand 2, single buffered']
    %28 = vsyncpa [#allocation4], 0
    %29 = vsyncpa [#allocation6], 0
    // Predicated region
    $region2: #{transformer_base_forward.1} parent=1 // pred_check
      _
    $region3: #{transformer_base_forward.1} parent=1 // pred_check_branch
      %31 = sbr.rel (0) target = $region5
    $region4: #{transformer_base_forward.1} parent=1 // pred_region
      _
    $region5: #{transformer_base_forward.1} parent=1 // pred_fallthru
      _
    // Predicated region
    $region6: #{transformer_base_forward.1} parent=1 // pred_check
      _
    $region7: #{transformer_base_forward.1} parent=1 // pred_check_branch
      %33 = sbr.rel (0) target = $region9
    $region8: #{transformer_base_forward.1} parent=1 // pred_region
      _
    $region9: #{transformer_base_forward.1} parent=1 // pred_fallthru
      _
    // Predicated region
    $region10: #{transformer_base_forward.1} parent=1 // pred_check
      _
    $region11: #{transformer_base_forward.1} parent=1 // pred_check_branch
      %35 = sbr.rel (0) target = $region13
    $region12: #{transformer_base_forward.1} parent=1 // pred_region
      _
    $region13: #{transformer_base_forward.1} parent=1 // pred_fallthru
      _
    // Predicated region
    $region14: #{transformer_base_forward.1} parent=1 // pred_check
      _
    $region15: #{transformer_base_forward.1} parent=1 // pred_check_branch
      %37 = sbr.rel (0) target = $region17
    $region16: #{transformer_base_forward.1} parent=1 // pred_region
      _
    $region17: #{transformer_base_forward.1} parent=1 // pred_fallthru
      _
    // Predicated region
    $region18: #{transformer_base_forward.1} parent=1 // pred_check
      _
    $region19: #{transformer_base_forward.1} parent=1 // pred_check_branch
      %39 = sbr.rel (0) target = $region21
    $region20: #{transformer_base_forward.1} parent=1 // pred_region
      _
    $region21: #{transformer_base_forward.1} parent=1 // pred_fallthru
      _
    // Predicated region
    $region22: #{transformer_base_forward.1} parent=1 // pred_check
      _
    $region23: #{transformer_base_forward.1} parent=1 // pred_check_branch
      %41 = sbr.rel (0) target = $region25
    $region24: #{transformer_base_forward.1} parent=1 // pred_region
      _
    $region25: #{transformer_base_forward.1} parent=1 // pred_fallthru
      _
    // Predicated region
    $region26: #{transformer_base_forward.1} parent=1 // pred_check
      _
    $region27: #{transformer_base_forward.1} parent=1 // pred_check_branch
      %43 = sbr.rel (0) target = $region29
    $region28: #{transformer_base_forward.1} parent=1 // pred_region
      _
    $region29: #{transformer_base_forward.1} parent=1 // pred_fallthru
      _
    // Predicated region
    $region30: #{transformer_base_forward.1} parent=1 // pred_check
      _
    $region31: #{transformer_base_forward.1} parent=1 // pred_check_branch
      %45 = sbr.rel (0) target = $region33
    $region32: #{transformer_base_forward.1} parent=1 // pred_region
      _
    $region33: #{transformer_base_forward.1} parent=1 // pred_fallthru
      _
    // Predicated region
    $region34: #{transformer_base_forward.1} parent=1 // pred_check
      _
    $region35: #{transformer_base_forward.1} parent=1 // pred_check_branch
      %47 = sbr.rel (0) target = $region37
    $region36: #{transformer_base_forward.1} parent=1 // pred_region
      _
    $region37: #{transformer_base_forward.1} parent=1 // pred_fallthru
      _
    // Predicated region
    $region38: #{transformer_base_forward.1} parent=1 // pred_check
      _
    $region39: #{transformer_base_forward.1} parent=1 // pred_check_branch
      %49 = sbr.rel (0) target = $region41
    $region40: #{transformer_base_forward.1} parent=1 // pred_region
      _
    $region41: #{transformer_base_forward.1} parent=1 // pred_fallthru
      _
    // Predicated region
    $region42: #{transformer_base_forward.1} parent=1 // pred_check
      _
    $region43: #{transformer_base_forward.1} parent=1 // pred_check_branch
      %51 = sbr.rel (0) target = $region45
    $region44: #{transformer_base_forward.1} parent=1 // pred_region
      _
    $region45: #{transformer_base_forward.1} parent=1 // pred_fallthru
      _
    // Predicated region
    $region46: #{transformer_base_forward.1} parent=1 // pred_check
      _
    $region47: #{transformer_base_forward.1} parent=1 // pred_check_branch
      %53 = sbr.rel (0) target = $region49
    $region48: #{transformer_base_forward.1} parent=1 // pred_region
      _
    $region49: #{transformer_base_forward.1} parent=1 // pred_fallthru
      _
    // Predicated region
    $region50: #{transformer_base_forward.1} parent=1 // pred_check
      _
    $region51: #{transformer_base_forward.1} parent=1 // pred_check_branch
      %55 = sbr.rel (0) target = $region53
    $region52: #{transformer_base_forward.1} parent=1 // pred_region
      _
    $region53: #{transformer_base_forward.1} parent=1 // pred_fallthru
      _
    // Predicated region
    $region54: #{transformer_base_forward.1} parent=1 // pred_check
      _
    $region55: #{transformer_base_forward.1} parent=1 // pred_check_branch
      %57 = sbr.rel (0) target = $region57
    $region56: #{transformer_base_forward.1} parent=1 // pred_region
      _
    $region57: #{transformer_base_forward.1} parent=1 // pred_fallthru
      _
    // Predicated region
    $region58: #{transformer_base_forward.1} parent=1 // pred_check
      _
    $region59: #{transformer_base_forward.1} parent=1 // pred_check_branch
      %59 = sbr.rel (0) target = $region61
    $region60: #{transformer_base_forward.1} parent=1 // pred_region
      _
    $region61: #{transformer_base_forward.1} parent=1 // pred_fallthru
      _
    // Predicated region
    $region62: #{transformer_base_forward.1} parent=1 // pred_check
      _
    $region63: #{transformer_base_forward.1} parent=1 // pred_check_branch
      %61 = sbr.rel (0) target = $region65
    $region64: #{transformer_base_forward.1} parent=1 // pred_region
      _
    $region65: #{transformer_base_forward.1} parent=1 // pred_fallthru
      _
    // Predicated region
    $region66: #{transformer_base_forward.1} parent=1 // pred_check
      _
    $region67: #{transformer_base_forward.1} parent=1 // pred_check_branch
      %63 = sbr.rel (0) target = $region69
    $region68: #{transformer_base_forward.1} parent=1 // pred_region
      _
    $region69: #{transformer_base_forward.1} parent=1 // pred_fallthru
      _
    // Predicated region
    $region70: #{transformer_base_forward.1} parent=1 // pred_check
      _
    $region71: #{transformer_base_forward.1} parent=1 // pred_check_branch
      %65 = sbr.rel (0) target = $region73
    $region72: #{transformer_base_forward.1} parent=1 // pred_region
      _
    $region73: #{transformer_base_forward.1} parent=1 // pred_fallthru
      _
    // Predicated region
    $region74: #{transformer_base_forward.1} parent=1 // pred_check
      _
    $region75: #{transformer_base_forward.1} parent=1 // pred_check_branch
      %67 = sbr.rel (0) target = $region77
    $region76: #{transformer_base_forward.1} parent=1 // pred_region
      _
    $region77: #{transformer_base_forward.1} parent=1 // pred_fallthru
      _
    // Predicated region
    $region78: #{transformer_base_forward.1} parent=1 // pred_check
      _
    $region79: #{transformer_base_forward.1} parent=1 // pred_check_branch
      %69 = sbr.rel (0) target = $region81
    $region80: #{transformer_base_forward.1} parent=1 // pred_region
      _
    $region81: #{transformer_base_forward.1} parent=1 // pred_fallthru
      _
    %v70 = vld [vmem:[%s0] sm:$0xff]
    %v71 = vld [vmem:[%s0 + $0x8] sm:$0xff]
    %v72 = vld [vmem:[%s2] sm:$0x1]
    %v73 = vld [vmem:[%s3] sm:$0x1]
    %vm74 = vcmask 261120
    %v75 = vsel %vm74, %v70, 0.0
    %76 = vadd.xlane.f32.xlu0 %v75
    %v77 = vpop.xlane.xlu0 %76
    %v78 = vsel %vm74, %v71, 0.0
    %79 = vadd.xlane.f32.xlu0 %v78
    %v80 = vpop.xlane.xlu0 %79
    %v81 = vrcp.pop 32.0
    %v82 = vmul.f32 32.0, %v81
    %v83 = vsub.f32 1.0, %v82
    %v84 = vmul.f32 %v81, %v83
    %v85 = vadd.f32 %v81, %v84
    %vm86 = vweird.f32 %v81
    %v87 = vsel %vm86, %v81, %v85
    %v88 = vmul.f32 %v77, %v87
    %v89 = vmul.f32 %v80, %v87
    %v90 = vsub.f32 %v70, %v88
    %v91 = vsub.f32 %v71, %v89
    %v92 = vmul.f32 %v90, %v90
    %v93 = vmul.f32 %v91, %v91
    %v94 = vsel %vm74, %v92, 0.0
    %95 = vadd.xlane.f32.xlu0 %v94
    %v96 = vpop.xlane.xlu0 %95
    %v97 = vsel %vm74, %v93, 0.0
    %98 = vadd.xlane.f32.xlu0 %v97
    %v99 = vpop.xlane.xlu0 %98
    %v100 = vmul.f32 %v96, %v87
    %v101 = vmul.f32 %v99, %v87
    %v102 = vadd.f32 %v100, 1e-12
    %v103 = vadd.f32 %v101, 1e-12
    %v104 = vrsqrt.pop %v102
    %v105 = vmul.f32 %v104, %v102
    %v106 = vmul.f32 %v105, %v104
    %v107 = vmul.f32 0.5, %v106
    %v108 = vsub.f32 1.5, %v107
    %v109 = vmul.f32 %v104, %v108
    %vm110 = vweird.f32 %v102
    %vm111 = vweird.f32 %v104
    %vm112 = vmor %vm110, %vm111
    %v113 = vsel %vm112, %v104, %v109
    %v114 = vrsqrt.pop %v103
    %v115 = vmul.f32 %v114, %v103
    %v116 = vmul.f32 %v115, %v114
    %v117 = vmul.f32 0.5, %v116
    %v118 = vsub.f32 1.5, %v117
    %v119 = vmul.f32 %v114, %v118
    %vm120 = vweird.f32 %v103
    %vm121 = vweird.f32 %v114
    %vm122 = vmor %vm120, %vm121
    %v123 = vsel %vm122, %v114, %v119
    %v124 = vmul.f32 %v90, %v113
    %v125 = vmul.f32 %v91, %v123
    %v127 = vperm.slane %v72, 0
    %v129 = vmul.f32 %v124, %v127
    %v130 = vmul.f32 %v125, %v127
    %v132 = vperm.slane %v73, 0
    %v134 = vadd.f32 %v129, %v132
    %v135 = vadd.f32 %v130, %v132
    %v136 = vld [vmem:[%s1] sm:$0x1]
    %v137 = vld [vmem:[%s1 + $0x1] sm:$0x1]
    %v138 = vld [vmem:[%s4] sm:$0xff]
    %v139 = vld [vmem:[%s4 + $0x8] sm:$0xff]
    %v140 = vld [vmem:[%s4 + $0x10] sm:$0xff]
    %v141 = vld [vmem:[%s4 + $0x18] sm:$0xff]
    %v142 = vld [vmem:[%s5] sm:$0x1]
    %v144 = vperm.slane %v142, 0
    %v147 = vsel %vm74, %v134, 0
    %v150 = vsel %vm74, %v135, 0
    %152 = vmatpush.msra.mxu0 0.0
    %153 = vmatpush.msra.mxu0 0.0
    %154 = vmatpush.msra.mxu0 0.0
    %155 = vmatpush.msra.mxu0 0.0
    %156 = vmatpush.msra.mxu0 0.0
    %157 = vmatpush.msra.mxu0 0.0
    %158 = vmatpush.msra.mxu0 0.0
    %159 = vmatpush.msra.mxu0 0.0
    %160 = vmatpush.msra.mxu0 0.0
    %161 = vmatpush.msra.mxu0 0.0
    %162 = vmatpush.msra.mxu0 0.0
    %163 = vmatpush.msra.mxu0 0.0
    %164 = vmatpush.msra.mxu0 %v141
    %165 = vmatpush.msra.mxu0 %v140
    %166 = vmatpush.msra.mxu0 %v139
    %167 = vmatpush.msra.mxu0 %v138
    %168 = vmatmul.f32.gmra.mxu0 %v147
    %v169 = vpop.f32.mrf.mxu0
    %v170 = vadd.f32 %v144, %v169
    %171 = vmatmul.f32.gmra.mxu0 %v150
    %v172 = vpop.f32.mrf.mxu0
    %v173 = vadd.f32 %v144, %v172
    %174 = vdwg.mxu0
    %176 = vrot.lane.b32.xlu0 %v170, 96
    %v177 = vpop.permute.xlu0 %176
    %vm178 = vcmask 64512
    %v179 = vsel %vm178, %v170, 0
    %v181 = vsel %vm178, %v177, 0
    %183 = vmatpush.xpose.msra.mxu0 0.0
    %184 = vmatpush.xpose.msra.mxu0 0.0
    %185 = vmatpush.xpose.msra.mxu0 0.0
    %186 = vmatpush.xpose.msra.mxu0 0.0
    %187 = vmatpush.xpose.msra.mxu0 0.0
    %188 = vmatpush.xpose.msra.mxu0 0.0
    %189 = vmatpush.xpose.msra.mxu0 0.0
    %190 = vmatpush.xpose.msra.mxu0 0.0
    %191 = vmatpush.xpose.msra.mxu0 0.0
    %192 = vmatpush.xpose.msra.mxu0 0.0
    %193 = vmatpush.xpose.msra.mxu0 0.0
    %194 = vmatpush.xpose.msra.mxu0 0.0
    %195 = vmatpush.xpose.msra.mxu0 0.0
    %196 = vmatpush.xpose.msra.mxu0 0.0
    %197 = vmatpush.xpose.msra.mxu0 0.0
    %198 = vmatpush.xpose.msra.mxu0 %v181
    %199 = vmatmul.f32.gmra.mxu0 %v179
    %v200 = vpop.f32.mrf.mxu0
    %v201 = vadd.f32 0.0, %v200
    %202 = vdwg.mxu0
    %204 = vrot.lane.b32.xlu0 %v173, 96
    %v205 = vpop.permute.xlu0 %204
    %v206 = vsel %vm178, %v173, 0
    %v208 = vsel %vm178, %v205, 0
    %210 = vmatpush.xpose.msra.mxu0 0.0
    %211 = vmatpush.xpose.msra.mxu0 0.0
    %212 = vmatpush.xpose.msra.mxu0 0.0
    %213 = vmatpush.xpose.msra.mxu0 0.0
    %214 = vmatpush.xpose.msra.mxu0 0.0
    %215 = vmatpush.xpose.msra.mxu0 0.0
    %216 = vmatpush.xpose.msra.mxu0 0.0
    %217 = vmatpush.xpose.msra.mxu0 0.0
    %218 = vmatpush.xpose.msra.mxu0 0.0
    %219 = vmatpush.xpose.msra.mxu0 0.0
    %220 = vmatpush.xpose.msra.mxu0 0.0
    %221 = vmatpush.xpose.msra.mxu0 0.0
    %222 = vmatpush.xpose.msra.mxu0 0.0
    %223 = vmatpush.xpose.msra.mxu0 0.0
    %224 = vmatpush.xpose.msra.mxu0 0.0
    %225 = vmatpush.xpose.msra.mxu0 %v208
    %226 = vmatmul.f32.gmra.mxu0 %v206
    %v227 = vpop.f32.mrf.mxu0
    %v228 = vadd.f32 0.0, %v227
    %229 = vdwg.mxu0
    %v230 = vmul.f32 %v201, 0.35355338
    %v231 = vmul.f32 %v228, 0.35355338
    %v234 = vperm.slane %v136, 0
    %v235 = vperm.slane %v137, 0
    %v238 = vadd.f32 %v230, %v234
    %v239 = vadd.f32 %v231, %v235
    %v240 = vsel %vm178, %v238, -inf
    %241 = vmax.xlane.f32.xlu0 %v240
    %v242 = vpop.xlane.xlu0 %241
    %v243 = vsel %vm178, %v239, -inf
    %244 = vmax.xlane.f32.xlu0 %v243
    %v245 = vpop.xlane.xlu0 %244
    %v246 = vsub.f32 %v238, %v242
    %v247 = vsub.f32 %v239, %v245
    %v248 = vmul.f32 %v246, 1.442695
    %v249 = vpow.pop %v248
    %v250 = vmul.f32 %v247, 1.442695
    %v251 = vpow.pop %v250
    %v252 = vsel %vm178, %v249, 0.0
    %253 = vadd.xlane.f32.xlu0 %v252
    %v254 = vpop.xlane.xlu0 %253
    %v255 = vsel %vm178, %v251, 0.0
    %256 = vadd.xlane.f32.xlu0 %v255
    %v257 = vpop.xlane.xlu0 %256
    %v258 = vrcp.pop %v254
    %v259 = vrcp.pop %v257
    %v260 = vmul.f32 %v249, %v258
    %v261 = vmul.f32 %v251, %v259
    %262 = vst.msk [vmem:[#allocation5] sm:$0xff] %vm178, %v260
    %263 = vst.msk [vmem:[#allocation5 + $0x20] sm:$0xff] %vm178, %v261
    %264 = vrot.lane.b32.xlu0 %v170, 64
    %v265 = vpop.permute.xlu0 %264
    %v268 = vsel %vm178, %v260, 0
    %270 = vmatpush.msra.mxu0 0.0
    %271 = vmatpush.msra.mxu0 0.0
    %272 = vmatpush.msra.mxu0 0.0
    %273 = vmatpush.msra.mxu0 0.0
    %274 = vmatpush.msra.mxu0 0.0
    %275 = vmatpush.msra.mxu0 0.0
    %276 = vmatpush.msra.mxu0 0.0
    %277 = vmatpush.msra.mxu0 0.0
    %278 = vmatpush.msra.mxu0 0.0
    %279 = vmatpush.msra.mxu0 0.0
    %280 = vmatpush.msra.mxu0 0.0
    %281 = vmatpush.msra.mxu0 0.0
    %282 = vmatpush.msra.mxu0 0.0
    %283 = vmatpush.msra.mxu0 0.0
    %284 = vmatpush.msra.mxu0 0.0
    %285 = vmatpush.msra.mxu0 %v265
    %286 = vmatmul.f32.gmra.mxu0 %v268
    %v287 = vpop.f32.mrf.mxu0
    %v288 = vadd.f32 0.0, %v287
    %289 = vdwg.mxu0
    %290 = vrot.lane.b32.xlu0 %v173, 64
    %v291 = vpop.permute.xlu0 %290
    %v294 = vsel %vm178, %v261, 0
    %296 = vmatpush.msra.mxu0 0.0
    %297 = vmatpush.msra.mxu0 0.0
    %298 = vmatpush.msra.mxu0 0.0
    %299 = vmatpush.msra.mxu0 0.0
    %300 = vmatpush.msra.mxu0 0.0
    %301 = vmatpush.msra.mxu0 0.0
    %302 = vmatpush.msra.mxu0 0.0
    %303 = vmatpush.msra.mxu0 0.0
    %304 = vmatpush.msra.mxu0 0.0
    %305 = vmatpush.msra.mxu0 0.0
    %306 = vmatpush.msra.mxu0 0.0
    %307 = vmatpush.msra.mxu0 0.0
    %308 = vmatpush.msra.mxu0 0.0
    %309 = vmatpush.msra.mxu0 0.0
    %310 = vmatpush.msra.mxu0 0.0
    %311 = vmatpush.msra.mxu0 %v291
    %312 = vmatmul.f32.gmra.mxu0 %v294
    %v313 = vpop.f32.mrf.mxu0
    %v314 = vadd.f32 0.0, %v313
    %315 = vdwg.mxu0
    %316 = vst.msk [vmem:[#allocation2] sm:$0xff] %vm178, %v288
    %317 = vst.msk [vmem:[#allocation2 + $0x8] sm:$0xff] %vm178, %v314
    %318 = vrot.lane.b32.xlu0 %v170, 120
    %v319 = vpop.permute.xlu0 %318
    %320 = vrot.lane.b32.xlu0 %v170, 88
    %v321 = vpop.permute.xlu0 %320
    %v322 = vsel %vm178, %v319, 0
    %v324 = vsel %vm178, %v321, 0
    %326 = vmatpush.xpose.msra.mxu0 0.0
    %327 = vmatpush.xpose.msra.mxu0 0.0
    %328 = vmatpush.xpose.msra.mxu0 0.0
    %329 = vmatpush.xpose.msra.mxu0 0.0
    %330 = vmatpush.xpose.msra.mxu0 0.0
    %331 = vmatpush.xpose.msra.mxu0 0.0
    %332 = vmatpush.xpose.msra.mxu0 0.0
    %333 = vmatpush.xpose.msra.mxu0 0.0
    %334 = vmatpush.xpose.msra.mxu0 0.0
    %335 = vmatpush.xpose.msra.mxu0 0.0
    %336 = vmatpush.xpose.msra.mxu0 0.0
    %337 = vmatpush.xpose.msra.mxu0 0.0
    %338 = vmatpush.xpose.msra.mxu0 0.0
    %339 = vmatpush.xpose.msra.mxu0 0.0
    %340 = vmatpush.xpose.msra.mxu0 0.0
    %341 = vmatpush.xpose.msra.mxu0 %v324
    %342 = vmatmul.f32.gmra.mxu0 %v322
    %v343 = vpop.f32.mrf.mxu0
    %v344 = vadd.f32 0.0, %v343
    %345 = vdwg.mxu0
    %346 = vrot.lane.b32.xlu0 %v173, 120
    %v347 = vpop.permute.xlu0 %346
    %348 = vrot.lane.b32.xlu0 %v173, 88
    %v349 = vpop.permute.xlu0 %348
    %v350 = vsel %vm178, %v347, 0
    %v352 = vsel %vm178, %v349, 0
    %354 = vmatpush.xpose.msra.mxu0 0.0
    %355 = vmatpush.xpose.msra.mxu0 0.0
    %356 = vmatpush.xpose.msra.mxu0 0.0
    %357 = vmatpush.xpose.msra.mxu0 0.0
    %358 = vmatpush.xpose.msra.mxu0 0.0
    %359 = vmatpush.xpose.msra.mxu0 0.0
    %360 = vmatpush.xpose.msra.mxu0 0.0
    %361 = vmatpush.xpose.msra.mxu0 0.0
    %362 = vmatpush.xpose.msra.mxu0 0.0
    %363 = vmatpush.xpose.msra.mxu0 0.0
    %364 = vmatpush.xpose.msra.mxu0 0.0
    %365 = vmatpush.xpose.msra.mxu0 0.0
    %366 = vmatpush.xpose.msra.mxu0 0.0
    %367 = vmatpush.xpose.msra.mxu0 0.0
    %368 = vmatpush.xpose.msra.mxu0 0.0
    %369 = vmatpush.xpose.msra.mxu0 %v352
    %370 = vmatmul.f32.gmra.mxu0 %v350
    %v371 = vpop.f32.mrf.mxu0
    %v372 = vadd.f32 0.0, %v371
    %373 = vdwg.mxu0
    %v374 = vmul.f32 %v344, 0.35355338
    %v375 = vmul.f32 %v372, 0.35355338
    %v376 = vadd.f32 %v374, %v234
    %v377 = vadd.f32 %v375, %v235
    %v378 = vsel %vm178, %v376, -inf
    %379 = vmax.xlane.f32.xlu0 %v378
    %v380 = vpop.xlane.xlu0 %379
    %v381 = vsel %vm178, %v377, -inf
    %382 = vmax.xlane.f32.xlu0 %v381
    %v383 = vpop.xlane.xlu0 %382
    %v384 = vsub.f32 %v376, %v380
    %v385 = vsub.f32 %v377, %v383
    %v386 = vmul.f32 %v384, 1.442695
    %v387 = vpow.pop %v386
    %v388 = vmul.f32 %v385, 1.442695
    %v389 = vpow.pop %v388
    %v390 = vsel %vm178, %v387, 0.0
    %391 = vadd.xlane.f32.xlu0 %v390
    %v392 = vpop.xlane.xlu0 %391
    %v393 = vsel %vm178, %v389, 0.0
    %394 = vadd.xlane.f32.xlu0 %v393
    %v395 = vpop.xlane.xlu0 %394
    %v396 = vrcp.pop %v392
    %v397 = vrcp.pop %v395
    %v398 = vmul.f32 %v387, %v396
    %v399 = vmul.f32 %v389, %v397
    %s400 = scalar_lea.vmem [#allocation5], 8
    %401 = vst.msk [vmem:[%s400] sm:$0xff] %vm178, %v398
    %402 = vst.msk [vmem:[%s400 + $0x20] sm:$0xff] %vm178, %v399
    %403 = vrot.lane.b32.xlu0 %v170, 56
    %v404 = vpop.permute.xlu0 %403
    %v407 = vsel %vm178, %v398, 0
    %409 = vmatpush.msra.mxu0 0.0
    %410 = vmatpush.msra.mxu0 0.0
    %411 = vmatpush.msra.mxu0 0.0
    %412 = vmatpush.msra.mxu0 0.0
    %413 = vmatpush.msra.mxu0 0.0
    %414 = vmatpush.msra.mxu0 0.0
    %415 = vmatpush.msra.mxu0 0.0
    %416 = vmatpush.msra.mxu0 0.0
    %417 = vmatpush.msra.mxu0 0.0
    %418 = vmatpush.msra.mxu0 0.0
    %419 = vmatpush.msra.mxu0 0.0
    %420 = vmatpush.msra.mxu0 0.0
    %421 = vmatpush.msra.mxu0 0.0
    %422 = vmatpush.msra.mxu0 0.0
    %423 = vmatpush.msra.mxu0 0.0
    %424 = vmatpush.msra.mxu0 %v404
    %425 = vmatmul.f32.gmra.mxu0 %v407
    %v426 = vpop.f32.mrf.mxu0
    %v427 = vadd.f32 0.0, %v426
    %428 = vdwg.mxu0
    %429 = vrot.lane.b32.xlu0 %v173, 56
    %v430 = vpop.permute.xlu0 %429
    %v433 = vsel %vm178, %v399, 0
    %435 = vmatpush.msra.mxu0 0.0
    %436 = vmatpush.msra.mxu0 0.0
    %437 = vmatpush.msra.mxu0 0.0
    %438 = vmatpush.msra.mxu0 0.0
    %439 = vmatpush.msra.mxu0 0.0
    %440 = vmatpush.msra.mxu0 0.0
    %441 = vmatpush.msra.mxu0 0.0
    %442 = vmatpush.msra.mxu0 0.0
    %443 = vmatpush.msra.mxu0 0.0
    %444 = vmatpush.msra.mxu0 0.0
    %445 = vmatpush.msra.mxu0 0.0
    %446 = vmatpush.msra.mxu0 0.0
    %447 = vmatpush.msra.mxu0 0.0
    %448 = vmatpush.msra.mxu0 0.0
    %449 = vmatpush.msra.mxu0 0.0
    %450 = vmatpush.msra.mxu0 %v430
    %451 = vmatmul.f32.gmra.mxu0 %v433
    %v452 = vpop.f32.mrf.mxu0
    %v453 = vadd.f32 0.0, %v452
    %454 = vdwg.mxu0
    %457 = vrot.lane.b32.xlu0 %v427, 8
    %v458 = vpop.permute.xlu0 %457
    %459 = vrot.lane.b32.xlu0 %v453, 8
    %v460 = vpop.permute.xlu0 %459
    %vm463 = vcmask 130112
    %464 = vst.msk [vmem:[#allocation2] sm:$0xff] %vm463, %v458
    %465 = vst.msk [vmem:[#allocation2 + $0x8] sm:$0xff] %vm463, %v460
    %466 = vrot.lane.b32.xlu0 %v170, 112
    %v467 = vpop.permute.xlu0 %466
    %468 = vrot.lane.b32.xlu0 %v170, 80
    %v469 = vpop.permute.xlu0 %468
    %v470 = vsel %vm178, %v467, 0
    %v472 = vsel %vm178, %v469, 0
    %474 = vmatpush.xpose.msra.mxu0 0.0
    %475 = vmatpush.xpose.msra.mxu0 0.0
    %476 = vmatpush.xpose.msra.mxu0 0.0
    %477 = vmatpush.xpose.msra.mxu0 0.0
    %478 = vmatpush.xpose.msra.mxu0 0.0
    %479 = vmatpush.xpose.msra.mxu0 0.0
    %480 = vmatpush.xpose.msra.mxu0 0.0
    %481 = vmatpush.xpose.msra.mxu0 0.0
    %482 = vmatpush.xpose.msra.mxu0 0.0
    %483 = vmatpush.xpose.msra.mxu0 0.0
    %484 = vmatpush.xpose.msra.mxu0 0.0
    %485 = vmatpush.xpose.msra.mxu0 0.0
    %486 = vmatpush.xpose.msra.mxu0 0.0
    %487 = vmatpush.xpose.msra.mxu0 0.0
    %488 = vmatpush.xpose.msra.mxu0 0.0
    %489 = vmatpush.xpose.msra.mxu0 %v472
    %490 = vmatmul.f32.gmra.mxu0 %v470
    %v491 = vpop.f32.mrf.mxu0
    %v492 = vadd.f32 0.0, %v491
    %493 = vdwg.mxu0
    %494 = vrot.lane.b32.xlu0 %v173, 112
    %v495 = vpop.permute.xlu0 %494
    %496 = vrot.lane.b32.xlu0 %v173, 80
    %v497 = vpop.permute.xlu0 %496
    %v498 = vsel %vm178, %v495, 0
    %v500 = vsel %vm178, %v497, 0
    %502 = vmatpush.xpose.msra.mxu0 0.0
    %503 = vmatpush.xpose.msra.mxu0 0.0
    %504 = vmatpush.xpose.msra.mxu0 0.0
    %505 = vmatpush.xpose.msra.mxu0 0.0
    %506 = vmatpush.xpose.msra.mxu0 0.0
    %507 = vmatpush.xpose.msra.mxu0 0.0
    %508 = vmatpush.xpose.msra.mxu0 0.0
    %509 = vmatpush.xpose.msra.mxu0 0.0
    %510 = vmatpush.xpose.msra.mxu0 0.0
    %511 = vmatpush.xpose.msra.mxu0 0.0
    %512 = vmatpush.xpose.msra.mxu0 0.0
    %513 = vmatpush.xpose.msra.mxu0 0.0
    %514 = vmatpush.xpose.msra.mxu0 0.0
    %515 = vmatpush.xpose.msra.mxu0 0.0
    %516 = vmatpush.xpose.msra.mxu0 0.0
    %517 = vmatpush.xpose.msra.mxu0 %v500
    %518 = vmatmul.f32.gmra.mxu0 %v498
    %v519 = vpop.f32.mrf.mxu0
    %v520 = vadd.f32 0.0, %v519
    %521 = vdwg.mxu0
    %v522 = vmul.f32 %v492, 0.35355338
    %v523 = vmul.f32 %v520, 0.35355338
    %v524 = vadd.f32 %v522, %v234
    %v525 = vadd.f32 %v523, %v235
    %v526 = vsel %vm178, %v524, -inf
    %527 = vmax.xlane.f32.xlu0 %v526
    %v528 = vpop.xlane.xlu0 %527
    %v529 = vsel %vm178, %v525, -inf
    %530 = vmax.xlane.f32.xlu0 %v529
    %v531 = vpop.xlane.xlu0 %530
    %v532 = vsub.f32 %v524, %v528
    %v533 = vsub.f32 %v525, %v531
    %v534 = vmul.f32 %v532, 1.442695
    %v535 = vpow.pop %v534
    %v536 = vmul.f32 %v533, 1.442695
    %v537 = vpow.pop %v536
    %v538 = vsel %vm178, %v535, 0.0
    %539 = vadd.xlane.f32.xlu0 %v538
    %v540 = vpop.xlane.xlu0 %539
    %v541 = vsel %vm178, %v537, 0.0
    %542 = vadd.xlane.f32.xlu0 %v541
    %v543 = vpop.xlane.xlu0 %542
    %v544 = vrcp.pop %v540
    %v545 = vrcp.pop %v543
    %v546 = vmul.f32 %v535, %v544
    %v547 = vmul.f32 %v537, %v545
    %s548 = scalar_lea.vmem [#allocation5], 16
    %549 = vst.msk [vmem:[%s548] sm:$0xff] %vm178, %v546
    %550 = vst.msk [vmem:[%s548 + $0x20] sm:$0xff] %vm178, %v547
    %551 = vrot.lane.b32.xlu0 %v170, 48
    %v552 = vpop.permute.xlu0 %551
    %v555 = vsel %vm178, %v546, 0
    %557 = vmatpush.msra.mxu0 0.0
    %558 = vmatpush.msra.mxu0 0.0
    %559 = vmatpush.msra.mxu0 0.0
    %560 = vmatpush.msra.mxu0 0.0
    %561 = vmatpush.msra.mxu0 0.0
    %562 = vmatpush.msra.mxu0 0.0
    %563 = vmatpush.msra.mxu0 0.0
    %564 = vmatpush.msra.mxu0 0.0
    %565 = vmatpush.msra.mxu0 0.0
    %566 = vmatpush.msra.mxu0 0.0
    %567 = vmatpush.msra.mxu0 0.0
    %568 = vmatpush.msra.mxu0 0.0
    %569 = vmatpush.msra.mxu0 0.0
    %570 = vmatpush.msra.mxu0 0.0
    %571 = vmatpush.msra.mxu0 0.0
    %572 = vmatpush.msra.mxu0 %v552
    %573 = vmatmul.f32.gmra.mxu0 %v555
    %v574 = vpop.f32.mrf.mxu0
    %v575 = vadd.f32 0.0, %v574
    %576 = vdwg.mxu0
    %577 = vrot.lane.b32.xlu0 %v173, 48
    %v578 = vpop.permute.xlu0 %577
    %v581 = vsel %vm178, %v547, 0
    %583 = vmatpush.msra.mxu0 0.0
    %584 = vmatpush.msra.mxu0 0.0
    %585 = vmatpush.msra.mxu0 0.0
    %586 = vmatpush.msra.mxu0 0.0
    %587 = vmatpush.msra.mxu0 0.0
    %588 = vmatpush.msra.mxu0 0.0
    %589 = vmatpush.msra.mxu0 0.0
    %590 = vmatpush.msra.mxu0 0.0
    %591 = vmatpush.msra.mxu0 0.0
    %592 = vmatpush.msra.mxu0 0.0
    %593 = vmatpush.msra.mxu0 0.0
    %594 = vmatpush.msra.mxu0 0.0
    %595 = vmatpush.msra.mxu0 0.0
    %596 = vmatpush.msra.mxu0 0.0
    %597 = vmatpush.msra.mxu0 0.0
    %598 = vmatpush.msra.mxu0 %v578
    %599 = vmatmul.f32.gmra.mxu0 %v581
    %v600 = vpop.f32.mrf.mxu0
    %v601 = vadd.f32 0.0, %v600
    %602 = vdwg.mxu0
    %605 = vrot.lane.b32.xlu0 %v575, 16
    %v606 = vpop.permute.xlu0 %605
    %607 = vrot.lane.b32.xlu0 %v601, 16
    %v608 = vpop.permute.xlu0 %607
    %vm611 = vcmask 195712
    %612 = vst.msk [vmem:[#allocation2] sm:$0xff] %vm611, %v606
    %613 = vst.msk [vmem:[#allocation2 + $0x8] sm:$0xff] %vm611, %v608
    %614 = vrot.lane.b32.xlu0 %v170, 104
    %v615 = vpop.permute.xlu0 %614
    %616 = vrot.lane.b32.xlu0 %v170, 72
    %v617 = vpop.permute.xlu0 %616
    %v618 = vsel %vm178, %v615, 0
    %v620 = vsel %vm178, %v617, 0
    %622 = vmatpush.xpose.msra.mxu0 0.0
    %623 = vmatpush.xpose.msra.mxu0 0.0
    %624 = vmatpush.xpose.msra.mxu0 0.0
    %625 = vmatpush.xpose.msra.mxu0 0.0
    %626 = vmatpush.xpose.msra.mxu0 0.0
    %627 = vmatpush.xpose.msra.mxu0 0.0
    %628 = vmatpush.xpose.msra.mxu0 0.0
    %629 = vmatpush.xpose.msra.mxu0 0.0
    %630 = vmatpush.xpose.msra.mxu0 0.0
    %631 = vmatpush.xpose.msra.mxu0 0.0
    %632 = vmatpush.xpose.msra.mxu0 0.0
    %633 = vmatpush.xpose.msra.mxu0 0.0
    %634 = vmatpush.xpose.msra.mxu0 0.0
    %635 = vmatpush.xpose.msra.mxu0 0.0
    %636 = vmatpush.xpose.msra.mxu0 0.0
    %637 = vmatpush.xpose.msra.mxu0 %v620
    %638 = vmatmul.f32.gmra.mxu0 %v618
    %v639 = vpop.f32.mrf.mxu0
    %v640 = vadd.f32 0.0, %v639
    %641 = vdwg.mxu0
    %642 = vrot.lane.b32.xlu0 %v173, 104
    %v643 = vpop.permute.xlu0 %642
    %644 = vrot.lane.b32.xlu0 %v173, 72
    %v645 = vpop.permute.xlu0 %644
    %v646 = vsel %vm178, %v643, 0
    %v648 = vsel %vm178, %v645, 0
    %650 = vmatpush.xpose.msra.mxu0 0.0
    %651 = vmatpush.xpose.msra.mxu0 0.0
    %652 = vmatpush.xpose.msra.mxu0 0.0
    %653 = vmatpush.xpose.msra.mxu0 0.0
    %654 = vmatpush.xpose.msra.mxu0 0.0
    %655 = vmatpush.xpose.msra.mxu0 0.0
    %656 = vmatpush.xpose.msra.mxu0 0.0
    %657 = vmatpush.xpose.msra.mxu0 0.0
    %658 = vmatpush.xpose.msra.mxu0 0.0
    %659 = vmatpush.xpose.msra.mxu0 0.0
    %660 = vmatpush.xpose.msra.mxu0 0.0
    %661 = vmatpush.xpose.msra.mxu0 0.0
    %662 = vmatpush.xpose.msra.mxu0 0.0
    %663 = vmatpush.xpose.msra.mxu0 0.0
    %664 = vmatpush.xpose.msra.mxu0 0.0
    %665 = vmatpush.xpose.msra.mxu0 %v648
    %666 = vmatmul.f32.gmra.mxu0 %v646
    %v667 = vpop.f32.mrf.mxu0
    %v668 = vadd.f32 0.0, %v667
    %669 = vdwg.mxu0
    %v670 = vmul.f32 %v640, 0.35355338
    %v671 = vmul.f32 %v668, 0.35355338
    %v672 = vadd.f32 %v670, %v234
    %v673 = vadd.f32 %v671, %v235
    %v674 = vsel %vm178, %v672, -inf
    %675 = vmax.xlane.f32.xlu0 %v674
    %v676 = vpop.xlane.xlu0 %675
    %v677 = vsel %vm178, %v673, -inf
    %678 = vmax.xlane.f32.xlu0 %v677
    %v679 = vpop.xlane.xlu0 %678
    %v680 = vsub.f32 %v672, %v676
    %v681 = vsub.f32 %v673, %v679
    %v682 = vmul.f32 %v680, 1.442695
    %v683 = vpow.pop %v682
    %v684 = vmul.f32 %v681, 1.442695
    %v685 = vpow.pop %v684
    %v686 = vsel %vm178, %v683, 0.0
    %687 = vadd.xlane.f32.xlu0 %v686
    %v688 = vpop.xlane.xlu0 %687
    %v689 = vsel %vm178, %v685, 0.0
    %690 = vadd.xlane.f32.xlu0 %v689
    %v691 = vpop.xlane.xlu0 %690
    %v692 = vrcp.pop %v688
    %v693 = vrcp.pop %v691
    %v694 = vmul.f32 %v683, %v692
    %v695 = vmul.f32 %v685, %v693
    %s696 = scalar_lea.vmem [#allocation5], 24
    %697 = vst.msk [vmem:[%s696] sm:$0xff] %vm178, %v694
    %698 = vst.msk [vmem:[%s696 + $0x20] sm:$0xff] %vm178, %v695
    %699 = vrot.lane.b32.xlu0 %v170, 40
    %v700 = vpop.permute.xlu0 %699
    %v703 = vsel %vm178, %v694, 0
    %705 = vmatpush.msra.mxu0 0.0
    %706 = vmatpush.msra.mxu0 0.0
    %707 = vmatpush.msra.mxu0 0.0
    %708 = vmatpush.msra.mxu0 0.0
    %709 = vmatpush.msra.mxu0 0.0
    %710 = vmatpush.msra.mxu0 0.0
    %711 = vmatpush.msra.mxu0 0.0
    %712 = vmatpush.msra.mxu0 0.0
    %713 = vmatpush.msra.mxu0 0.0
    %714 = vmatpush.msra.mxu0 0.0
    %715 = vmatpush.msra.mxu0 0.0
    %716 = vmatpush.msra.mxu0 0.0
    %717 = vmatpush.msra.mxu0 0.0
    %718 = vmatpush.msra.mxu0 0.0
    %719 = vmatpush.msra.mxu0 0.0
    %720 = vmatpush.msra.mxu0 %v700
    %721 = vmatmul.f32.gmra.mxu0 %v703
    %v722 = vpop.f32.mrf.mxu0
    %v723 = vadd.f32 0.0, %v722
    %724 = vdwg.mxu0
    %725 = vrot.lane.b32.xlu0 %v173, 40
    %v726 = vpop.permute.xlu0 %725
    %v729 = vsel %vm178, %v695, 0
    %731 = vmatpush.msra.mxu0 0.0
    %732 = vmatpush.msra.mxu0 0.0
    %733 = vmatpush.msra.mxu0 0.0
    %734 = vmatpush.msra.mxu0 0.0
    %735 = vmatpush.msra.mxu0 0.0
    %736 = vmatpush.msra.mxu0 0.0
    %737 = vmatpush.msra.mxu0 0.0
    %738 = vmatpush.msra.mxu0 0.0
    %739 = vmatpush.msra.mxu0 0.0
    %740 = vmatpush.msra.mxu0 0.0
    %741 = vmatpush.msra.mxu0 0.0
    %742 = vmatpush.msra.mxu0 0.0
    %743 = vmatpush.msra.mxu0 0.0
    %744 = vmatpush.msra.mxu0 0.0
    %745 = vmatpush.msra.mxu0 0.0
    %746 = vmatpush.msra.mxu0 %v726
    %747 = vmatmul.f32.gmra.mxu0 %v729
    %v748 = vpop.f32.mrf.mxu0
    %v749 = vadd.f32 0.0, %v748
    %750 = vdwg.mxu0
    %753 = vrot.lane.b32.xlu0 %v723, 24
    %v754 = vpop.permute.xlu0 %753
    %755 = vrot.lane.b32.xlu0 %v749, 24
    %v756 = vpop.permute.xlu0 %755
    %vm759 = vcmask 261312
    %760 = vst.msk [vmem:[#allocation2] sm:$0xff] %vm759, %v754
    %761 = vst.msk [vmem:[#allocation2 + $0x8] sm:$0xff] %vm759, %v756
    %v762 = vld [vmem:[#allocation2] sm:$0xff]
    %v763 = vld [vmem:[#allocation2 + $0x8] sm:$0xff]
    %v764 = vld [vmem:[%s6] sm:$0xff]
    %v765 = vld [vmem:[%s6 + $0x8] sm:$0xff]
    %v766 = vld [vmem:[%s6 + $0x10] sm:$0xff]
    %v767 = vld [vmem:[%s6 + $0x18] sm:$0xff]
    %v768 = vld [vmem:[%s7] sm:$0x1]
    %v770 = vperm.slane %v768, 0
    %v773 = vsel %vm74, %v762, 0
    %v776 = vsel %vm74, %v763, 0
    %778 = vmatpush.msra.mxu0 0.0
    %779 = vmatpush.msra.mxu0 0.0
    %780 = vmatpush.msra.mxu0 0.0
    %781 = vmatpush.msra.mxu0 0.0
    %782 = vmatpush.msra.mxu0 0.0
    %783 = vmatpush.msra.mxu0 0.0
    %784 = vmatpush.msra.mxu0 0.0
    %785 = vmatpush.msra.mxu0 0.0
    %786 = vmatpush.msra.mxu0 0.0
    %787 = vmatpush.msra.mxu0 0.0
    %788 = vmatpush.msra.mxu0 0.0
    %789 = vmatpush.msra.mxu0 0.0
    %790 = vmatpush.msra.mxu0 %v767
    %791 = vmatpush.msra.mxu0 %v766
    %792 = vmatpush.msra.mxu0 %v765
    %793 = vmatpush.msra.mxu0 %v764
    %794 = vmatmul.f32.gmra.mxu0 %v773
    %v795 = vpop.f32.mrf.mxu0
    %v796 = vadd.f32 %v770, %v795
    %797 = vmatmul.f32.gmra.mxu0 %v776
    %v798 = vpop.f32.mrf.mxu0
    %v799 = vadd.f32 %v770, %v798
    %800 = vdwg.mxu0
    %v801 = vadd.f32 %v134, %v796
    %v802 = vadd.f32 %v135, %v799
    %v803 = vld [vmem:[%s8] sm:$0x1]
    %v804 = vld [vmem:[%s9] sm:$0x1]
    %v805 = vsel %vm74, %v801, 0.0
    %806 = vadd.xlane.f32.xlu0 %v805
    %v807 = vpop.xlane.xlu0 %806
    %v808 = vsel %vm74, %v802, 0.0
    %809 = vadd.xlane.f32.xlu0 %v808
    %v810 = vpop.xlane.xlu0 %809
    %v811 = vmul.f32 %v807, %v87
    %v812 = vmul.f32 %v810, %v87
    %v813 = vsub.f32 %v801, %v811
    %v814 = vsub.f32 %v802, %v812
    %v815 = vmul.f32 %v813, %v813
    %v816 = vmul.f32 %v814, %v814
    %v817 = vsel %vm74, %v815, 0.0
    %818 = vadd.xlane.f32.xlu0 %v817
    %v819 = vpop.xlane.xlu0 %818
    %v820 = vsel %vm74, %v816, 0.0
    %821 = vadd.xlane.f32.xlu0 %v820
    %v822 = vpop.xlane.xlu0 %821
    %v823 = vmul.f32 %v819, %v87
    %v824 = vmul.f32 %v822, %v87
    %v825 = vadd.f32 %v823, 1e-12
    %v826 = vadd.f32 %v824, 1e-12
    %v827 = vrsqrt.pop %v825
    %v828 = vmul.f32 %v827, %v825
    %v829 = vmul.f32 %v828, %v827
    %v830 = vmul.f32 0.5, %v829
    %v831 = vsub.f32 1.5, %v830
    %v832 = vmul.f32 %v827, %v831
    %vm833 = vweird.f32 %v825
    %vm834 = vweird.f32 %v827
    %vm835 = vmor %vm833, %vm834
    %v836 = vsel %vm835, %v827, %v832
    %v837 = vrsqrt.pop %v826
    %v838 = vmul.f32 %v837, %v826
    %v839 = vmul.f32 %v838, %v837
    %v840 = vmul.f32 0.5, %v839
    %v841 = vsub.f32 1.5, %v840
    %v842 = vmul.f32 %v837, %v841
    %vm843 = vweird.f32 %v826
    %vm844 = vweird.f32 %v837
    %vm845 = vmor %vm843, %vm844
    %v846 = vsel %vm845, %v837, %v842
    %v847 = vmul.f32 %v813, %v836
    %v848 = vmul.f32 %v814, %v846
    %v850 = vperm.slane %v803, 0
    %v852 = vmul.f32 %v847, %v850
    %v853 = vmul.f32 %v848, %v850
    %v855 = vperm.slane %v804, 0
    %v857 = vadd.f32 %v852, %v855
    %v858 = vadd.f32 %v853, %v855
    %v859 = vld [vmem:[%s10] sm:$0xff]
    %v860 = vld [vmem:[%s10 + $0x8] sm:$0xff]
    %v861 = vld [vmem:[%s10 + $0x10] sm:$0xff]
    %v862 = vld [vmem:[%s10 + $0x18] sm:$0xff]
    %v863 = vld [vmem:[%s11] sm:$0x1]
    %v865 = vperm.slane %v863, 0
    %v868 = vsel %vm74, %v857, 0
    %v871 = vsel %vm74, %v858, 0
    %873 = vmatpush.msra.mxu0 0.0
    %874 = vmatpush.msra.mxu0 0.0
    %875 = vmatpush.msra.mxu0 0.0
    %876 = vmatpush.msra.mxu0 0.0
    %877 = vmatpush.msra.mxu0 0.0
    %878 = vmatpush.msra.mxu0 0.0
    %879 = vmatpush.msra.mxu0 0.0
    %880 = vmatpush.msra.mxu0 0.0
    %881 = vmatpush.msra.mxu0 0.0
    %882 = vmatpush.msra.mxu0 0.0
    %883 = vmatpush.msra.mxu0 0.0
    %884 = vmatpush.msra.mxu0 0.0
    %885 = vmatpush.msra.mxu0 %v862
    %886 = vmatpush.msra.mxu0 %v861
    %887 = vmatpush.msra.mxu0 %v860
    %888 = vmatpush.msra.mxu0 %v859
    %889 = vmatmul.f32.gmra.mxu0 %v868
    %v890 = vpop.f32.mrf.mxu0
    %v891 = vadd.f32 %v865, %v890
    %892 = vmatmul.f32.gmra.mxu0 %v871
    %v893 = vpop.f32.mrf.mxu0
    %v894 = vadd.f32 %v865, %v893
    %895 = vdwg.mxu0
    %v896 = vmul.f32 %v891, 0.5
    %v897 = vmul.f32 %v894, 0.5
    %v898 = vmul.f32 %v891, 0.044715
    %v899 = vmul.f32 %v894, 0.044715
    %v900 = vmul.f32 %v898, %v891
    %v901 = vmul.f32 %v899, %v894
    %v902 = vmul.f32 %v900, %v891
    %v903 = vmul.f32 %v901, %v894
    %v904 = vadd.f32 %v891, %v902
    %v905 = vadd.f32 %v894, %v903
    %v906 = vmul.f32 %v904, 0.7978846
    %v907 = vmul.f32 %v905, 0.7978846
    %v908 = vtanh.pop %v906
    %v909 = vtanh.pop %v907
    %v910 = vadd.f32 %v908, 1.0
    %v911 = vadd.f32 %v909, 1.0
    %v912 = vmul.f32 %v896, %v910
    %v913 = vmul.f32 %v897, %v911
    %v914 = vld [vmem:[%s12] sm:$0xff]
    %v915 = vld [vmem:[%s12 + $0x8] sm:$0xff]
    %v916 = vld [vmem:[%s12 + $0x10] sm:$0xff]
    %v917 = vld [vmem:[%s12 + $0x18] sm:$0xff]
    %v918 = vld [vmem:[%s12 + $0x20] sm:$0xff]
    %v919 = vld [vmem:[%s12 + $0x28] sm:$0xff]
    %v920 = vld [vmem:[%s12 + $0x30] sm:$0xff]
    %v921 = vld [vmem:[%s12 + $0x38] sm:$0xff]
    %v922 = vld [vmem:[%s13] sm:$0x1]
    %v924 = vperm.slane %v922, 0
    %vm926 = vcmask 523264
    %v928 = vsel %vm926, %v912, 0
    %v931 = vsel %vm926, %v913, 0
    %933 = vmatpush.msra.mxu0 0.0
    %934 = vmatpush.msra.mxu0 0.0
    %935 = vmatpush.msra.mxu0 0.0
    %936 = vmatpush.msra.mxu0 0.0
    %937 = vmatpush.msra.mxu0 0.0
    %938 = vmatpush.msra.mxu0 0.0
    %939 = vmatpush.msra.mxu0 0.0
    %940 = vmatpush.msra.mxu0 0.0
    %941 = vmatpush.msra.mxu0 %v921
    %942 = vmatpush.msra.mxu0 %v920
    %943 = vmatpush.msra.mxu0 %v919
    %944 = vmatpush.msra.mxu0 %v918
    %945 = vmatpush.msra.mxu0 %v917
    %946 = vmatpush.msra.mxu0 %v916
    %947 = vmatpush.msra.mxu0 %v915
    %948 = vmatpush.msra.mxu0 %v914
    %949 = vmatmul.f32.gmra.mxu0 %v928
    %v950 = vpop.f32.mrf.mxu0
    %v951 = vadd.f32 %v924, %v950
    %952 = vmatmul.f32.gmra.mxu0 %v931
    %v953 = vpop.f32.mrf.mxu0
    %v954 = vadd.f32 %v924, %v953
    %955 = vdwg.mxu0
    %v956 = vadd.f32 %v857, %v951
    %v957 = vadd.f32 %v858, %v954
    %v958 = vld [vmem:[%s14] sm:$0x1]
    %v959 = vld [vmem:[%s15] sm:$0x1]
    %v960 = vsel %vm74, %v956, 0.0
    %961 = vadd.xlane.f32.xlu0 %v960
    %v962 = vpop.xlane.xlu0 %961
    %v963 = vsel %vm74, %v957, 0.0
    %964 = vadd.xlane.f32.xlu0 %v963
    %v965 = vpop.xlane.xlu0 %964
    %v966 = vmul.f32 %v962, %v87
    %v967 = vmul.f32 %v965, %v87
    %v968 = vsub.f32 %v956, %v966
    %v969 = vsub.f32 %v957, %v967
    %v970 = vmul.f32 %v968, %v968
    %v971 = vmul.f32 %v969, %v969
    %v972 = vsel %vm74, %v970, 0.0
    %973 = vadd.xlane.f32.xlu0 %v972
    %v974 = vpop.xlane.xlu0 %973
    %v975 = vsel %vm74, %v971, 0.0
    %976 = vadd.xlane.f32.xlu0 %v975
    %v977 = vpop.xlane.xlu0 %976
    %v978 = vmul.f32 %v974, %v87
    %v979 = vmul.f32 %v977, %v87
    %v980 = vadd.f32 %v978, 1e-12
    %v981 = vadd.f32 %v979, 1e-12
    %v982 = vrsqrt.pop %v980
    %v983 = vmul.f32 %v982, %v980
    %v984 = vmul.f32 %v983, %v982
    %v985 = vmul.f32 0.5, %v984
    %v986 = vsub.f32 1.5, %v985
    %v987 = vmul.f32 %v982, %v986
    %vm988 = vweird.f32 %v980
    %vm989 = vweird.f32 %v982
    %vm990 = vmor %vm988, %vm989
    %v991 = vsel %vm990, %v982, %v987
    %v992 = vrsqrt.pop %v981
    %v993 = vmul.f32 %v992, %v981
    %v994 = vmul.f32 %v993, %v992
    %v995 = vmul.f32 0.5, %v994
    %v996 = vsub.f32 1.5, %v995
    %v997 = vmul.f32 %v992, %v996
    %vm998 = vweird.f32 %v981
    %vm999 = vweird.f32 %v992
    %vm1000 = vmor %vm998, %vm999
    %v1001 = vsel %vm1000, %v992, %v997
    %v1002 = vmul.f32 %v968, %v991
    %v1003 = vmul.f32 %v969, %v1001
    %v1005 = vperm.slane %v958, 0
    %v1007 = vmul.f32 %v1002, %v1005
    %v1008 = vmul.f32 %v1003, %v1005
    %v1010 = vperm.slane %v959, 0
    %v1012 = vadd.f32 %v1007, %v1010
    %v1013 = vadd.f32 %v1008, %v1010
    %s1014 = scalar_lea.vmem %s4, 32
    %v1015 = vld [vmem:[%s1014] sm:$0xff]
    %v1016 = vld [vmem:[%s1014 + $0x8] sm:$0xff]
    %v1017 = vld [vmem:[%s1014 + $0x10] sm:$0xff]
    %v1018 = vld [vmem:[%s1014 + $0x18] sm:$0xff]
    %s1019 = scalar_lea.vmem %s5, 1
    %v1020 = vld [vmem:[%s1019] sm:$0x1]
    %v1022 = vperm.slane %v1020, 0
    %v1025 = vsel %vm74, %v1012, 0
    %v1028 = vsel %vm74, %v1013, 0
    %1030 = vmatpush.msra.mxu0 0.0
    %1031 = vmatpush.msra.mxu0 0.0
    %1032 = vmatpush.msra.mxu0 0.0
    %1033 = vmatpush.msra.mxu0 0.0
    %1034 = vmatpush.msra.mxu0 0.0
    %1035 = vmatpush.msra.mxu0 0.0
    %1036 = vmatpush.msra.mxu0 0.0
    %1037 = vmatpush.msra.mxu0 0.0
    %1038 = vmatpush.msra.mxu0 0.0
    %1039 = vmatpush.msra.mxu0 0.0
    %1040 = vmatpush.msra.mxu0 0.0
    %1041 = vmatpush.msra.mxu0 0.0
    %1042 = vmatpush.msra.mxu0 %v1018
    %1043 = vmatpush.msra.mxu0 %v1017
    %1044 = vmatpush.msra.mxu0 %v1016
    %1045 = vmatpush.msra.mxu0 %v1015
    %1046 = vmatmul.f32.gmra.mxu0 %v1025
    %v1047 = vpop.f32.mrf.mxu0
    %v1048 = vadd.f32 %v1022, %v1047
    %1049 = vmatmul.f32.gmra.mxu0 %v1028
    %v1050 = vpop.f32.mrf.mxu0
    %v1051 = vadd.f32 %v1022, %v1050
    %1052 = vdwg.mxu0
    %1054 = vrot.lane.b32.xlu0 %v1048, 96
    %v1055 = vpop.permute.xlu0 %1054
    %v1056 = vsel %vm178, %v1048, 0
    %v1058 = vsel %vm178, %v1055, 0
    %1060 = vmatpush.xpose.msra.mxu0 0.0
    %1061 = vmatpush.xpose.msra.mxu0 0.0
    %1062 = vmatpush.xpose.msra.mxu0 0.0
    %1063 = vmatpush.xpose.msra.mxu0 0.0
    %1064 = vmatpush.xpose.msra.mxu0 0.0
    %1065 = vmatpush.xpose.msra.mxu0 0.0
    %1066 = vmatpush.xpose.msra.mxu0 0.0
    %1067 = vmatpush.xpose.msra.mxu0 0.0
    %1068 = vmatpush.xpose.msra.mxu0 0.0
    %1069 = vmatpush.xpose.msra.mxu0 0.0
    %1070 = vmatpush.xpose.msra.mxu0 0.0
    %1071 = vmatpush.xpose.msra.mxu0 0.0
    %1072 = vmatpush.xpose.msra.mxu0 0.0
    %1073 = vmatpush.xpose.msra.mxu0 0.0
    %1074 = vmatpush.xpose.msra.mxu0 0.0
    %1075 = vmatpush.xpose.msra.mxu0 %v1058
    %1076 = vmatmul.f32.gmra.mxu0 %v1056
    %v1077 = vpop.f32.mrf.mxu0
    %v1078 = vadd.f32 0.0, %v1077
    %1079 = vdwg.mxu0
    %1081 = vrot.lane.b32.xlu0 %v1051, 96
    %v1082 = vpop.permute.xlu0 %1081
    %v1083 = vsel %vm178, %v1051, 0
    %v1085 = vsel %vm178, %v1082, 0
    %1087 = vmatpush.xpose.msra.mxu0 0.0
    %1088 = vmatpush.xpose.msra.mxu0 0.0
    %1089 = vmatpush.xpose.msra.mxu0 0.0
    %1090 = vmatpush.xpose.msra.mxu0 0.0
    %1091 = vmatpush.xpose.msra.mxu0 0.0
    %1092 = vmatpush.xpose.msra.mxu0 0.0
    %1093 = vmatpush.xpose.msra.mxu0 0.0
    %1094 = vmatpush.xpose.msra.mxu0 0.0
    %1095 = vmatpush.xpose.msra.mxu0 0.0
    %1096 = vmatpush.xpose.msra.mxu0 0.0
    %1097 = vmatpush.xpose.msra.mxu0 0.0
    %1098 = vmatpush.xpose.msra.mxu0 0.0
    %1099 = vmatpush.xpose.msra.mxu0 0.0
    %1100 = vmatpush.xpose.msra.mxu0 0.0
    %1101 = vmatpush.xpose.msra.mxu0 0.0
    %1102 = vmatpush.xpose.msra.mxu0 %v1085
    %1103 = vmatmul.f32.gmra.mxu0 %v1083
    %v1104 = vpop.f32.mrf.mxu0
    %v1105 = vadd.f32 0.0, %v1104
    %1106 = vdwg.mxu0
    %v1107 = vmul.f32 %v1078, 0.35355338
    %v1108 = vmul.f32 %v1105, 0.35355338
    %v1109 = vadd.f32 %v1107, %v234
    %v1110 = vadd.f32 %v1108, %v235
    %v1111 = vsel %vm178, %v1109, -inf
    %1112 = vmax.xlane.f32.xlu0 %v1111
    %v1113 = vpop.xlane.xlu0 %1112
    %v1114 = vsel %vm178, %v1110, -inf
    %1115 = vmax.xlane.f32.xlu0 %v1114
    %v1116 = vpop.xlane.xlu0 %1115
    %v1117 = vsub.f32 %v1109, %v1113
    %v1118 = vsub.f32 %v1110, %v1116
    %v1119 = vmul.f32 %v1117, 1.442695
    %v1120 = vpow.pop %v1119
    %v1121 = vmul.f32 %v1118, 1.442695
    %v1122 = vpow.pop %v1121
    %v1123 = vsel %vm178, %v1120, 0.0
    %1124 = vadd.xlane.f32.xlu0 %v1123
    %v1125 = vpop.xlane.xlu0 %1124
    %v1126 = vsel %vm178, %v1122, 0.0
    %1127 = vadd.xlane.f32.xlu0 %v1126
    %v1128 = vpop.xlane.xlu0 %1127
    %v1129 = vrcp.pop %v1125
    %v1130 = vrcp.pop %v1128
    %v1131 = vmul.f32 %v1120, %v1129
    %v1132 = vmul.f32 %v1122, %v1130
    %1133 = vst.msk [vmem:[#allocation7] sm:$0xff] %vm178, %v1131
    %1134 = vst.msk [vmem:[#allocation7 + $0x20] sm:$0xff] %vm178, %v1132
    %1135 = vrot.lane.b32.xlu0 %v1048, 64
    %v1136 = vpop.permute.xlu0 %1135
    %v1139 = vsel %vm178, %v1131, 0
    %1141 = vmatpush.msra.mxu0 0.0
    %1142 = vmatpush.msra.mxu0 0.0
    %1143 = vmatpush.msra.mxu0 0.0
    %1144 = vmatpush.msra.mxu0 0.0
    %1145 = vmatpush.msra.mxu0 0.0
    %1146 = vmatpush.msra.mxu0 0.0
    %1147 = vmatpush.msra.mxu0 0.0
    %1148 = vmatpush.msra.mxu0 0.0
    %1149 = vmatpush.msra.mxu0 0.0
    %1150 = vmatpush.msra.mxu0 0.0
    %1151 = vmatpush.msra.mxu0 0.0
    %1152 = vmatpush.msra.mxu0 0.0
    %1153 = vmatpush.msra.mxu0 0.0
    %1154 = vmatpush.msra.mxu0 0.0
    %1155 = vmatpush.msra.mxu0 0.0
    %1156 = vmatpush.msra.mxu0 %v1136
    %1157 = vmatmul.f32.gmra.mxu0 %v1139
    %v1158 = vpop.f32.mrf.mxu0
    %v1159 = vadd.f32 0.0, %v1158
    %1160 = vdwg.mxu0
    %1161 = vrot.lane.b32.xlu0 %v1051, 64
    %v1162 = vpop.permute.xlu0 %1161
    %v1165 = vsel %vm178, %v1132, 0
    %1167 = vmatpush.msra.mxu0 0.0
    %1168 = vmatpush.msra.mxu0 0.0
    %1169 = vmatpush.msra.mxu0 0.0
    %1170 = vmatpush.msra.mxu0 0.0
    %1171 = vmatpush.msra.mxu0 0.0
    %1172 = vmatpush.msra.mxu0 0.0
    %1173 = vmatpush.msra.mxu0 0.0
    %1174 = vmatpush.msra.mxu0 0.0
    %1175 = vmatpush.msra.mxu0 0.0
    %1176 = vmatpush.msra.mxu0 0.0
    %1177 = vmatpush.msra.mxu0 0.0
    %1178 = vmatpush.msra.mxu0 0.0
    %1179 = vmatpush.msra.mxu0 0.0
    %1180 = vmatpush.msra.mxu0 0.0
    %1181 = vmatpush.msra.mxu0 0.0
    %1182 = vmatpush.msra.mxu0 %v1162
    %1183 = vmatmul.f32.gmra.mxu0 %v1165
    %v1184 = vpop.f32.mrf.mxu0
    %v1185 = vadd.f32 0.0, %v1184
    %1186 = vdwg.mxu0
    %1187 = vst.msk [vmem:[#allocation2] sm:$0xff] %vm178, %v1159
    %1188 = vst.msk [vmem:[#allocation2 + $0x8] sm:$0xff] %vm178, %v1185
    %1189 = vrot.lane.b32.xlu0 %v1048, 120
    %v1190 = vpop.permute.xlu0 %1189
    %1191 = vrot.lane.b32.xlu0 %v1048, 88
    %v1192 = vpop.permute.xlu0 %1191
    %v1193 = vsel %vm178, %v1190, 0
    %v1195 = vsel %vm178, %v1192, 0
    %1197 = vmatpush.xpose.msra.mxu0 0.0
    %1198 = vmatpush.xpose.msra.mxu0 0.0
    %1199 = vmatpush.xpose.msra.mxu0 0.0
    %1200 = vmatpush.xpose.msra.mxu0 0.0
    %1201 = vmatpush.xpose.msra.mxu0 0.0
    %1202 = vmatpush.xpose.msra.mxu0 0.0
    %1203 = vmatpush.xpose.msra.mxu0 0.0
    %1204 = vmatpush.xpose.msra.mxu0 0.0
    %1205 = vmatpush.xpose.msra.mxu0 0.0
    %1206 = vmatpush.xpose.msra.mxu0 0.0
    %1207 = vmatpush.xpose.msra.mxu0 0.0
    %1208 = vmatpush.xpose.msra.mxu0 0.0
    %1209 = vmatpush.xpose.msra.mxu0 0.0
    %1210 = vmatpush.xpose.msra.mxu0 0.0
    %1211 = vmatpush.xpose.msra.mxu0 0.0
    %1212 = vmatpush.xpose.msra.mxu0 %v1195
    %1213 = vmatmul.f32.gmra.mxu0 %v1193
    %v1214 = vpop.f32.mrf.mxu0
    %v1215 = vadd.f32 0.0, %v1214
    %1216 = vdwg.mxu0
    %1217 = vrot.lane.b32.xlu0 %v1051, 120
    %v1218 = vpop.permute.xlu0 %1217
    %1219 = vrot.lane.b32.xlu0 %v1051, 88
    %v1220 = vpop.permute.xlu0 %1219
    %v1221 = vsel %vm178, %v1218, 0
    %v1223 = vsel %vm178, %v1220, 0
    %1225 = vmatpush.xpose.msra.mxu0 0.0
    %1226 = vmatpush.xpose.msra.mxu0 0.0
    %1227 = vmatpush.xpose.msra.mxu0 0.0
    %1228 = vmatpush.xpose.msra.mxu0 0.0
    %1229 = vmatpush.xpose.msra.mxu0 0.0
    %1230 = vmatpush.xpose.msra.mxu0 0.0
    %1231 = vmatpush.xpose.msra.mxu0 0.0
    %1232 = vmatpush.xpose.msra.mxu0 0.0
    %1233 = vmatpush.xpose.msra.mxu0 0.0
    %1234 = vmatpush.xpose.msra.mxu0 0.0
    %1235 = vmatpush.xpose.msra.mxu0 0.0
    %1236 = vmatpush.xpose.msra.mxu0 0.0
    %1237 = vmatpush.xpose.msra.mxu0 0.0
    %1238 = vmatpush.xpose.msra.mxu0 0.0
    %1239 = vmatpush.xpose.msra.mxu0 0.0
    %1240 = vmatpush.xpose.msra.mxu0 %v1223
    %1241 = vmatmul.f32.gmra.mxu0 %v1221
    %v1242 = vpop.f32.mrf.mxu0
    %v1243 = vadd.f32 0.0, %v1242
    %1244 = vdwg.mxu0
    %v1245 = vmul.f32 %v1215, 0.35355338
    %v1246 = vmul.f32 %v1243, 0.35355338
    %v1247 = vadd.f32 %v1245, %v234
    %v1248 = vadd.f32 %v1246, %v235
    %v1249 = vsel %vm178, %v1247, -inf
    %1250 = vmax.xlane.f32.xlu0 %v1249
    %v1251 = vpop.xlane.xlu0 %1250
    %v1252 = vsel %vm178, %v1248, -inf
    %1253 = vmax.xlane.f32.xlu0 %v1252
    %v1254 = vpop.xlane.xlu0 %1253
    %v1255 = vsub.f32 %v1247, %v1251
    %v1256 = vsub.f32 %v1248, %v1254
    %v1257 = vmul.f32 %v1255, 1.442695
    %v1258 = vpow.pop %v1257
    %v1259 = vmul.f32 %v1256, 1.442695
    %v1260 = vpow.pop %v1259
    %v1261 = vsel %vm178, %v1258, 0.0
    %1262 = vadd.xlane.f32.xlu0 %v1261
    %v1263 = vpop.xlane.xlu0 %1262
    %v1264 = vsel %vm178, %v1260, 0.0
    %1265 = vadd.xlane.f32.xlu0 %v1264
    %v1266 = vpop.xlane.xlu0 %1265
    %v1267 = vrcp.pop %v1263
    %v1268 = vrcp.pop %v1266
    %v1269 = vmul.f32 %v1258, %v1267
    %v1270 = vmul.f32 %v1260, %v1268
    %s1271 = scalar_lea.vmem [#allocation7], 8
    %1272 = vst.msk [vmem:[%s1271] sm:$0xff] %vm178, %v1269
    %1273 = vst.msk [vmem:[%s1271 + $0x20] sm:$0xff] %vm178, %v1270
    %1274 = vrot.lane.b32.xlu0 %v1048, 56
    %v1275 = vpop.permute.xlu0 %1274
    %v1278 = vsel %vm178, %v1269, 0
    %1280 = vmatpush.msra.mxu0 0.0
    %1281 = vmatpush.msra.mxu0 0.0
    %1282 = vmatpush.msra.mxu0 0.0
    %1283 = vmatpush.msra.mxu0 0.0
    %1284 = vmatpush.msra.mxu0 0.0
    %1285 = vmatpush.msra.mxu0 0.0
    %1286 = vmatpush.msra.mxu0 0.0
    %1287 = vmatpush.msra.mxu0 0.0
    %1288 = vmatpush.msra.mxu0 0.0
    %1289 = vmatpush.msra.mxu0 0.0
    %1290 = vmatpush.msra.mxu0 0.0
    %1291 = vmatpush.msra.mxu0 0.0
    %1292 = vmatpush.msra.mxu0 0.0
    %1293 = vmatpush.msra.mxu0 0.0
    %1294 = vmatpush.msra.mxu0 0.0
    %1295 = vmatpush.msra.mxu0 %v1275
    %1296 = vmatmul.f32.gmra.mxu0 %v1278
    %v1297 = vpop.f32.mrf.mxu0
    %v1298 = vadd.f32 0.0, %v1297
    %1299 = vdwg.mxu0
    %1300 = vrot.lane.b32.xlu0 %v1051, 56
    %v1301 = vpop.permute.xlu0 %1300
    %v1304 = vsel %vm178, %v1270, 0
    %1306 = vmatpush.msra.mxu0 0.0
    %1307 = vmatpush.msra.mxu0 0.0
    %1308 = vmatpush.msra.mxu0 0.0
    %1309 = vmatpush.msra.mxu0 0.0
    %1310 = vmatpush.msra.mxu0 0.0
    %1311 = vmatpush.msra.mxu0 0.0
    %1312 = vmatpush.msra.mxu0 0.0
    %1313 = vmatpush.msra.mxu0 0.0
    %1314 = vmatpush.msra.mxu0 0.0
    %1315 = vmatpush.msra.mxu0 0.0
    %1316 = vmatpush.msra.mxu0 0.0
    %1317 = vmatpush.msra.mxu0 0.0
    %1318 = vmatpush.msra.mxu0 0.0
    %1319 = vmatpush.msra.mxu0 0.0
    %1320 = vmatpush.msra.mxu0 0.0
    %1321 = vmatpush.msra.mxu0 %v1301
    %1322 = vmatmul.f32.gmra.mxu0 %v1304
    %v1323 = vpop.f32.mrf.mxu0
    %v1324 = vadd.f32 0.0, %v1323
    %1325 = vdwg.mxu0
    %1328 = vrot.lane.b32.xlu0 %v1298, 8
    %v1329 = vpop.permute.xlu0 %1328
    %1330 = vrot.lane.b32.xlu0 %v1324, 8
    %v1331 = vpop.permute.xlu0 %1330
    %1334 = vst.msk [vmem:[#allocation2] sm:$0xff] %vm463, %v1329
    %1335 = vst.msk [vmem:[#allocation2 + $0x8] sm:$0xff] %vm463, %v1331
    %1336 = vrot.lane.b32.xlu0 %v1048, 112
    %v1337 = vpop.permute.xlu0 %1336
    %1338 = vrot.lane.b32.xlu0 %v1048, 80
    %v1339 = vpop.permute.xlu0 %1338
    %v1340 = vsel %vm178, %v1337, 0
    %v1342 = vsel %vm178, %v1339, 0
    %1344 = vmatpush.xpose.msra.mxu0 0.0
    %1345 = vmatpush.xpose.msra.mxu0 0.0
    %1346 = vmatpush.xpose.msra.mxu0 0.0
    %1347 = vmatpush.xpose.msra.mxu0 0.0
    %1348 = vmatpush.xpose.msra.mxu0 0.0
    %1349 = vmatpush.xpose.msra.mxu0 0.0
    %1350 = vmatpush.xpose.msra.mxu0 0.0
    %1351 = vmatpush.xpose.msra.mxu0 0.0
    %1352 = vmatpush.xpose.msra.mxu0 0.0
    %1353 = vmatpush.xpose.msra.mxu0 0.0
    %1354 = vmatpush.xpose.msra.mxu0 0.0
    %1355 = vmatpush.xpose.msra.mxu0 0.0
    %1356 = vmatpush.xpose.msra.mxu0 0.0
    %1357 = vmatpush.xpose.msra.mxu0 0.0
    %1358 = vmatpush.xpose.msra.mxu0 0.0
    %1359 = vmatpush.xpose.msra.mxu0 %v1342
    %1360 = vmatmul.f32.gmra.mxu0 %v1340
    %v1361 = vpop.f32.mrf.mxu0
    %v1362 = vadd.f32 0.0, %v1361
    %1363 = vdwg.mxu0
    %1364 = vrot.lane.b32.xlu0 %v1051, 112
    %v1365 = vpop.permute.xlu0 %1364
    %1366 = vrot.lane.b32.xlu0 %v1051, 80
    %v1367 = vpop.permute.xlu0 %1366
    %v1368 = vsel %vm178, %v1365, 0
    %v1370 = vsel %vm178, %v1367, 0
    %1372 = vmatpush.xpose.msra.mxu0 0.0
    %1373 = vmatpush.xpose.msra.mxu0 0.0
    %1374 = vmatpush.xpose.msra.mxu0 0.0
    %1375 = vmatpush.xpose.msra.mxu0 0.0
    %1376 = vmatpush.xpose.msra.mxu0 0.0
    %1377 = vmatpush.xpose.msra.mxu0 0.0
    %1378 = vmatpush.xpose.msra.mxu0 0.0
    %1379 = vmatpush.xpose.msra.mxu0 0.0
    %1380 = vmatpush.xpose.msra.mxu0 0.0
    %1381 = vmatpush.xpose.msra.mxu0 0.0
    %1382 = vmatpush.xpose.msra.mxu0 0.0
    %1383 = vmatpush.xpose.msra.mxu0 0.0
    %1384 = vmatpush.xpose.msra.mxu0 0.0
    %1385 = vmatpush.xpose.msra.mxu0 0.0
    %1386 = vmatpush.xpose.msra.mxu0 0.0
    %1387 = vmatpush.xpose.msra.mxu0 %v1370
    %1388 = vmatmul.f32.gmra.mxu0 %v1368
    %v1389 = vpop.f32.mrf.mxu0
    %v1390 = vadd.f32 0.0, %v1389
    %1391 = vdwg.mxu0
    %v1392 = vmul.f32 %v1362, 0.35355338
    %v1393 = vmul.f32 %v1390, 0.35355338
    %v1394 = vadd.f32 %v1392, %v234
    %v1395 = vadd.f32 %v1393, %v235
    %v1396 = vsel %vm178, %v1394, -inf
    %1397 = vmax.xlane.f32.xlu0 %v1396
    %v1398 = vpop.xlane.xlu0 %1397
    %v1399 = vsel %vm178, %v1395, -inf
    %1400 = vmax.xlane.f32.xlu0 %v1399
    %v1401 = vpop.xlane.xlu0 %1400
    %v1402 = vsub.f32 %v1394, %v1398
    %v1403 = vsub.f32 %v1395, %v1401
    %v1404 = vmul.f32 %v1402, 1.442695
    %v1405 = vpow.pop %v1404
    %v1406 = vmul.f32 %v1403, 1.442695
    %v1407 = vpow.pop %v1406
    %v1408 = vsel %vm178, %v1405, 0.0
    %1409 = vadd.xlane.f32.xlu0 %v1408
    %v1410 = vpop.xlane.xlu0 %1409
    %v1411 = vsel %vm178, %v1407, 0.0
    %1412 = vadd.xlane.f32.xlu0 %v1411
    %v1413 = vpop.xlane.xlu0 %1412
    %v1414 = vrcp.pop %v1410
    %v1415 = vrcp.pop %v1413
    %v1416 = vmul.f32 %v1405, %v1414
    %v1417 = vmul.f32 %v1407, %v1415
    %s1418 = scalar_lea.vmem [#allocation7], 16
    %1419 = vst.msk [vmem:[%s1418] sm:$0xff] %vm178, %v1416
    %1420 = vst.msk [vmem:[%s1418 + $0x20] sm:$0xff] %vm178, %v1417
    %1421 = vrot.lane.b32.xlu0 %v1048, 48
    %v1422 = vpop.permute.xlu0 %1421
    %v1425 = vsel %vm178, %v1416, 0
    %1427 = vmatpush.msra.mxu0 0.0
    %1428 = vmatpush.msra.mxu0 0.0
    %1429 = vmatpush.msra.mxu0 0.0
    %1430 = vmatpush.msra.mxu0 0.0
    %1431 = vmatpush.msra.mxu0 0.0
    %1432 = vmatpush.msra.mxu0 0.0
    %1433 = vmatpush.msra.mxu0 0.0
    %1434 = vmatpush.msra.mxu0 0.0
    %1435 = vmatpush.msra.mxu0 0.0
    %1436 = vmatpush.msra.mxu0 0.0
    %1437 = vmatpush.msra.mxu0 0.0
    %1438 = vmatpush.msra.mxu0 0.0
    %1439 = vmatpush.msra.mxu0 0.0
    %1440 = vmatpush.msra.mxu0 0.0
    %1441 = vmatpush.msra.mxu0 0.0
    %1442 = vmatpush.msra.mxu0 %v1422
    %1443 = vmatmul.f32.gmra.mxu0 %v1425
    %v1444 = vpop.f32.mrf.mxu0
    %v1445 = vadd.f32 0.0, %v1444
    %1446 = vdwg.mxu0
    %1447 = vrot.lane.b32.xlu0 %v1051, 48
    %v1448 = vpop.permute.xlu0 %1447
    %v1451 = vsel %vm178, %v1417, 0
    %1453 = vmatpush.msra.mxu0 0.0
    %1454 = vmatpush.msra.mxu0 0.0
    %1455 = vmatpush.msra.mxu0 0.0
    %1456 = vmatpush.msra.mxu0 0.0
    %1457 = vmatpush.msra.mxu0 0.0
    %1458 = vmatpush.msra.mxu0 0.0
    %1459 = vmatpush.msra.mxu0 0.0
    %1460 = vmatpush.msra.mxu0 0.0
    %1461 = vmatpush.msra.mxu0 0.0
    %1462 = vmatpush.msra.mxu0 0.0
    %1463 = vmatpush.msra.mxu0 0.0
    %1464 = vmatpush.msra.mxu0 0.0
    %1465 = vmatpush.msra.mxu0 0.0
    %1466 = vmatpush.msra.mxu0 0.0
    %1467 = vmatpush.msra.mxu0 0.0
    %1468 = vmatpush.msra.mxu0 %v1448
    %1469 = vmatmul.f32.gmra.mxu0 %v1451
    %v1470 = vpop.f32.mrf.mxu0
    %v1471 = vadd.f32 0.0, %v1470
    %1472 = vdwg.mxu0
    %1475 = vrot.lane.b32.xlu0 %v1445, 16
    %v1476 = vpop.permute.xlu0 %1475
    %1477 = vrot.lane.b32.xlu0 %v1471, 16
    %v1478 = vpop.permute.xlu0 %1477
    %1481 = vst.msk [vmem:[#allocation2] sm:$0xff] %vm611, %v1476
    %1482 = vst.msk [vmem:[#allocation2 + $0x8] sm:$0xff] %vm611, %v1478
    %1483 = vrot.lane.b32.xlu0 %v1048, 104
    %v1484 = vpop.permute.xlu0 %1483
    %1485 = vrot.lane.b32.xlu0 %v1048, 72
    %v1486 = vpop.permute.xlu0 %1485
    %v1487 = vsel %vm178, %v1484, 0
    %v1489 = vsel %vm178, %v1486, 0
    %1491 = vmatpush.xpose.msra.mxu0 0.0
    %1492 = vmatpush.xpose.msra.mxu0 0.0
    %1493 = vmatpush.xpose.msra.mxu0 0.0
    %1494 = vmatpush.xpose.msra.mxu0 0.0
    %1495 = vmatpush.xpose.msra.mxu0 0.0
    %1496 = vmatpush.xpose.msra.mxu0 0.0
    %1497 = vmatpush.xpose.msra.mxu0 0.0
    %1498 = vmatpush.xpose.msra.mxu0 0.0
    %1499 = vmatpush.xpose.msra.mxu0 0.0
    %1500 = vmatpush.xpose.msra.mxu0 0.0
    %1501 = vmatpush.xpose.msra.mxu0 0.0
    %1502 = vmatpush.xpose.msra.mxu0 0.0
    %1503 = vmatpush.xpose.msra.mxu0 0.0
    %1504 = vmatpush.xpose.msra.mxu0 0.0
    %1505 = vmatpush.xpose.msra.mxu0 0.0
    %1506 = vmatpush.xpose.msra.mxu0 %v1489
    %1507 = vmatmul.f32.gmra.mxu0 %v1487
    %v1508 = vpop.f32.mrf.mxu0
    %v1509 = vadd.f32 0.0, %v1508
    %1510 = vdwg.mxu0
    %1511 = vrot.lane.b32.xlu0 %v1051, 104
    %v1512 = vpop.permute.xlu0 %1511
    %1513 = vrot.lane.b32.xlu0 %v1051, 72
    %v1514 = vpop.permute.xlu0 %1513
    %v1515 = vsel %vm178, %v1512, 0
    %v1517 = vsel %vm178, %v1514, 0
    %1519 = vmatpush.xpose.msra.mxu0 0.0
    %1520 = vmatpush.xpose.msra.mxu0 0.0
    %1521 = vmatpush.xpose.msra.mxu0 0.0
    %1522 = vmatpush.xpose.msra.mxu0 0.0
    %1523 = vmatpush.xpose.msra.mxu0 0.0
    %1524 = vmatpush.xpose.msra.mxu0 0.0
    %1525 = vmatpush.xpose.msra.mxu0 0.0
    %1526 = vmatpush.xpose.msra.mxu0 0.0
    %1527 = vmatpush.xpose.msra.mxu0 0.0
    %1528 = vmatpush.xpose.msra.mxu0 0.0
    %1529 = vmatpush.xpose.msra.mxu0 0.0
    %1530 = vmatpush.xpose.msra.mxu0 0.0
    %1531 = vmatpush.xpose.msra.mxu0 0.0
    %1532 = vmatpush.xpose.msra.mxu0 0.0
    %1533 = vmatpush.xpose.msra.mxu0 0.0
    %1534 = vmatpush.xpose.msra.mxu0 %v1517
    %1535 = vmatmul.f32.gmra.mxu0 %v1515
    %v1536 = vpop.f32.mrf.mxu0
    %v1537 = vadd.f32 0.0, %v1536
    %1538 = vdwg.mxu0
    %v1539 = vmul.f32 %v1509, 0.35355338
    %v1540 = vmul.f32 %v1537, 0.35355338
    %v1541 = vadd.f32 %v1539, %v234
    %v1542 = vadd.f32 %v1540, %v235
    %v1543 = vsel %vm178, %v1541, -inf
    %1544 = vmax.xlane.f32.xlu0 %v1543
    %v1545 = vpop.xlane.xlu0 %1544
    %v1546 = vsel %vm178, %v1542, -inf
    %1547 = vmax.xlane.f32.xlu0 %v1546
    %v1548 = vpop.xlane.xlu0 %1547
    %v1549 = vsub.f32 %v1541, %v1545
    %v1550 = vsub.f32 %v1542, %v1548
    %v1551 = vmul.f32 %v1549, 1.442695
    %v1552 = vpow.pop %v1551
    %v1553 = vmul.f32 %v1550, 1.442695
    %v1554 = vpow.pop %v1553
    %v1555 = vsel %vm178, %v1552, 0.0
    %1556 = vadd.xlane.f32.xlu0 %v1555
    %v1557 = vpop.xlane.xlu0 %1556
    %v1558 = vsel %vm178, %v1554, 0.0
    %1559 = vadd.xlane.f32.xlu0 %v1558
    %v1560 = vpop.xlane.xlu0 %1559
    %v1561 = vrcp.pop %v1557
    %v1562 = vrcp.pop %v1560
    %v1563 = vmul.f32 %v1552, %v1561
    %v1564 = vmul.f32 %v1554, %v1562
    %s1565 = scalar_lea.vmem [#allocation7], 24
    %1566 = vst.msk [vmem:[%s1565] sm:$0xff] %vm178, %v1563
    %1567 = vst.msk [vmem:[%s1565 + $0x20] sm:$0xff] %vm178, %v1564
    %1568 = vrot.lane.b32.xlu0 %v1048, 40
    %v1569 = vpop.permute.xlu0 %1568
    %v1572 = vsel %vm178, %v1563, 0
    %1574 = vmatpush.msra.mxu0 0.0
    %1575 = vmatpush.msra.mxu0 0.0
    %1576 = vmatpush.msra.mxu0 0.0
    %1577 = vmatpush.msra.mxu0 0.0
    %1578 = vmatpush.msra.mxu0 0.0
    %1579 = vmatpush.msra.mxu0 0.0
    %1580 = vmatpush.msra.mxu0 0.0
    %1581 = vmatpush.msra.mxu0 0.0
    %1582 = vmatpush.msra.mxu0 0.0
    %1583 = vmatpush.msra.mxu0 0.0
    %1584 = vmatpush.msra.mxu0 0.0
    %1585 = vmatpush.msra.mxu0 0.0
    %1586 = vmatpush.msra.mxu0 0.0
    %1587 = vmatpush.msra.mxu0 0.0
    %1588 = vmatpush.msra.mxu0 0.0
    %1589 = vmatpush.msra.mxu0 %v1569
    %1590 = vmatmul.f32.gmra.mxu0 %v1572
    %v1591 = vpop.f32.mrf.mxu0
    %v1592 = vadd.f32 0.0, %v1591
    %1593 = vdwg.mxu0
    %1594 = vrot.lane.b32.xlu0 %v1051, 40
    %v1595 = vpop.permute.xlu0 %1594
    %v1598 = vsel %vm178, %v1564, 0
    %1600 = vmatpush.msra.mxu0 0.0
    %1601 = vmatpush.msra.mxu0 0.0
    %1602 = vmatpush.msra.mxu0 0.0
    %1603 = vmatpush.msra.mxu0 0.0
    %1604 = vmatpush.msra.mxu0 0.0
    %1605 = vmatpush.msra.mxu0 0.0
    %1606 = vmatpush.msra.mxu0 0.0
    %1607 = vmatpush.msra.mxu0 0.0
    %1608 = vmatpush.msra.mxu0 0.0
    %1609 = vmatpush.msra.mxu0 0.0
    %1610 = vmatpush.msra.mxu0 0.0
    %1611 = vmatpush.msra.mxu0 0.0
    %1612 = vmatpush.msra.mxu0 0.0
    %1613 = vmatpush.msra.mxu0 0.0
    %1614 = vmatpush.msra.mxu0 0.0
    %1615 = vmatpush.msra.mxu0 %v1595
    %1616 = vmatmul.f32.gmra.mxu0 %v1598
    %v1617 = vpop.f32.mrf.mxu0
    %v1618 = vadd.f32 0.0, %v1617
    %1619 = vdwg.mxu0
    %1622 = vrot.lane.b32.xlu0 %v1592, 24
    %v1623 = vpop.permute.xlu0 %1622
    %1624 = vrot.lane.b32.xlu0 %v1618, 24
    %v1625 = vpop.permute.xlu0 %1624
    %1628 = vst.msk [vmem:[#allocation2] sm:$0xff] %vm759, %v1623
    %1629 = vst.msk [vmem:[#allocation2 + $0x8] sm:$0xff] %vm759, %v1625
    %v1630 = vld [vmem:[#allocation2] sm:$0xff]
    %v1631 = vld [vmem:[#allocation2 + $0x8] sm:$0xff]
    %s1632 = scalar_lea.vmem %s6, 32
    %v1633 = vld [vmem:[%s1632] sm:$0xff]
    %v1634 = vld [vmem:[%s1632 + $0x8] sm:$0xff]
    %v1635 = vld [vmem:[%s1632 + $0x10] sm:$0xff]
    %v1636 = vld [vmem:[%s1632 + $0x18] sm:$0xff]
    %s1637 = scalar_lea.vmem %s7, 1
    %v1638 = vld [vmem:[%s1637] sm:$0x1]
    %v1640 = vperm.slane %v1638, 0
    %v1643 = vsel %vm74, %v1630, 0
    %v1646 = vsel %vm74, %v1631, 0
    %1648 = vmatpush.msra.mxu0 0.0
    %1649 = vmatpush.msra.mxu0 0.0
    %1650 = vmatpush.msra.mxu0 0.0
    %1651 = vmatpush.msra.mxu0 0.0
    %1652 = vmatpush.msra.mxu0 0.0
    %1653 = vmatpush.msra.mxu0 0.0
    %1654 = vmatpush.msra.mxu0 0.0
    %1655 = vmatpush.msra.mxu0 0.0
    %1656 = vmatpush.msra.mxu0 0.0
    %1657 = vmatpush.msra.mxu0 0.0
    %1658 = vmatpush.msra.mxu0 0.0
    %1659 = vmatpush.msra.mxu0 0.0
    %1660 = vmatpush.msra.mxu0 %v1636
    %1661 = vmatpush.msra.mxu0 %v1635
    %1662 = vmatpush.msra.mxu0 %v1634
    %1663 = vmatpush.msra.mxu0 %v1633
    %1664 = vmatmul.f32.gmra.mxu0 %v1643
    %v1665 = vpop.f32.mrf.mxu0
    %v1666 = vadd.f32 %v1640, %v1665
    %1667 = vmatmul.f32.gmra.mxu0 %v1646
    %v1668 = vpop.f32.mrf.mxu0
    %v1669 = vadd.f32 %v1640, %v1668
    %1670 = vdwg.mxu0
    %v1671 = vadd.f32 %v1012, %v1666
    %v1672 = vadd.f32 %v1013, %v1669
    %s1673 = scalar_lea.vmem %s8, 1
    %v1674 = vld [vmem:[%s1673] sm:$0x1]
    %s1675 = scalar_lea.vmem %s9, 1
    %v1676 = vld [vmem:[%s1675] sm:$0x1]
    %v1677 = vsel %vm74, %v1671, 0.0
    %1678 = vadd.xlane.f32.xlu0 %v1677
    %v1679 = vpop.xlane.xlu0 %1678
    %v1680 = vsel %vm74, %v1672, 0.0
    %1681 = vadd.xlane.f32.xlu0 %v1680
    %v1682 = vpop.xlane.xlu0 %1681
    %v1683 = vmul.f32 %v1679, %v87
    %v1684 = vmul.f32 %v1682, %v87
    %v1685 = vsub.f32 %v1671, %v1683
    %v1686 = vsub.f32 %v1672, %v1684
    %v1687 = vmul.f32 %v1685, %v1685
    %v1688 = vmul.f32 %v1686, %v1686
    %v1689 = vsel %vm74, %v1687, 0.0
    %1690 = vadd.xlane.f32.xlu0 %v1689
    %v1691 = vpop.xlane.xlu0 %1690
    %v1692 = vsel %vm74, %v1688, 0.0
    %1693 = vadd.xlane.f32.xlu0 %v1692
    %v1694 = vpop.xlane.xlu0 %1693
    %v1695 = vmul.f32 %v1691, %v87
    %v1696 = vmul.f32 %v1694, %v87
    %v1697 = vadd.f32 %v1695, 1e-12
    %v1698 = vadd.f32 %v1696, 1e-12
    %v1699 = vrsqrt.pop %v1697
    %v1700 = vmul.f32 %v1699, %v1697
    %v1701 = vmul.f32 %v1700, %v1699
    %v1702 = vmul.f32 0.5, %v1701
    %v1703 = vsub.f32 1.5, %v1702
    %v1704 = vmul.f32 %v1699, %v1703
    %vm1705 = vweird.f32 %v1697
    %vm1706 = vweird.f32 %v1699
    %vm1707 = vmor %vm1705, %vm1706
    %v1708 = vsel %vm1707, %v1699, %v1704
    %v1709 = vrsqrt.pop %v1698
    %v1710 = vmul.f32 %v1709, %v1698
    %v1711 = vmul.f32 %v1710, %v1709
    %v1712 = vmul.f32 0.5, %v1711
    %v1713 = vsub.f32 1.5, %v1712
    %v1714 = vmul.f32 %v1709, %v1713
    %vm1715 = vweird.f32 %v1698
    %vm1716 = vweird.f32 %v1709
    %vm1717 = vmor %vm1715, %vm1716
    %v1718 = vsel %vm1717, %v1709, %v1714
    %v1719 = vmul.f32 %v1685, %v1708
    %v1720 = vmul.f32 %v1686, %v1718
    %v1722 = vperm.slane %v1674, 0
    %v1724 = vmul.f32 %v1719, %v1722
    %v1725 = vmul.f32 %v1720, %v1722
    %v1727 = vperm.slane %v1676, 0
    %v1729 = vadd.f32 %v1724, %v1727
    %v1730 = vadd.f32 %v1725, %v1727
    %s1731 = scalar_lea.vmem %s10, 32
    %v1732 = vld [vmem:[%s1731] sm:$0xff]
    %v1733 = vld [vmem:[%s1731 + $0x8] sm:$0xff]
    %v1734 = vld [vmem:[%s1731 + $0x10] sm:$0xff]
    %v1735 = vld [vmem:[%s1731 + $0x18] sm:$0xff]
    %s1736 = scalar_lea.vmem %s11, 1
    %v1737 = vld [vmem:[%s1736] sm:$0x1]
    %v1739 = vperm.slane %v1737, 0
    %v1742 = vsel %vm74, %v1729, 0
    %v1745 = vsel %vm74, %v1730, 0
    %1747 = vmatpush.msra.mxu0 0.0
    %1748 = vmatpush.msra.mxu0 0.0
    %1749 = vmatpush.msra.mxu0 0.0
    %1750 = vmatpush.msra.mxu0 0.0
    %1751 = vmatpush.msra.mxu0 0.0
    %1752 = vmatpush.msra.mxu0 0.0
    %1753 = vmatpush.msra.mxu0 0.0
    %1754 = vmatpush.msra.mxu0 0.0
    %1755 = vmatpush.msra.mxu0 0.0
    %1756 = vmatpush.msra.mxu0 0.0
    %1757 = vmatpush.msra.mxu0 0.0
    %1758 = vmatpush.msra.mxu0 0.0
    %1759 = vmatpush.msra.mxu0 %v1735
    %1760 = vmatpush.msra.mxu0 %v1734
    %1761 = vmatpush.msra.mxu0 %v1733
    %1762 = vmatpush.msra.mxu0 %v1732
    %1763 = vmatmul.f32.gmra.mxu0 %v1742
    %v1764 = vpop.f32.mrf.mxu0
    %v1765 = vadd.f32 %v1739, %v1764
    %1766 = vmatmul.f32.gmra.mxu0 %v1745
    %v1767 = vpop.f32.mrf.mxu0
    %v1768 = vadd.f32 %v1739, %v1767
    %1769 = vdwg.mxu0
    %v1770 = vmul.f32 %v1765, 0.5
    %v1771 = vmul.f32 %v1768, 0.5
    %v1772 = vmul.f32 %v1765, 0.044715
    %v1773 = vmul.f32 %v1768, 0.044715
    %v1774 = vmul.f32 %v1772, %v1765
    %v1775 = vmul.f32 %v1773, %v1768
    %v1776 = vmul.f32 %v1774, %v1765
    %v1777 = vmul.f32 %v1775, %v1768
    %v1778 = vadd.f32 %v1765, %v1776
    %v1779 = vadd.f32 %v1768, %v1777
    %v1780 = vmul.f32 %v1778, 0.7978846
    %v1781 = vmul.f32 %v1779, 0.7978846
    %v1782 = vtanh.pop %v1780
    %v1783 = vtanh.pop %v1781
    %v1784 = vadd.f32 %v1782, 1.0
    %v1785 = vadd.f32 %v1783, 1.0
    %v1786 = vmul.f32 %v1770, %v1784
    %v1787 = vmul.f32 %v1771, %v1785
    %s1788 = scalar_lea.vmem %s12, 64
    %v1789 = vld [vmem:[%s1788] sm:$0xff]
    %v1790 = vld [vmem:[%s1788 + $0x8] sm:$0xff]
    %v1791 = vld [vmem:[%s1788 + $0x10] sm:$0xff]
    %v1792 = vld [vmem:[%s1788 + $0x18] sm:$0xff]
    %v1793 = vld [vmem:[%s1788 + $0x20] sm:$0xff]
    %v1794 = vld [vmem:[%s1788 + $0x28] sm:$0xff]
    %v1795 = vld [vmem:[%s1788 + $0x30] sm:$0xff]
    %v1796 = vld [vmem:[%s1788 + $0x38] sm:$0xff]
    %s1797 = scalar_lea.vmem %s13, 1
    %v1798 = vld [vmem:[%s1797] sm:$0x1]
    %v1800 = vperm.slane %v1798, 0
    %v1803 = vsel %vm926, %v1786, 0
    %v1806 = vsel %vm926, %v1787, 0
    %1808 = vmatpush.msra.mxu0 0.0
    %1809 = vmatpush.msra.mxu0 0.0
    %1810 = vmatpush.msra.mxu0 0.0
    %1811 = vmatpush.msra.mxu0 0.0
    %1812 = vmatpush.msra.mxu0 0.0
    %1813 = vmatpush.msra.mxu0 0.0
    %1814 = vmatpush.msra.mxu0 0.0
    %1815 = vmatpush.msra.mxu0 0.0
    %1816 = vmatpush.msra.mxu0 %v1796
    %1817 = vmatpush.msra.mxu0 %v1795
    %1818 = vmatpush.msra.mxu0 %v1794
    %1819 = vmatpush.msra.mxu0 %v1793
    %1820 = vmatpush.msra.mxu0 %v1792
    %1821 = vmatpush.msra.mxu0 %v1791
    %1822 = vmatpush.msra.mxu0 %v1790
    %1823 = vmatpush.msra.mxu0 %v1789
    %1824 = vmatmul.f32.gmra.mxu0 %v1803
    %v1825 = vpop.f32.mrf.mxu0
    %v1826 = vadd.f32 %v1800, %v1825
    %1827 = vmatmul.f32.gmra.mxu0 %v1806
    %v1828 = vpop.f32.mrf.mxu0
    %v1829 = vadd.f32 %v1800, %v1828
    %1830 = vdwg.mxu0
    %v1831 = vadd.f32 %v1729, %v1826
    %v1832 = vadd.f32 %v1730, %v1829
    %s1833 = scalar_lea.vmem %s14, 1
    %v1834 = vld [vmem:[%s1833] sm:$0x1]
    %s1835 = scalar_lea.vmem %s15, 1
    %v1836 = vld [vmem:[%s1835] sm:$0x1]
    %v1837 = vsel %vm74, %v1831, 0.0
    %1838 = vadd.xlane.f32.xlu0 %v1837
    %v1839 = vpop.xlane.xlu0 %1838
    %v1840 = vsel %vm74, %v1832, 0.0
    %1841 = vadd.xlane.f32.xlu0 %v1840
    %v1842 = vpop.xlane.xlu0 %1841
    %v1843 = vmul.f32 %v1839, %v87
    %v1844 = vmul.f32 %v1842, %v87
    %v1845 = vsub.f32 %v1831, %v1843
    %v1846 = vsub.f32 %v1832, %v1844
    %v1847 = vmul.f32 %v1845, %v1845
    %v1848 = vmul.f32 %v1846, %v1846
    %v1849 = vsel %vm74, %v1847, 0.0
    %1850 = vadd.xlane.f32.xlu0 %v1849
    %v1851 = vpop.xlane.xlu0 %1850
    %v1852 = vsel %vm74, %v1848, 0.0
    %1853 = vadd.xlane.f32.xlu0 %v1852
    %v1854 = vpop.xlane.xlu0 %1853
    %v1855 = vmul.f32 %v1851, %v87
    %v1856 = vmul.f32 %v1854, %v87
    %v1857 = vadd.f32 %v1855, 1e-12
    %v1858 = vadd.f32 %v1856, 1e-12
    %v1859 = vrsqrt.pop %v1857
    %v1860 = vmul.f32 %v1859, %v1857
    %v1861 = vmul.f32 %v1860, %v1859
    %v1862 = vmul.f32 0.5, %v1861
    %v1863 = vsub.f32 1.5, %v1862
    %v1864 = vmul.f32 %v1859, %v1863
    %vm1865 = vweird.f32 %v1857
    %vm1866 = vweird.f32 %v1859
    %vm1867 = vmor %vm1865, %vm1866
    %v1868 = vsel %vm1867, %v1859, %v1864
    %v1869 = vrsqrt.pop %v1858
    %v1870 = vmul.f32 %v1869, %v1858
    %v1871 = vmul.f32 %v1870, %v1869
    %v1872 = vmul.f32 0.5, %v1871
    %v1873 = vsub.f32 1.5, %v1872
    %v1874 = vmul.f32 %v1869, %v1873
    %vm1875 = vweird.f32 %v1858
    %vm1876 = vweird.f32 %v1869
    %vm1877 = vmor %vm1875, %vm1876
    %v1878 = vsel %vm1877, %v1869, %v1874
    %v1879 = vmul.f32 %v1845, %v1868
    %v1880 = vmul.f32 %v1846, %v1878
    %v1882 = vperm.slane %v1834, 0
    %v1884 = vmul.f32 %v1879, %v1882
    %v1885 = vmul.f32 %v1880, %v1882
    %v1887 = vperm.slane %v1836, 0
    %v1889 = vadd.f32 %v1884, %v1887
    %v1890 = vadd.f32 %v1885, %v1887
    %v1891 = vsel %vm74, %v1889, 0.0
    %v1892 = vrot.slane %v1891, 4
    %v1893 = vadd.f32 %v1891, %v1892
    %v1894 = vrot.slane %v1893, 2
    %v1895 = vadd.f32 %v1893, %v1894
    %v1896 = vrot.slane %v1895, 1
    %v1897 = vadd.f32 %v1895, %v1896
    %v1898 = vsel %vm74, %v1890, 0.0
    %v1899 = vrot.slane %v1898, 4
    %v1900 = vadd.f32 %v1898, %v1899
    %v1901 = vrot.slane %v1900, 2
    %v1902 = vadd.f32 %v1900, %v1901
    %v1903 = vrot.slane %v1902, 1
    %v1904 = vadd.f32 %v1902, %v1903
    %v1905 = vrcp.pop 8.0
    %v1906 = vmul.f32 8.0, %v1905
    %v1907 = vsub.f32 1.0, %v1906
    %v1908 = vmul.f32 %v1905, %v1907
    %v1909 = vadd.f32 %v1905, %v1908
    %vm1910 = vweird.f32 %v1905
    %v1911 = vsel %vm1910, %v1905, %v1909
    %v1912 = vmul.f32 %v1897, %v1911
    %v1913 = vmul.f32 %v1904, %v1911
    %v1914 = vld [vmem:[%s16] sm:$0xff]
    %v1915 = vld [vmem:[%s16 + $0x8] sm:$0xff]
    %v1916 = vld [vmem:[%s16 + $0x10] sm:$0xff]
    %v1917 = vld [vmem:[%s16 + $0x18] sm:$0xff]
    %v1918 = vld [vmem:[%s17] sm:$0x1]
    %v1920 = vperm.slane %v1918, 0
    %vm1924 = vcmask 1041409
    %v1925 = vsel %vm1924, %v1913, %v1912
    %v1926 = vsel %vm74, %v1925, 0
    %1928 = vmatpush.msra.mxu0 0.0
    %1929 = vmatpush.msra.mxu0 0.0
    %1930 = vmatpush.msra.mxu0 0.0
    %1931 = vmatpush.msra.mxu0 0.0
    %1932 = vmatpush.msra.mxu0 0.0
    %1933 = vmatpush.msra.mxu0 0.0
    %1934 = vmatpush.msra.mxu0 0.0
    %1935 = vmatpush.msra.mxu0 0.0
    %1936 = vmatpush.msra.mxu0 0.0
    %1937 = vmatpush.msra.mxu0 0.0
    %1938 = vmatpush.msra.mxu0 0.0
    %1939 = vmatpush.msra.mxu0 0.0
    %1940 = vmatpush.msra.mxu0 %v1917
    %1941 = vmatpush.msra.mxu0 %v1916
    %1942 = vmatpush.msra.mxu0 %v1915
    %1943 = vmatpush.msra.mxu0 %v1914
    %1944 = vmatmul.f32.gmra.mxu0 %v1926
    %v1945 = vpop.f32.mrf.mxu0
    %v1946 = vadd.f32 %v1920, %v1945
    %1947 = vdwg.mxu0
    %v1948 = vtanh.pop %v1946
    %v1949 = vld [vmem:[%s18] sm:$0xff]
    %v1950 = vld [vmem:[%s19] sm:$0x1]
    %v1952 = vperm.slane %v1950, 0
    %v1955 = vsel %vm178, %v1948, 0
    %1957 = vmatpush.msra.mxu0 0.0
    %1958 = vmatpush.msra.mxu0 0.0
    %1959 = vmatpush.msra.mxu0 0.0
    %1960 = vmatpush.msra.mxu0 0.0
    %1961 = vmatpush.msra.mxu0 0.0
    %1962 = vmatpush.msra.mxu0 0.0
    %1963 = vmatpush.msra.mxu0 0.0
    %1964 = vmatpush.msra.mxu0 0.0
    %1965 = vmatpush.msra.mxu0 0.0
    %1966 = vmatpush.msra.mxu0 0.0
    %1967 = vmatpush.msra.mxu0 0.0
    %1968 = vmatpush.msra.mxu0 0.0
    %1969 = vmatpush.msra.mxu0 0.0
    %1970 = vmatpush.msra.mxu0 0.0
    %1971 = vmatpush.msra.mxu0 0.0
    %1972 = vmatpush.msra.mxu0 %v1949
    %1973 = vmatmul.f32.gmra.mxu0 %v1955
    %v1974 = vpop.f32.mrf.mxu0
    %v1975 = vadd.f32 %v1952, %v1974
    %1976 = vdwg.mxu0
    %vm1977 = vcmask 17408
    %1978 = vst.msk [vmem:[#allocation3] sm:$0x3] %vm1977, %v1975
    // Predicated region
    $region82: #{transformer_base_forward.1} parent=1 // pred_check
      _
    $region83: #{transformer_base_forward.1} parent=1 // pred_check_branch
      %1980 = sbr.rel (0) target = $region85
    $region84: #{transformer_base_forward.1} parent=1 // pred_region
      %1982 = vsyncadd [#allocation4], 0
      %s1984 = sshll.u32 [#allocation3], 4
      %s1985 = int_to_ptr.vmem [resolvable:$true] %s1984
      %s1986 = sshll.u32 %s20, 4
      %s1987 = int_to_ptr.hbm [resolvable:$true] %s1986
      %1989 = dma.vmem_to_hbm [thread:$0]  %s1985, 32, %s1987, [#allocation4]
    $region85: #{transformer_base_forward.1} parent=1 // pred_fallthru
      _
    // Predicated region
    $region86: #{transformer_base_forward.1} parent=1 // pred_check
      _
    $region87: #{transformer_base_forward.1} parent=1 // pred_check_branch
      %1991 = sbr.rel (0) target = $region89
    $region88: #{transformer_base_forward.1} parent=1 // pred_region
      %1993 = vsyncadd [#allocation6], 0
      %s1994 = sshll.u32 [#allocation5], 4
      %s1995 = int_to_ptr.vmem [resolvable:$true] %s1994
      %s1996 = sshll.u32 %s21, 4
      %s1997 = int_to_ptr.hbm [resolvable:$true] %s1996
      %2002 = dma.vmem_to_hbm [thread:$0]  %s1995, 1024, %s1997, [#allocation6], 128, 128, 8
    $region89: #{transformer_base_forward.1} parent=1 // pred_fallthru
      _
    // Predicated region
    $region90: #{transformer_base_forward.1} parent=1 // pred_check
      _
    $region91: #{transformer_base_forward.1} parent=1 // pred_check_branch
      %2004 = sbr.rel (0) target = $region93
    $region92: #{transformer_base_forward.1} parent=1 // pred_region
      %2006 = vsyncadd [#allocation6], 0
      %s2007 = sshll.u32 [#allocation7], 4
      %s2008 = int_to_ptr.vmem [resolvable:$true] %s2007
      %s2009 = sshll.u32 %s22, 4
      %s2010 = int_to_ptr.hbm [resolvable:$true] %s2009
      %2015 = dma.vmem_to_hbm [thread:$0]  %s2008, 1024, %s2010, [#allocation6], 128, 128, 8
    $region93: #{transformer_base_forward.1} parent=1 // pred_fallthru
      _
    // Predicated region
    $region94: #{transformer_base_forward.1} parent=1 // pred_check
      _
    $region95: #{transformer_base_forward.1} parent=1 // pred_check_branch
      %2017 = sbr.rel (0) target = $region97
    $region96: #{transformer_base_forward.1} parent=1 // pred_region
      %2019 = dma.done [#allocation4], 32
    $region97: #{transformer_base_forward.1} parent=1 // pred_fallthru
      _
    // Predicated region
    $region98: #{transformer_base_forward.1} parent=1 // pred_check
      _
    $region99: #{transformer_base_forward.1} parent=1 // pred_check_branch
      %2021 = sbr.rel (0) target = $region101
    $region100: #{transformer_base_forward.1} parent=1 // pred_region
      %2023 = dma.done [#allocation6], 1024
    $region101: #{transformer_base_forward.1} parent=1 // pred_fallthru
      _
    // Predicated region
    $region102: #{transformer_base_forward.1} parent=1 // pred_check
      _
    $region103: #{transformer_base_forward.1} parent=1 // pred_check_branch
      %2025 = sbr.rel (0) target = $region105
    $region104: #{transformer_base_forward.1} parent=1 // pred_region
      %2027 = dma.done [#allocation6], 1024
    $region105: #{transformer_base_forward.1} parent=1 // pred_fallthru
      _
    %2028 = vsyncpa [#allocation4], 1
    %2029 = vsyncpa [#allocation6], 1

</llo_original>
